<compile_context>
chip_gen: v6e
topology: v6e:2x2x1
jax: 0.10.0
libtpu: 0.0.40
codegen_flags: <defaults>
</compile_context>

<pallas_src>
import functools

import jax
import jax.numpy as jnp
from jax.experimental import pallas as pl
from jax.experimental.pallas import tpu as pltpu

LN_EPS = 1e-6  # matches nn.LayerNorm(..., eps=1e-6) in the reference transformer.
               # TODO(synk): switch to 1e-5 if the reference uses PyTorch's default eps.


def _layer_norm(x, gamma, beta):
    # x: (M, D) f32 ; gamma/beta: (1, D) f32.
    # One-pass moments: var = E[x^2] - mean^2.
    mean = jnp.mean(x, axis=-1, keepdims=True)
    mean_sq = jnp.mean(x * x, axis=-1, keepdims=True)
    var = mean_sq - mean * mean
    inv = jax.lax.rsqrt(var + LN_EPS)
    return (x - mean) * inv * gamma + beta


def encoder_layer_kernel(
    x_ref,
    wqkv_ref, bqkv_ref,          # fused (scaled-q)|k|v projection (bf16 weight, f32 bias)
    wo_ref, bo_ref,              # output projection
    g_ref, be_ref,               # LayerNorm affine
    out_ref,
    *, d_k, d_v,
):
    TB, S, D = x_ref.shape
    x = x_ref[...].astype(jnp.float32)               # (TB, S, D)
    x2 = x.reshape(TB * S, D)                        # flatten rows: MXU M = TB*S
    x_bf = x2.astype(jnp.bfloat16)

    # ---- fused q/k/v projection: one lane-dense MXU pass --------------------
    # 1/sqrt(d_k) is already folded into the q columns of wqkv/bqkv.
    qkv = jnp.dot(x_bf, wqkv_ref[...],
                  preferred_element_type=jnp.float32) + bqkv_ref[...]
    q = qkv[:, :d_k].reshape(TB, S, d_k)
    k = qkv[:, d_k:2 * d_k].reshape(TB, S, d_k)
    v = qkv[:, 2 * d_k:].reshape(TB, S, d_v)

    # ---- scaled dot-product attention (contraction on last axes, no k.T) ----
    scores = jnp.einsum(
        'bqd,bkd->bqk',
        q.astype(jnp.bfloat16), k.astype(jnp.bfloat16),
        preferred_element_type=jnp.float32)                   # (TB, S, S) f32

    m = jnp.max(scores, axis=-1, keepdims=True)
    p = jnp.exp(scores - m)
    denom = jnp.sum(p, axis=-1, keepdims=True)
    attn_w = p * pl.reciprocal(denom, approx=True)            # EUP vrcp
    # TODO(synk): for production S (>=512) on v7x's 64 MiB VMEM, replace this full
    # (TB,S,S) softmax with a KV-tiled online-softmax loop (m/l/acc scratch + pl.when).

    ctx = jnp.einsum(
        'bqk,bkd->bqd',
        attn_w.astype(jnp.bfloat16), v.astype(jnp.bfloat16),
        preferred_element_type=jnp.float32)                   # (TB, S, d_v)

    # ---- output projection + residual + LayerNorm ----------------------------
    proj = jnp.dot(ctx.reshape(TB * S, d_v).astype(jnp.bfloat16), wo_ref[...],
                   preferred_element_type=jnp.float32) + bo_ref[...]
    attn = _layer_norm(proj + x2, g_ref[...], be_ref[...])    # (TB*S, D) f32
    out_ref[...] = attn.reshape(TB, S, D).astype(out_ref.dtype)

    # NOTE: EncoderLayer.forward returns enc_slf_attn and discards enc_output, so the
    # position-wise FFN is dead code in forward() and intentionally not computed here.


def prepare_params(params, *, d_k):
    """One-time weight fusion + bf16 cast (hoisted out of the per-call path).

    Also folds the 1/sqrt(d_k) attention scale into the q slice of the fused
    projection so the kernel never scales the (TB,S,S) scores tensor.
    """
    scale = jnp.float32(1.0 / (d_k ** 0.5))
    wqkv = jnp.concatenate(
        [params["wq"] * scale, params["wk"], params["wv"]], axis=1
    ).astype(jnp.bfloat16)
    bqkv = jnp.concatenate(
        [params["bq"] * scale, params["bk"], params["bv"]], axis=1
    ).astype(jnp.float32)
    return {
        "wqkv": wqkv,
        "bqkv": bqkv,
        "wo": params["wo"].astype(jnp.bfloat16),
        "bo": params["bo"].astype(jnp.float32),
        "g1": params["g1"].astype(jnp.float32),
        "be1": params["be1"].astype(jnp.float32),
    }


def _pick_batch_block(B):
    """Largest TB dividing B that keeps grid = B // TB >= 2.

    Keeps at least 2 grid steps (software pipelining; both TensorCores on v7x) while
    maximizing per-step work so the flattened MXU M dimension and per-step DMA size
    are as large as possible.
    """
    best = 1
    for tb in range(1, B + 1):
        if B % tb == 0 and B // tb >= 2:
            best = tb
    return best


def encoder_layer(x, fused_params, *, d_k, d_v, batch_block=None, out_dtype=None):
    """x: (B, S, D).  Returns enc_slf_attn, matching the PyTorch forward()."""
    B, S, D = x.shape
    assert D % 128 == 0 and d_k % 128 == 0 and d_v % 128 == 0, (
        "d_m/d_k/d_v must be multiples of 128: the in-kernel lane slices of the fused "
        "qkv output must land on (8,128) vreg tile boundaries (otherwise XLU relayouts "
        "and masked partial stores).")
    # TODO(synk): pad d_k/d_v to a 128 multiple (or split the fused matmul) for other sizes.

    TB = _pick_batch_block(B) if batch_block is None else batch_block
    assert B % TB == 0, "batch_block must divide B"
    out_dtype = x.dtype if out_dtype is None else out_dtype

    p = fused_params
    param_arrays = [p["wqkv"], p["bqkv"], p["wo"], p["bo"], p["g1"], p["be1"]]

    # Parameter index_maps are constant, so Pallas never re-fetches them across grid
    # steps.  TODO(synk): at production d_m/d_ff, single-buffer these constant weight
    # specs (pipeline_mode=pl.Buffered(1)) to halve resident weight VMEM on v7x.
    in_specs = [pl.BlockSpec((TB, S, D), lambda i: (i, 0, 0))]
    in_specs += [pl.BlockSpec(a.shape, lambda i: (0, 0)) for a in param_arrays]

    out = pl.pallas_call(
        functools.partial(encoder_layer_kernel, d_k=d_k, d_v=d_v),
        grid=(B // TB,),
        in_specs=in_specs,
        out_specs=pl.BlockSpec((TB, S, D), lambda i: (i, 0, 0)),
        out_shape=jax.ShapeDtypeStruct((B, S, D), out_dtype),
        compiler_params=pltpu.CompilerParams(
            # batch axis is independent -> shards across the 2 TensorCores on v7x
            dimension_semantics=("parallel",),
        ),
    )(x, *param_arrays)
    return out


def init_params(key, d_m, d_ff, d_k, d_v):
    ks = jax.random.split(key, 8)
    scale = 0.02

    def w(k, shape):
        return jax.random.normal(k, shape, dtype=jnp.float32) * scale

    return {
        # self-attention
        "wq": w(ks[0], (d_m, d_k)), "bq": jnp.zeros((1, d_k), jnp.float32),
        "wk": w(ks[1], (d_m, d_k)), "bk": jnp.zeros((1, d_k), jnp.float32),
        "wv": w(ks[2], (d_m, d_v)), "bv": jnp.zeros((1, d_v), jnp.float32),
        "wo": w(ks[3], (d_v, d_m)), "bo": jnp.zeros((1, d_m), jnp.float32),
        "g1": jnp.ones((1, d_m), jnp.float32), "be1": jnp.zeros((1, d_m), jnp.float32),
        # position-wise FFN params exist on the module but are dead in forward();
        # kept for fidelity, never passed to the kernel.
        "w1": w(ks[4], (d_m, d_ff)), "b1": jnp.zeros((1, d_ff), jnp.float32),
        "w2": w(ks[5], (d_ff, d_m)), "b2": jnp.zeros((1, d_m), jnp.float32),
        "g2": jnp.ones((1, d_m), jnp.float32), "be2": jnp.zeros((1, d_m), jnp.float32),
    }


if __name__ == "__main__":
    # TPU-friendly shapes: D = d_k = d_v = 128 keeps every matmul and the output store
    # lane-dense; B = 8 lets the auto-picked batch_block (TB=4 -> grid=2) present
    # M = TB*S = 512 rows to the MXU while both TensorCores stay busy on v7x.
    B, S = 8, 128
    d_m, d_ff, d_k, d_v = 128, 256, 128, 128

    key = jax.random.PRNGKey(0)
    k_x, k_p = jax.random.split(key)
    x = jax.random.normal(k_x, (B, S, d_m), dtype=jnp.float32)
    params = init_params(k_p, d_m, d_ff, d_k, d_v)
    fused = prepare_params(params, d_k=d_k)   # one-time fusion / bf16 cast / scale fold

    out = encoder_layer(x, fused, d_k=d_k, d_v=d_v)
    jax.block_until_ready(out)
    assert out.shape == (B, S, d_m)
    print("KERNEL_OK")
</pallas_src>

<mosaic_0001>
module attributes {stable_mosaic.version = 11 : i64} {
  func.func @encoder_layer_kernel(%arg0: i32, %arg1: memref<4x128x128xf32, #tpu.memory_space<vmem>>, %arg2: memref<128x384xbf16, #tpu.memory_space<vmem>>, %arg3: memref<1x384xf32, #tpu.memory_space<vmem>>, %arg4: memref<128x128xbf16, #tpu.memory_space<vmem>>, %arg5: memref<1x128xf32, #tpu.memory_space<vmem>>, %arg6: memref<1x128xf32, #tpu.memory_space<vmem>>, %arg7: memref<1x128xf32, #tpu.memory_space<vmem>>, %arg8: memref<4x128x128xf32, #tpu.memory_space<vmem>>) attributes {dimension_semantics = [#tpu.dimension_semantics<parallel>], iteration_bounds = array<i64: 2>, scalar_prefetch = 0 : i64, scratch_operands = 0 : i64, tpu.core_type = #tpu.core_type<tc>, window_params = [{transform_indices = @transform_0, window_bounds = array<i64: 4, 128, 128>}, {pipeline_mode = #tpu.pipeline_mode<synchronous>, transform_indices = @transform_1, window_bounds = array<i64: 128, 384>}, {pipeline_mode = #tpu.pipeline_mode<synchronous>, transform_indices = @transform_2, window_bounds = array<i64: 1, 384>}, {pipeline_mode = #tpu.pipeline_mode<synchronous>, transform_indices = @transform_3, window_bounds = array<i64: 128, 128>}, {pipeline_mode = #tpu.pipeline_mode<synchronous>, transform_indices = @transform_4, window_bounds = array<i64: 1, 128>}, {pipeline_mode = #tpu.pipeline_mode<synchronous>, transform_indices = @transform_5, window_bounds = array<i64: 1, 128>}, {pipeline_mode = #tpu.pipeline_mode<synchronous>, transform_indices = @transform_6, window_bounds = array<i64: 1, 128>}, {transform_indices = @transform_7, window_bounds = array<i64: 4, 128, 128>}]} {
    %c0 = arith.constant 0 : index
    %c0_0 = arith.constant 0 : index
    %c0_1 = arith.constant 0 : index
    %0 = vector.load %arg1[%c0, %c0_0, %c0_1] : memref<4x128x128xf32, #tpu.memory_space<vmem>>, vector<4x128x128xf32>
    %1 = vector.shape_cast %0 : vector<4x128x128xf32> to vector<512x128xf32>
    %2 = arith.truncf %1 : vector<512x128xf32> to vector<512x128xbf16>
    %c0_2 = arith.constant 0 : index
    %c0_3 = arith.constant 0 : index
    %3 = vector.load %arg2[%c0_2, %c0_3] : memref<128x384xbf16, #tpu.memory_space<vmem>>, vector<128x384xbf16>
    %cst = arith.constant dense<0.000000e+00> : vector<512x384xf32>
    %4 = tpu.matmul %2, %3, %cst {dimension_numbers = #tpu.dot_dimension_numbers<[1], [0], [0], [1], [0, 0, 1, 1], [], []>} : vector<512x128xbf16>, vector<128x384xbf16>, vector<512x384xf32> -> vector<512x384xf32>
    %c0_4 = arith.constant 0 : index
    %c0_5 = arith.constant 0 : index
    %5 = vector.load %arg3[%c0_4, %c0_5] : memref<1x384xf32, #tpu.memory_space<vmem>>, vector<1x384xf32>
    %6 = vector.broadcast %5 : vector<1x384xf32> to vector<512x384xf32>
    %7 = arith.addf %4, %6 : vector<512x384xf32>
    %8 = vector.extract_strided_slice %7 {offsets = [0, 0], sizes = [512, 128], strides = [1, 1]} : vector<512x384xf32> to vector<512x128xf32>
    %9 = vector.shape_cast %8 : vector<512x128xf32> to vector<4x128x128xf32>
    %10 = vector.extract_strided_slice %7 {offsets = [0, 128], sizes = [512, 128], strides = [1, 1]} : vector<512x384xf32> to vector<512x128xf32>
    %11 = vector.shape_cast %10 : vector<512x128xf32> to vector<4x128x128xf32>
    %12 = vector.extract_strided_slice %7 {offsets = [0, 256], sizes = [512, 128], strides = [1, 1]} : vector<512x384xf32> to vector<512x128xf32>
    %13 = vector.shape_cast %12 : vector<512x128xf32> to vector<4x128x128xf32>
    %14 = arith.truncf %9 : vector<4x128x128xf32> to vector<4x128x128xbf16>
    %15 = arith.truncf %11 : vector<4x128x128xf32> to vector<4x128x128xbf16>
    "tpu.trace_start"() <{level = 10 : i32, message = "bqd,bkd->bqk"}> : () -> ()
    %cst_6 = arith.constant dense<0.000000e+00> : vector<4x128x128xf32>
    %16 = tpu.matmul %14, %15, %cst_6 {dimension_numbers = #tpu.dot_dimension_numbers<[2], [2], [1], [1], [0, 0, 0, 1, 1, 1], [0], [0]>} : vector<4x128x128xbf16>, vector<4x128x128xbf16>, vector<4x128x128xf32> -> vector<4x128x128xf32>
    "tpu.trace_stop"() : () -> ()
    %cst_7 = arith.constant dense<0xFF800000> : vector<4x128xf32>
    %17 = vector.multi_reduction <maximumf>, %16, %cst_7 [2] : vector<4x128x128xf32> to vector<4x128xf32>
    %18 = vector.shape_cast %17 : vector<4x128xf32> to vector<4x128x1xf32>
    %19 = vector.broadcast %18 : vector<4x128x1xf32> to vector<4x128x128xf32>
    %20 = arith.subf %16, %19 : vector<4x128x128xf32>
    %21 = math.exp %20 : vector<4x128x128xf32>
    %cst_8 = arith.constant dense<0.000000e+00> : vector<4x128xf32>
    %22 = vector.multi_reduction <add>, %21, %cst_8 [2] : vector<4x128x128xf32> to vector<4x128xf32>
    %23 = vector.shape_cast %22 : vector<4x128xf32> to vector<4x128x1xf32>
    %24 = tpu.reciprocal %23 {approx = true} : vector<4x128x1xf32> -> vector<4x128x1xf32>
    %25 = vector.broadcast %24 : vector<4x128x1xf32> to vector<4x128x128xf32>
    %26 = arith.mulf %21, %25 : vector<4x128x128xf32>
    %27 = arith.truncf %26 : vector<4x128x128xf32> to vector<4x128x128xbf16>
    %28 = arith.truncf %13 : vector<4x128x128xf32> to vector<4x128x128xbf16>
    "tpu.trace_start"() <{level = 10 : i32, message = "bqk,bkd->bqd"}> : () -> ()
    %cst_9 = arith.constant dense<0.000000e+00> : vector<4x128x128xf32>
    %29 = tpu.matmul %27, %28, %cst_9 {dimension_numbers = #tpu.dot_dimension_numbers<[2], [1], [1], [2], [0, 0, 0, 1, 1, 2], [0], [0]>} : vector<4x128x128xbf16>, vector<4x128x128xbf16>, vector<4x128x128xf32> -> vector<4x128x128xf32>
    "tpu.trace_stop"() : () -> ()
    %30 = vector.shape_cast %29 : vector<4x128x128xf32> to vector<512x128xf32>
    %31 = arith.truncf %30 : vector<512x128xf32> to vector<512x128xbf16>
    %c0_10 = arith.constant 0 : index
    %c0_11 = arith.constant 0 : index
    %32 = vector.load %arg4[%c0_10, %c0_11] : memref<128x128xbf16, #tpu.memory_space<vmem>>, vector<128x128xbf16>
    %cst_12 = arith.constant dense<0.000000e+00> : vector<512x128xf32>
    %33 = tpu.matmul %31, %32, %cst_12 {dimension_numbers = #tpu.dot_dimension_numbers<[1], [0], [0], [1], [0, 0, 1, 1], [], []>} : vector<512x128xbf16>, vector<128x128xbf16>, vector<512x128xf32> -> vector<512x128xf32>
    %c0_13 = arith.constant 0 : index
    %c0_14 = arith.constant 0 : index
    %34 = vector.load %arg5[%c0_13, %c0_14] : memref<1x128xf32, #tpu.memory_space<vmem>>, vector<1x128xf32>
    %35 = vector.broadcast %34 : vector<1x128xf32> to vector<512x128xf32>
    %36 = arith.addf %33, %35 : vector<512x128xf32>
    %37 = arith.addf %36, %1 : vector<512x128xf32>
    %c0_15 = arith.constant 0 : index
    %c0_16 = arith.constant 0 : index
    %38 = vector.load %arg6[%c0_15, %c0_16] : memref<1x128xf32, #tpu.memory_space<vmem>>, vector<1x128xf32>
    %c0_17 = arith.constant 0 : index
    %c0_18 = arith.constant 0 : index
    %39 = vector.load %arg7[%c0_17, %c0_18] : memref<1x128xf32, #tpu.memory_space<vmem>>, vector<1x128xf32>
    %cst_19 = arith.constant dense<0.000000e+00> : vector<512xf32>
    %40 = vector.multi_reduction <add>, %37, %cst_19 [1] : vector<512x128xf32> to vector<512xf32>
    %41 = vector.shape_cast %40 : vector<512xf32> to vector<512x1xf32>
    %cst_20 = arith.constant 1.280000e+02 : f32
    %42 = vector.broadcast %cst_20 : f32 to vector<512x1xf32>
    %43 = arith.divf %41, %42 : vector<512x1xf32>
    %44 = arith.mulf %37, %37 : vector<512x128xf32>
    %cst_21 = arith.constant dense<0.000000e+00> : vector<512xf32>
    %45 = vector.multi_reduction <add>, %44, %cst_21 [1] : vector<512x128xf32> to vector<512xf32>
    %46 = vector.shape_cast %45 : vector<512xf32> to vector<512x1xf32>
    %cst_22 = arith.constant 1.280000e+02 : f32
    %47 = vector.broadcast %cst_22 : f32 to vector<512x1xf32>
    %48 = arith.divf %46, %47 : vector<512x1xf32>
    %49 = arith.mulf %43, %43 : vector<512x1xf32>
    %50 = arith.subf %48, %49 : vector<512x1xf32>
    %cst_23 = arith.constant 9.99999997E-7 : f32
    %51 = vector.broadcast %cst_23 : f32 to vector<512x1xf32>
    %52 = arith.addf %50, %51 : vector<512x1xf32>
    %53 = math.rsqrt %52 : vector<512x1xf32>
    %54 = vector.broadcast %43 : vector<512x1xf32> to vector<512x128xf32>
    %55 = arith.subf %37, %54 : vector<512x128xf32>
    %56 = vector.broadcast %53 : vector<512x1xf32> to vector<512x128xf32>
    %57 = arith.mulf %55, %56 : vector<512x128xf32>
    %58 = vector.broadcast %38 : vector<1x128xf32> to vector<512x128xf32>
    %59 = arith.mulf %57, %58 : vector<512x128xf32>
    %60 = vector.broadcast %39 : vector<1x128xf32> to vector<512x128xf32>
    %61 = arith.addf %59, %60 : vector<512x128xf32>
    %62 = vector.shape_cast %61 : vector<512x128xf32> to vector<4x128x128xf32>
    %c0_24 = arith.constant 0 : index
    %c0_25 = arith.constant 0 : index
    %c0_26 = arith.constant 0 : index
    %63 = vector.load %arg8[%c0_24, %c0_25, %c0_26] : memref<4x128x128xf32, #tpu.memory_space<vmem>>, vector<4x128x128xf32>
    tpu.vector_store %arg8[%c0_24, %c0_25, %c0_26], %62 {strides = array<i32>} : memref<4x128x128xf32, #tpu.memory_space<vmem>>, vector<4x128x128xf32>,
    return
  }
  func.func @transform_0(%arg0: i32) -> (i32, i32, i32) {
    %c0_i32 = arith.constant 0 : i32
    %c0_i32_0 = arith.constant 0 : i32
    %c0_i32_1 = arith.constant 0 : i32
    return %arg0, %c0_i32, %c0_i32_0 : i32, i32, i32
  }
  func.func @transform_1(%arg0: i32) -> (i32, i32) {
    %c0_i32 = arith.constant 0 : i32
    %c0_i32_0 = arith.constant 0 : i32
    %c0_i32_1 = arith.constant 0 : i32
    return %c0_i32, %c0_i32_0 : i32, i32
  }
  func.func @transform_2(%arg0: i32) -> (i32, i32) {
    %c0_i32 = arith.constant 0 : i32
    %c0_i32_0 = arith.constant 0 : i32
    %c0_i32_1 = arith.constant 0 : i32
    return %c0_i32, %c0_i32_0 : i32, i32
  }
  func.func @transform_3(%arg0: i32) -> (i32, i32) {
    %c0_i32 = arith.constant 0 : i32
    %c0_i32_0 = arith.constant 0 : i32
    %c0_i32_1 = arith.constant 0 : i32
    return %c0_i32, %c0_i32_0 : i32, i32
  }
  func.func @transform_4(%arg0: i32) -> (i32, i32) {
    %c0_i32 = arith.constant 0 : i32
    %c0_i32_0 = arith.constant 0 : i32
    %c0_i32_1 = arith.constant 0 : i32
    return %c0_i32, %c0_i32_0 : i32, i32
  }
  func.func @transform_5(%arg0: i32) -> (i32, i32) {
    %c0_i32 = arith.constant 0 : i32
    %c0_i32_0 = arith.constant 0 : i32
    %c0_i32_1 = arith.constant 0 : i32
    return %c0_i32, %c0_i32_0 : i32, i32
  }
  func.func @transform_6(%arg0: i32) -> (i32, i32) {
    %c0_i32 = arith.constant 0 : i32
    %c0_i32_0 = arith.constant 0 : i32
    %c0_i32_1 = arith.constant 0 : i32
    return %c0_i32, %c0_i32_0 : i32, i32
  }
  func.func @transform_7(%arg0: i32) -> (i32, i32, i32) {
    %c0_i32 = arith.constant 0 : i32
    %c0_i32_0 = arith.constant 0 : i32
    %c0_i32_1 = arith.constant 0 : i32
    return %arg0, %c0_i32, %c0_i32_0 : i32, i32, i32
  }
}

</mosaic_0001>

<llo_original>
// kernel: tpu_custom_call.1
$region0: #{tpu_custom_call.1}
  #allocation0 [shape = 'u32[]', space=smem, size = 0x4, offset = 0x4, fixed_abs, tag = 'smem constant byte address 0x4 - core index']
  #allocation1 [shape = 'u32[144,128]{1,0:T(1,128)}', space=vmem, size = 0x12000, scoped, tag = 'internal scratch']
  %s0 = inlined_call_operand.hbm [shape: f32[8,128,128], index: 0, kind: input, shape index: {}]
  %s1 = inlined_call_operand.hbm [shape: bf16[128,384], index: 1, kind: input, shape index: {}]
  %s2 = inlined_call_operand.vmem [shape: f32[1,384], index: 2, kind: input, shape index: {}]
  %s3 = inlined_call_operand.hbm [shape: bf16[128,128], index: 3, kind: input, shape index: {}]
  %s4 = inlined_call_operand.vmem [shape: f32[1,128], index: 4, kind: input, shape index: {}]
  %s5 = inlined_call_operand.vmem [shape: f32[1,128], index: 5, kind: input, shape index: {}]
  %s6 = inlined_call_operand.vmem [shape: f32[1,128], index: 6, kind: input, shape index: {}]
  %s7 = inlined_call_operand.hbm [shape: f32[8,128,128], index: 7, kind: output, shape index: {}]
  %s8 = sld [smem:[#allocation0]]
  $region73: #{tpu_custom_call.1} parent=0
    _
  %s10 = ssub.s32 1, %s8
  %s11 = scalar_select 0, %s10, %s8
  $region1: #{tpu_custom_call.1} parent=0
    #allocation2 [shape = 'u8[524288]{0}', space=vmem, size = 0x80000, scoped, tag = 'input window, operand 0']
    #allocation3 [shape = 's32[2]{0}', space=sflag, size = 0x8, scoped, tag = 'scoped memory for tpu_custom_call.1']
    #allocation4 [shape = 's32[2]{0}', space=sflag, size = 0x8, scoped, tag = 'scoped memory for tpu_custom_call.1']
    #allocation5 [shape = 'u8[98304]{0}', space=vmem, size = 0x18000, scoped, tag = 'input window, operand 1, single buffered']
    #allocation6 [shape = 's32[1]{0}', space=sflag, size = 0x4, scoped, tag = 'scoped memory for tpu_custom_call.1']
    #allocation7 [shape = 'u8[32768]{0}', space=vmem, size = 0x8000, scoped, tag = 'input window, operand 3, single buffered']
    #allocation8 [shape = 'u8[524288]{0}', space=vmem, size = 0x80000, scoped, tag = 'output window, operand 0']
    %12 = vsyncpa [#allocation3], 0
    %s13 = scalar_lea.sflag [#allocation3], 1
    %14 = vsyncpa %s13, 0
    %15 = vsyncpa [#allocation6], 0
    %16 = vsyncpa [#allocation4], 0
    %s17 = scalar_lea.sflag [#allocation4], 1
    %18 = vsyncpa %s17, 0
    loop: start=0, step=1, limit=4
    $region2: #{tpu_custom_call.1} parent=1 // loop_pre_header
      _
    $region3: #{tpu_custom_call.1} parent=1 // loop_header
      %s20 = sphi 0, %s24
      %p21 = scmp.ge.s32.totalorder %s20, 4
      %s30 = sphi 0, %s32
      %s33 = sphi 0, %s30
      %s34 = sphi 0, %s33
      %s50 = sphi 0, %s34
      %s54 = sphi 0, %s54
      %s56 = sphi 0, %s54
      %s57 = sphi 0, %s56
      %s71 = sphi 0, %s57
      %s75 = sphi 0, %s75
      %s77 = sphi 0, %s75
      %s78 = sphi 0, %s77
      %s92 = sphi 0, %s78
      %s96 = sphi 0, %s96
      %s98 = sphi 0, %s96
      %s99 = sphi 0, %s98
      %s113 = sphi 0, %s99
      %s117 = sphi 0, %s117
      %s119 = sphi 0, %s117
      %s120 = sphi 0, %s119
      %s134 = sphi 0, %s120
      %s138 = sphi 0, %s138
      %s140 = sphi 0, %s138
      %s141 = sphi 0, %s140
      %s155 = sphi 0, %s141
      %s159 = sphi 0, %s159
      %s161 = sphi 0, %s159
      %s162 = sphi 0, %s161
      %s176 = sphi 0, %s162
      %s182 = sphi 0, %s184
      %s185 = sphi 0, %s182
      %s186 = sphi 0, %s185
      %s202 = sphi 0, %s186
    $region4: #{tpu_custom_call.1} parent=1 // loop_header_branch
      %23 = sbr.rel (%p21) target = $region8
    $region5: #{tpu_custom_call.1} parent=1 // loop_body
      %s25 = ssub.s32 %s20, 1
      %s26 = ssub.s32 %s20, 2
      %s27 = sadd.s32 %s20, 1
      %s28 = ssub.s32 %s20, %s27
      %p29 = scmp.eq.s32.totalorder %s28, 0
      %s31 = sadd.s32 %s30, 1
      %s32 = scalar_select %p29, %s30, %s31
      %p35 = pneg %p29
      %p36 = scmp.eq.s32.totalorder %s20, 1
      %p37 = por %p35, %p36
      %p38 = scmp.ne.s32.totalorder %s30, %s33
      %p39 = scmp.eq.s32.totalorder %s20, 0
      %p40 = por %p38, %p39
      %p41 = scmp.ne.s32.totalorder %s30, %s33
      %p42 = scmp.eq.s32.totalorder %s25, 1
      %p43 = por %p41, %p42
      %p44 = scmp.ne.s32.totalorder %s33, %s34
      %p45 = scmp.eq.s32.totalorder %s25, 0
      %p46 = por %p44, %p45
      %p47 = scmp.ne.s32.totalorder %s33, %s34
      %p48 = scmp.eq.s32.totalorder %s26, 1
      %p49 = por %p47, %p48
      %p51 = scmp.ne.s32.totalorder %s34, %s50
      %p52 = scmp.eq.s32.totalorder %s26, 0
      %p53 = por %p51, %p52
      %s55 = sadd.s32 %s54, 1
      %p58 = scmp.eq.s32.totalorder %s20, 1
      %p59 = scmp.ne.s32.totalorder %s54, %s56
      %p60 = scmp.eq.s32.totalorder %s20, 0
      %p61 = por %p59, %p60
      %p62 = scmp.ne.s32.totalorder %s54, %s56
      %p63 = scmp.eq.s32.totalorder %s25, 1
      %p64 = por %p62, %p63
      %p65 = scmp.ne.s32.totalorder %s56, %s57
      %p66 = scmp.eq.s32.totalorder %s25, 0
      %p67 = por %p65, %p66
      %p68 = scmp.ne.s32.totalorder %s56, %s57
      %p69 = scmp.eq.s32.totalorder %s26, 1
      %p70 = por %p68, %p69
      %p72 = scmp.ne.s32.totalorder %s57, %s71
      %p73 = scmp.eq.s32.totalorder %s26, 0
      %p74 = por %p72, %p73
      %s76 = sadd.s32 %s75, 1
      %p79 = scmp.eq.s32.totalorder %s20, 1
      %p80 = scmp.ne.s32.totalorder %s75, %s77
      %p81 = scmp.eq.s32.totalorder %s20, 0
      %p82 = por %p80, %p81
      %p83 = scmp.ne.s32.totalorder %s75, %s77
      %p84 = scmp.eq.s32.totalorder %s25, 1
      %p85 = por %p83, %p84
      %p86 = scmp.ne.s32.totalorder %s77, %s78
      %p87 = scmp.eq.s32.totalorder %s25, 0
      %p88 = por %p86, %p87
      %p89 = scmp.ne.s32.totalorder %s77, %s78
      %p90 = scmp.eq.s32.totalorder %s26, 1
      %p91 = por %p89, %p90
      %p93 = scmp.ne.s32.totalorder %s78, %s92
      %p94 = scmp.eq.s32.totalorder %s26, 0
      %p95 = por %p93, %p94
      %s97 = sadd.s32 %s96, 1
      %p100 = scmp.eq.s32.totalorder %s20, 1
      %p101 = scmp.ne.s32.totalorder %s96, %s98
      %p102 = scmp.eq.s32.totalorder %s20, 0
      %p103 = por %p101, %p102
      %p104 = scmp.ne.s32.totalorder %s96, %s98
      %p105 = scmp.eq.s32.totalorder %s25, 1
      %p106 = por %p104, %p105
      %p107 = scmp.ne.s32.totalorder %s98, %s99
      %p108 = scmp.eq.s32.totalorder %s25, 0
      %p109 = por %p107, %p108
      %p110 = scmp.ne.s32.totalorder %s98, %s99
      %p111 = scmp.eq.s32.totalorder %s26, 1
      %p112 = por %p110, %p111
      %p114 = scmp.ne.s32.totalorder %s99, %s113
      %p115 = scmp.eq.s32.totalorder %s26, 0
      %p116 = por %p114, %p115
      %s118 = sadd.s32 %s117, 1
      %p121 = scmp.eq.s32.totalorder %s20, 1
      %p122 = scmp.ne.s32.totalorder %s117, %s119
      %p123 = scmp.eq.s32.totalorder %s20, 0
      %p124 = por %p122, %p123
      %p125 = scmp.ne.s32.totalorder %s117, %s119
      %p126 = scmp.eq.s32.totalorder %s25, 1
      %p127 = por %p125, %p126
      %p128 = scmp.ne.s32.totalorder %s119, %s120
      %p129 = scmp.eq.s32.totalorder %s25, 0
      %p130 = por %p128, %p129
      %p131 = scmp.ne.s32.totalorder %s119, %s120
      %p132 = scmp.eq.s32.totalorder %s26, 1
      %p133 = por %p131, %p132
      %p135 = scmp.ne.s32.totalorder %s120, %s134
      %p136 = scmp.eq.s32.totalorder %s26, 0
      %p137 = por %p135, %p136
      %s139 = sadd.s32 %s138, 1
      %p142 = scmp.eq.s32.totalorder %s20, 1
      %p143 = scmp.ne.s32.totalorder %s138, %s140
      %p144 = scmp.eq.s32.totalorder %s20, 0
      %p145 = por %p143, %p144
      %p146 = scmp.ne.s32.totalorder %s138, %s140
      %p147 = scmp.eq.s32.totalorder %s25, 1
      %p148 = por %p146, %p147
      %p149 = scmp.ne.s32.totalorder %s140, %s141
      %p150 = scmp.eq.s32.totalorder %s25, 0
      %p151 = por %p149, %p150
      %p152 = scmp.ne.s32.totalorder %s140, %s141
      %p153 = scmp.eq.s32.totalorder %s26, 1
      %p154 = por %p152, %p153
      %p156 = scmp.ne.s32.totalorder %s141, %s155
      %p157 = scmp.eq.s32.totalorder %s26, 0
      %p158 = por %p156, %p157
      %s160 = sadd.s32 %s159, 1
      %p163 = scmp.eq.s32.totalorder %s20, 1
      %p164 = scmp.ne.s32.totalorder %s159, %s161
      %p165 = scmp.eq.s32.totalorder %s20, 0
      %p166 = por %p164, %p165
      %p167 = scmp.ne.s32.totalorder %s159, %s161
      %p168 = scmp.eq.s32.totalorder %s25, 1
      %p169 = por %p167, %p168
      %p170 = scmp.ne.s32.totalorder %s161, %s162
      %p171 = scmp.eq.s32.totalorder %s25, 0
      %p172 = por %p170, %p171
      %p173 = scmp.ne.s32.totalorder %s161, %s162
      %p174 = scmp.eq.s32.totalorder %s26, 1
      %p175 = por %p173, %p174
      %p177 = scmp.ne.s32.totalorder %s162, %s176
      %p178 = scmp.eq.s32.totalorder %s26, 0
      %p179 = por %p177, %p178
      %s180 = ssub.s32 %s20, %s27
      %p181 = scmp.eq.s32.totalorder %s180, 0
      %s183 = sadd.s32 %s182, 1
      %s184 = scalar_select %p181, %s182, %s183
      %p187 = pneg %p181
      %p188 = scmp.eq.s32.totalorder %s20, 1
      %p189 = por %p187, %p188
      %p190 = scmp.ne.s32.totalorder %s182, %s185
      %p191 = scmp.eq.s32.totalorder %s20, 0
      %p192 = por %p190, %p191
      %p193 = scmp.ne.s32.totalorder %s182, %s185
      %p194 = scmp.eq.s32.totalorder %s25, 1
      %p195 = por %p193, %p194
      %p196 = scmp.ne.s32.totalorder %s185, %s186
      %p197 = scmp.eq.s32.totalorder %s25, 0
      %p198 = por %p196, %p197
      %p199 = scmp.ne.s32.totalorder %s185, %s186
      %p200 = scmp.eq.s32.totalorder %s26, 1
      %p201 = por %p199, %p200
      %p203 = scmp.ne.s32.totalorder %s186, %s202
      %p204 = scmp.eq.s32.totalorder %s26, 0
      %p205 = por %p203, %p204
      %p206 = scmp.le.s32.totalorder 1, %s20
      %p207 = scmp.lt.s32.totalorder %s20, 3
      %p208 = pnand %p206, %p207
      %p209 = pneg %p208
      // Predicated region
      $region9: #{tpu_custom_call.1} parent=5 // pred_check
        _
      $region10: #{tpu_custom_call.1} parent=5 // pred_check_branch
        %211 = sbr.rel (%p208) target = $region12
      $region11: #{tpu_custom_call.1} parent=5 // pred_region
        %s212 = ssub.s32 %s20, 1
        // Predicated region
        $region13: #{tpu_custom_call.1} parent=11 // pred_check
          %p213 = pneg %p67
        $region14: #{tpu_custom_call.1} parent=11 // pred_check_branch
          %215 = sbr.rel (%p213) target = $region16
        $region15: #{tpu_custom_call.1} parent=11 // pred_region
          %s217 = ssub.s32 3072, 3072
          %218 = vsyncadd [#allocation6], %s217
          %s219 = sshll.u32 [#allocation5], 4
          %s220 = int_to_ptr.vmem [resolvable:$true] %s219
          %225 = dma.hbm_to_vmem [thread:$0]  %s1, 3072, %s220, [#allocation6], 192, 192, 12
        $region16: #{tpu_custom_call.1} parent=11 // pred_fallthru
          _
        // Predicated region
        $region17: #{tpu_custom_call.1} parent=11 // pred_check
          %p226 = pneg %p88
        $region18: #{tpu_custom_call.1} parent=11 // pred_check_branch
          %228 = sbr.rel (%p226) target = $region20
        $region19: #{tpu_custom_call.1} parent=11 // pred_region
          _
        $region20: #{tpu_custom_call.1} parent=11 // pred_fallthru
          _
        // Predicated region
        $region21: #{tpu_custom_call.1} parent=11 // pred_check
          %p229 = pneg %p109
        $region22: #{tpu_custom_call.1} parent=11 // pred_check_branch
          %231 = sbr.rel (%p229) target = $region24
        $region23: #{tpu_custom_call.1} parent=11 // pred_region
          %s233 = ssub.s32 1024, 1024
          %234 = vsyncadd [#allocation6], %s233
          %s235 = sshll.u32 [#allocation7], 4
          %s236 = int_to_ptr.vmem [resolvable:$true] %s235
          %241 = dma.hbm_to_vmem [thread:$0]  %s3, 1024, %s236, [#allocation6], 64, 64, 4
        $region24: #{tpu_custom_call.1} parent=11 // pred_fallthru
          _
        // Predicated region
        $region25: #{tpu_custom_call.1} parent=11 // pred_check
          %p242 = pneg %p130
        $region26: #{tpu_custom_call.1} parent=11 // pred_check_branch
          %244 = sbr.rel (%p242) target = $region28
        $region27: #{tpu_custom_call.1} parent=11 // pred_region
          _
        $region28: #{tpu_custom_call.1} parent=11 // pred_fallthru
          _
        // Predicated region
        $region29: #{tpu_custom_call.1} parent=11 // pred_check
          %p245 = pneg %p151
        $region30: #{tpu_custom_call.1} parent=11 // pred_check_branch
          %247 = sbr.rel (%p245) target = $region32
        $region31: #{tpu_custom_call.1} parent=11 // pred_region
          _
        $region32: #{tpu_custom_call.1} parent=11 // pred_fallthru
          _
        // Predicated region
        $region33: #{tpu_custom_call.1} parent=11 // pred_check
          %p248 = pneg %p172
        $region34: #{tpu_custom_call.1} parent=11 // pred_check_branch
          %250 = sbr.rel (%p248) target = $region36
        $region35: #{tpu_custom_call.1} parent=11 // pred_region
          _
        $region36: #{tpu_custom_call.1} parent=11 // pred_fallthru
          _
      $region12: #{tpu_custom_call.1} parent=5 // pred_fallthru
        _
      %p251 = scmp.lt.s32.totalorder %s20, 2
      // Predicated region
      $region37: #{tpu_custom_call.1} parent=5 // pred_check
        %p252 = pneg %p251
      $region38: #{tpu_custom_call.1} parent=5 // pred_check_branch
        %254 = sbr.rel (%p252) target = $region40
      $region39: #{tpu_custom_call.1} parent=5 // pred_region
        // Predicated region
        $region41: #{tpu_custom_call.1} parent=39 // pred_check
          %p255 = pneg %p40
        $region42: #{tpu_custom_call.1} parent=39 // pred_check_branch
          %257 = sbr.rel (%p255) target = $region44
        $region43: #{tpu_custom_call.1} parent=39 // pred_region
          %s258 = sand.u32 %s30, 1
          %s259 = scalar_lea.sflag [#allocation3], %s258
          %s260 = sand.u32 %s30, 1
          %s261 = smul.addr %s260, 512
          %s262 = scalar_lea.vmem [#allocation2], %s261
          %s263 = smul.u32 4, %s20
          %s265 = ssub.s32 8192, 8192
          %266 = vsyncadd %s259, %s265
          %s267 = smul.addr %s263, 16
          %s268 = smul.addr %s267, 128
          %s269 = scalar_lea.hbm %s0, %s268
          %s270 = sshll.u32 %s262, 4
          %s271 = int_to_ptr.vmem [resolvable:$true] %s270
          %276 = dma.hbm_to_vmem [thread:$0]  %s269, 8192, %s271, %s259, 128, 128, 8
        $region44: #{tpu_custom_call.1} parent=39 // pred_fallthru
          _
      $region40: #{tpu_custom_call.1} parent=5 // pred_fallthru
        _
      %p277 = scmp.le.s32.totalorder 1, %s20
      %p278 = scmp.lt.s32.totalorder %s20, 3
      %p279 = pnand %p277, %p278
      %p280 = pneg %p279
      // Predicated region
      $region45: #{tpu_custom_call.1} parent=5 // pred_check
        _
      $region46: #{tpu_custom_call.1} parent=5 // pred_check_branch
        %282 = sbr.rel (%p279) target = $region48
      $region47: #{tpu_custom_call.1} parent=5 // pred_region
        %s283 = ssub.s32 %s20, 1
        %s284 = sand.u32 %s33, 1
        %s285 = scalar_lea.sflag [#allocation3], %s284
        %s286 = sand.u32 %s33, 1
        %s287 = smul.addr %s286, 512
        %s288 = scalar_lea.vmem [#allocation2], %s287
        // Predicated region
        $region49: #{tpu_custom_call.1} parent=47 // pred_check
          %p289 = pneg %p46
        $region50: #{tpu_custom_call.1} parent=47 // pred_check_branch
          %291 = sbr.rel (%p289) target = $region52
        $region51: #{tpu_custom_call.1} parent=47 // pred_region
          %292 = dma.done %s285, 8192
        $region52: #{tpu_custom_call.1} parent=47 // pred_fallthru
          _
        // Predicated region
        $region53: #{tpu_custom_call.1} parent=47 // pred_check
          %p293 = pneg %p67
        $region54: #{tpu_custom_call.1} parent=47 // pred_check_branch
          %295 = sbr.rel (%p293) target = $region56
        $region55: #{tpu_custom_call.1} parent=47 // pred_region
          %296 = dma.done [#allocation6], 3072
        $region56: #{tpu_custom_call.1} parent=47 // pred_fallthru
          _
        // Predicated region
        $region57: #{tpu_custom_call.1} parent=47 // pred_check
          %p297 = pneg %p109
        $region58: #{tpu_custom_call.1} parent=47 // pred_check_branch
          %299 = sbr.rel (%p297) target = $region60
        $region59: #{tpu_custom_call.1} parent=47 // pred_region
          %300 = dma.done [#allocation6], 1024
        $region60: #{tpu_custom_call.1} parent=47 // pred_fallthru
          _
        %s301 = sand.u32 %s33, 1
        %s302 = scalar_lea.sflag [#allocation3], %s301
        %s303 = sand.u32 %s33, 1
        %s304 = smul.addr %s303, 512
        %s305 = scalar_lea.vmem [#allocation2], %s304
        %p306 = pneg %p46
        %p307 = pneg %p43
        %p308 = pneg %p67
        %p309 = pneg %p64
        %p310 = pneg %p88
        %p311 = pneg %p85
        %p312 = pneg %p109
        %p313 = pneg %p106
        %p314 = pneg %p130
        %p315 = pneg %p127
        %p316 = pneg %p151
        %p317 = pneg %p148
        %p318 = pneg %p172
        %p319 = pneg %p169
        %p320 = pneg %p198
        %p321 = pneg %p195
        %s322 = sand.u32 %s185, 1
        %s323 = scalar_lea.sflag [#allocation4], %s322
        %s324 = sand.u32 %s185, 1
        %s325 = smul.addr %s324, 512
        %s326 = scalar_lea.vmem [#allocation8], %s325
        %s327 = smul.u32 4, %s25
        %s328 = smul.u32 4, %s25
        %v330 = vld [vmem:[%s288] sm:$0xff]
        %v331 = vld [vmem:[%s288 + $0x8] sm:$0xff]
        %v332 = vld [vmem:[%s288 + $0x10] sm:$0xff]
        %v333 = vld [vmem:[%s288 + $0x18] sm:$0xff]
        %v334 = vld [vmem:[%s288 + $0x20] sm:$0xff]
        %v335 = vld [vmem:[%s288 + $0x28] sm:$0xff]
        %v336 = vld [vmem:[%s288 + $0x30] sm:$0xff]
        %v337 = vld [vmem:[%s288 + $0x38] sm:$0xff]
        %v338 = vld [vmem:[%s288 + $0x40] sm:$0xff]
        %v339 = vld [vmem:[%s288 + $0x48] sm:$0xff]
        %v340 = vld [vmem:[%s288 + $0x50] sm:$0xff]
        %v341 = vld [vmem:[%s288 + $0x58] sm:$0xff]
        %v342 = vld [vmem:[%s288 + $0x60] sm:$0xff]
        %v343 = vld [vmem:[%s288 + $0x68] sm:$0xff]
        %v344 = vld [vmem:[%s288 + $0x70] sm:$0xff]
        %v345 = vld [vmem:[%s288 + $0x78] sm:$0xff]
        %v346 = vld [vmem:[%s288 + $0x80] sm:$0xff]
        %v347 = vld [vmem:[%s288 + $0x88] sm:$0xff]
        %v348 = vld [vmem:[%s288 + $0x90] sm:$0xff]
        %v349 = vld [vmem:[%s288 + $0x98] sm:$0xff]
        %v350 = vld [vmem:[%s288 + $0xa0] sm:$0xff]
        %v351 = vld [vmem:[%s288 + $0xa8] sm:$0xff]
        %v352 = vld [vmem:[%s288 + $0xb0] sm:$0xff]
        %v353 = vld [vmem:[%s288 + $0xb8] sm:$0xff]
        %v354 = vld [vmem:[%s288 + $0xc0] sm:$0xff]
        %v355 = vld [vmem:[%s288 + $0xc8] sm:$0xff]
        %v356 = vld [vmem:[%s288 + $0xd0] sm:$0xff]
        %v357 = vld [vmem:[%s288 + $0xd8] sm:$0xff]
        %v358 = vld [vmem:[%s288 + $0xe0] sm:$0xff]
        %v359 = vld [vmem:[%s288 + $0xe8] sm:$0xff]
        %v360 = vld [vmem:[%s288 + $0xf0] sm:$0xff]
        %v361 = vld [vmem:[%s288 + $0xf8] sm:$0xff]
        %v362 = vld [vmem:[%s288 + $0x100] sm:$0xff]
        %v363 = vld [vmem:[%s288 + $0x108] sm:$0xff]
        %v364 = vld [vmem:[%s288 + $0x110] sm:$0xff]
        %v365 = vld [vmem:[%s288 + $0x118] sm:$0xff]
        %v366 = vld [vmem:[%s288 + $0x120] sm:$0xff]
        %v367 = vld [vmem:[%s288 + $0x128] sm:$0xff]
        %v368 = vld [vmem:[%s288 + $0x130] sm:$0xff]
        %v369 = vld [vmem:[%s288 + $0x138] sm:$0xff]
        %v370 = vld [vmem:[%s288 + $0x140] sm:$0xff]
        %v371 = vld [vmem:[%s288 + $0x148] sm:$0xff]
        %v372 = vld [vmem:[%s288 + $0x150] sm:$0xff]
        %v373 = vld [vmem:[%s288 + $0x158] sm:$0xff]
        %v374 = vld [vmem:[%s288 + $0x160] sm:$0xff]
        %v375 = vld [vmem:[%s288 + $0x168] sm:$0xff]
        %v376 = vld [vmem:[%s288 + $0x170] sm:$0xff]
        %v377 = vld [vmem:[%s288 + $0x178] sm:$0xff]
        %v378 = vld [vmem:[%s288 + $0x180] sm:$0xff]
        %v379 = vld [vmem:[%s288 + $0x188] sm:$0xff]
        %v380 = vld [vmem:[%s288 + $0x190] sm:$0xff]
        %v381 = vld [vmem:[%s288 + $0x198] sm:$0xff]
        %v382 = vld [vmem:[%s288 + $0x1a0] sm:$0xff]
        %v383 = vld [vmem:[%s288 + $0x1a8] sm:$0xff]
        %v384 = vld [vmem:[%s288 + $0x1b0] sm:$0xff]
        %v385 = vld [vmem:[%s288 + $0x1b8] sm:$0xff]
        %v386 = vld [vmem:[%s288 + $0x1c0] sm:$0xff]
        %v387 = vld [vmem:[%s288 + $0x1c8] sm:$0xff]
        %v388 = vld [vmem:[%s288 + $0x1d0] sm:$0xff]
        %v389 = vld [vmem:[%s288 + $0x1d8] sm:$0xff]
        %v390 = vld [vmem:[%s288 + $0x1e0] sm:$0xff]
        %v391 = vld [vmem:[%s288 + $0x1e8] sm:$0xff]
        %v392 = vld [vmem:[%s288 + $0x1f0] sm:$0xff]
        %v393 = vld [vmem:[%s288 + $0x1f8] sm:$0xff]
        %v394 = vpack.c.bf16 %v331, %v330
        %v395 = vpack.c.bf16 %v333, %v332
        %v396 = vpack.c.bf16 %v335, %v334
        %v397 = vpack.c.bf16 %v337, %v336
        %v398 = vpack.c.bf16 %v339, %v338
        %v399 = vpack.c.bf16 %v341, %v340
        %v400 = vpack.c.bf16 %v343, %v342
        %v401 = vpack.c.bf16 %v345, %v344
        %v402 = vpack.c.bf16 %v347, %v346
        %v403 = vpack.c.bf16 %v349, %v348
        %v404 = vpack.c.bf16 %v351, %v350
        %v405 = vpack.c.bf16 %v353, %v352
        %v406 = vpack.c.bf16 %v355, %v354
        %v407 = vpack.c.bf16 %v357, %v356
        %v408 = vpack.c.bf16 %v359, %v358
        %v409 = vpack.c.bf16 %v361, %v360
        %v410 = vpack.c.bf16 %v363, %v362
        %v411 = vpack.c.bf16 %v365, %v364
        %v412 = vpack.c.bf16 %v367, %v366
        %v413 = vpack.c.bf16 %v369, %v368
        %v414 = vpack.c.bf16 %v371, %v370
        %v415 = vpack.c.bf16 %v373, %v372
        %v416 = vpack.c.bf16 %v375, %v374
        %v417 = vpack.c.bf16 %v377, %v376
        %v418 = vpack.c.bf16 %v379, %v378
        %v419 = vpack.c.bf16 %v381, %v380
        %v420 = vpack.c.bf16 %v383, %v382
        %v421 = vpack.c.bf16 %v385, %v384
        %v422 = vpack.c.bf16 %v387, %v386
        %v423 = vpack.c.bf16 %v389, %v388
        %v424 = vpack.c.bf16 %v391, %v390
        %v425 = vpack.c.bf16 %v393, %v392
        %v426 = vld [vmem:[#allocation5] sm:$0xff]
        %v427 = vld [vmem:[#allocation5 + $0x8] sm:$0xf]
        %v428 = vld [vmem:[#allocation5 + $0xc] sm:$0xff]
        %v429 = vld [vmem:[#allocation5 + $0x14] sm:$0xf]
        %v430 = vld [vmem:[#allocation5 + $0x18] sm:$0xff]
        %v431 = vld [vmem:[#allocation5 + $0x20] sm:$0xf]
        %v432 = vld [vmem:[#allocation5 + $0x24] sm:$0xff]
        %v433 = vld [vmem:[#allocation5 + $0x2c] sm:$0xf]
        %v434 = vld [vmem:[#allocation5 + $0x30] sm:$0xff]
        %v435 = vld [vmem:[#allocation5 + $0x38] sm:$0xf]
        %v436 = vld [vmem:[#allocation5 + $0x3c] sm:$0xff]
        %v437 = vld [vmem:[#allocation5 + $0x44] sm:$0xf]
        %v438 = vld [vmem:[#allocation5 + $0x48] sm:$0xff]
        %v439 = vld [vmem:[#allocation5 + $0x50] sm:$0xf]
        %v440 = vld [vmem:[#allocation5 + $0x54] sm:$0xff]
        %v441 = vld [vmem:[#allocation5 + $0x5c] sm:$0xf]
        %v442 = vld [vmem:[#allocation5 + $0x60] sm:$0xff]
        %v443 = vld [vmem:[#allocation5 + $0x68] sm:$0xf]
        %v444 = vld [vmem:[#allocation5 + $0x6c] sm:$0xff]
        %v445 = vld [vmem:[#allocation5 + $0x74] sm:$0xf]
        %v446 = vld [vmem:[#allocation5 + $0x78] sm:$0xff]
        %v447 = vld [vmem:[#allocation5 + $0x80] sm:$0xf]
        %v448 = vld [vmem:[#allocation5 + $0x84] sm:$0xff]
        %v449 = vld [vmem:[#allocation5 + $0x8c] sm:$0xf]
        %v450 = vld [vmem:[#allocation5 + $0x90] sm:$0xff]
        %v451 = vld [vmem:[#allocation5 + $0x98] sm:$0xf]
        %v452 = vld [vmem:[#allocation5 + $0x9c] sm:$0xff]
        %v453 = vld [vmem:[#allocation5 + $0xa4] sm:$0xf]
        %v454 = vld [vmem:[#allocation5 + $0xa8] sm:$0xff]
        %v455 = vld [vmem:[#allocation5 + $0xb0] sm:$0xf]
        %v456 = vld [vmem:[#allocation5 + $0xb4] sm:$0xff]
        %v457 = vld [vmem:[#allocation5 + $0xbc] sm:$0xf]
        %v458 = vld [vmem:[%s2] sm:$0x7]
        %v460 = vlaneseq
        %v461 = vshrl.u32 %v460, 7
        %v462 = vsub.s32 0, %v461
        %v463 = vrot.slane %v458, %v462
        %v464 = vlaneseq
        %v465 = vshrl.u32 %v464, 7
        %v466 = vsub.s32 1, %v465
        %v467 = vrot.slane %v458, %v466
        %v468 = vlaneseq
        %v469 = vshrl.u32 %v468, 7
        %v470 = vsub.s32 2, %v469
        %v471 = vrot.slane %v458, %v470
        %v507 = vunpack.c.l.b16 %v426
        %v508 = vunpack.c.h.b16 %v426
        %v509 = vunpack.c.l.b16 %v427
        %v510 = vunpack.c.l.b16 %v428
        %v511 = vunpack.c.h.b16 %v428
        %v512 = vunpack.c.l.b16 %v429
        %v513 = vunpack.c.l.b16 %v430
        %v514 = vunpack.c.h.b16 %v430
        %v515 = vunpack.c.l.b16 %v431
        %v516 = vunpack.c.l.b16 %v432
        %v517 = vunpack.c.h.b16 %v432
        %v518 = vunpack.c.l.b16 %v433
        %v519 = vunpack.c.l.b16 %v434
        %v520 = vunpack.c.h.b16 %v434
        %v521 = vunpack.c.l.b16 %v435
        %v522 = vunpack.c.l.b16 %v436
        %v523 = vunpack.c.h.b16 %v436
        %v524 = vunpack.c.l.b16 %v437
        %v525 = vunpack.c.l.b16 %v438
        %v526 = vunpack.c.h.b16 %v438
        %v527 = vunpack.c.l.b16 %v439
        %v528 = vunpack.c.l.b16 %v440
        %v529 = vunpack.c.h.b16 %v440
        %v530 = vunpack.c.l.b16 %v441
        %v531 = vunpack.c.l.b16 %v442
        %v532 = vunpack.c.h.b16 %v442
        %v533 = vunpack.c.l.b16 %v443
        %v534 = vunpack.c.l.b16 %v444
        %v535 = vunpack.c.h.b16 %v444
        %v536 = vunpack.c.l.b16 %v445
        %v537 = vunpack.c.l.b16 %v446
        %v538 = vunpack.c.h.b16 %v446
        %v539 = vunpack.c.l.b16 %v447
        %v540 = vunpack.c.l.b16 %v448
        %v541 = vunpack.c.h.b16 %v448
        %v542 = vunpack.c.l.b16 %v449
        %v543 = vunpack.c.l.b16 %v450
        %v544 = vunpack.c.h.b16 %v450
        %v545 = vunpack.c.l.b16 %v451
        %v546 = vunpack.c.l.b16 %v452
        %v547 = vunpack.c.h.b16 %v452
        %v548 = vunpack.c.l.b16 %v453
        %v549 = vunpack.c.l.b16 %v454
        %v550 = vunpack.c.h.b16 %v454
        %v551 = vunpack.c.l.b16 %v455
        %v552 = vunpack.c.l.b16 %v456
        %v553 = vunpack.c.h.b16 %v456
        %v554 = vunpack.c.l.b16 %v457
        %v555 = vpack.c.b16 %v510, %v507
        %v556 = vpack.c.b16 %v511, %v508
        %v557 = vpack.c.b16 %v512, %v509
        %v558 = vpack.c.b16 %v516, %v513
        %v559 = vpack.c.b16 %v517, %v514
        %v560 = vpack.c.b16 %v518, %v515
        %v561 = vpack.c.b16 %v522, %v519
        %v562 = vpack.c.b16 %v523, %v520
        %v563 = vpack.c.b16 %v524, %v521
        %v564 = vpack.c.b16 %v528, %v525
        %v565 = vpack.c.b16 %v529, %v526
        %v566 = vpack.c.b16 %v530, %v527
        %v567 = vpack.c.b16 %v534, %v531
        %v568 = vpack.c.b16 %v535, %v532
        %v569 = vpack.c.b16 %v536, %v533
        %v570 = vpack.c.b16 %v540, %v537
        %v571 = vpack.c.b16 %v541, %v538
        %v572 = vpack.c.b16 %v542, %v539
        %v573 = vpack.c.b16 %v546, %v543
        %v574 = vpack.c.b16 %v547, %v544
        %v575 = vpack.c.b16 %v548, %v545
        %v576 = vpack.c.b16 %v552, %v549
        %v577 = vpack.c.b16 %v553, %v550
        %v578 = vpack.c.b16 %v554, %v551
        %603 = vmatprep.subr.bf16.mxu0 %v577
        %604 = vmatpush1.bf16.msra.mxu0 %v576
        %605 = vmatprep.subr.bf16.mxu0 %v574
        %606 = vmatpush1.bf16.msra.mxu0 %v573
        %607 = vmatprep.subr.bf16.mxu0 %v571
        %608 = vmatpush1.bf16.msra.mxu0 %v570
        %609 = vmatprep.subr.bf16.mxu0 %v568
        %610 = vmatpush1.bf16.msra.mxu0 %v567
        %611 = vmatprep.subr.bf16.mxu0 %v565
        %612 = vmatpush1.bf16.msra.mxu0 %v564
        %613 = vmatprep.subr.bf16.mxu0 %v562
        %614 = vmatpush1.bf16.msra.mxu0 %v561
        %615 = vmatprep.subr.bf16.mxu0 %v559
        %616 = vmatpush1.bf16.msra.mxu0 %v558
        %617 = vmatprep.subr.bf16.mxu0 %v556
        %618 = vmatpush1.bf16.msra.mxu0 %v555
        %619 = vmatprep.subr.bf16.mxu0 0
        %620 = vmatpush2.bf16.msra.mxu0 0
        %621 = vmatprep.subr.bf16.mxu0 0
        %622 = vmatpush2.bf16.msra.mxu0 0
        %623 = vmatprep.subr.bf16.mxu0 0
        %624 = vmatpush2.bf16.msra.mxu0 0
        %625 = vmatprep.subr.bf16.mxu0 0
        %626 = vmatpush2.bf16.msra.mxu0 0
        %627 = vmatprep.subr.bf16.mxu0 0
        %628 = vmatpush2.bf16.msra.mxu0 0
        %629 = vmatprep.subr.bf16.mxu0 0
        %630 = vmatpush2.bf16.msra.mxu0 0
        %631 = vmatprep.subr.bf16.mxu0 0
        %632 = vmatpush2.bf16.msra.mxu0 0
        %633 = vmatprep.subr.bf16.mxu0 0
        %634 = vmatpush2.bf16.msra.mxu0 0
        %635 = vmatprep.mubr.bf16.mxu0 0
        %636 = vmatmul.mubr.bf16.gmra.mxu0 %v394
        %v637 = vpop.f32.mrf.mxu0
        %v638 = vadd.f32 %v463, %v637
        %v639 = vpop.f32.mrf.mxu0
        %v640 = vadd.f32 %v467, %v639
        %v641 = vpop.f32.mrf.mxu0
        %v642 = vadd.f32 %v463, %v641
        %v643 = vpop.f32.mrf.mxu0
        %v644 = vadd.f32 %v467, %v643
        %645 = vmatprep.mubr.bf16.mxu0 0
        %646 = vmatmul.mubr.bf16.gmra.mxu0 %v395
        %v647 = vpop.f32.mrf.mxu0
        %v648 = vadd.f32 %v463, %v647
        %v649 = vpop.f32.mrf.mxu0
        %v650 = vadd.f32 %v467, %v649
        %v651 = vpop.f32.mrf.mxu0
        %v652 = vadd.f32 %v463, %v651
        %v653 = vpop.f32.mrf.mxu0
        %v654 = vadd.f32 %v467, %v653
        %655 = vmatprep.mubr.bf16.mxu0 0
        %656 = vmatmul.mubr.bf16.gmra.mxu0 %v396
        %v657 = vpop.f32.mrf.mxu0
        %v658 = vadd.f32 %v463, %v657
        %v659 = vpop.f32.mrf.mxu0
        %v660 = vadd.f32 %v467, %v659
        %v661 = vpop.f32.mrf.mxu0
        %v662 = vadd.f32 %v463, %v661
        %v663 = vpop.f32.mrf.mxu0
        %v664 = vadd.f32 %v467, %v663
        %665 = vmatprep.mubr.bf16.mxu0 0
        %666 = vmatmul.mubr.bf16.gmra.mxu0 %v397
        %v667 = vpop.f32.mrf.mxu0
        %v668 = vadd.f32 %v463, %v667
        %v669 = vpop.f32.mrf.mxu0
        %v670 = vadd.f32 %v467, %v669
        %v671 = vpop.f32.mrf.mxu0
        %v672 = vadd.f32 %v463, %v671
        %v673 = vpop.f32.mrf.mxu0
        %v674 = vadd.f32 %v467, %v673
        %675 = vmatprep.mubr.bf16.mxu0 0
        %676 = vmatmul.mubr.bf16.gmra.mxu0 %v398
        %v677 = vpop.f32.mrf.mxu0
        %v678 = vadd.f32 %v463, %v677
        %v679 = vpop.f32.mrf.mxu0
        %v680 = vadd.f32 %v467, %v679
        %v681 = vpop.f32.mrf.mxu0
        %v682 = vadd.f32 %v463, %v681
        %v683 = vpop.f32.mrf.mxu0
        %v684 = vadd.f32 %v467, %v683
        %685 = vmatprep.mubr.bf16.mxu0 0
        %686 = vmatmul.mubr.bf16.gmra.mxu0 %v399
        %v687 = vpop.f32.mrf.mxu0
        %v688 = vadd.f32 %v463, %v687
        %v689 = vpop.f32.mrf.mxu0
        %v690 = vadd.f32 %v467, %v689
        %v691 = vpop.f32.mrf.mxu0
        %v692 = vadd.f32 %v463, %v691
        %v693 = vpop.f32.mrf.mxu0
        %v694 = vadd.f32 %v467, %v693
        %695 = vmatprep.mubr.bf16.mxu0 0
        %696 = vmatmul.mubr.bf16.gmra.mxu0 %v400
        %v697 = vpop.f32.mrf.mxu0
        %v698 = vadd.f32 %v463, %v697
        %v699 = vpop.f32.mrf.mxu0
        %v700 = vadd.f32 %v467, %v699
        %v701 = vpop.f32.mrf.mxu0
        %v702 = vadd.f32 %v463, %v701
        %v703 = vpop.f32.mrf.mxu0
        %v704 = vadd.f32 %v467, %v703
        %705 = vmatprep.mubr.bf16.mxu0 0
        %706 = vmatmul.mubr.bf16.gmra.mxu0 %v401
        %v707 = vpop.f32.mrf.mxu0
        %v708 = vadd.f32 %v463, %v707
        %v709 = vpop.f32.mrf.mxu0
        %v710 = vadd.f32 %v467, %v709
        %v711 = vpop.f32.mrf.mxu0
        %v712 = vadd.f32 %v463, %v711
        %v713 = vpop.f32.mrf.mxu0
        %v714 = vadd.f32 %v467, %v713
        %715 = vmatprep.mubr.bf16.mxu0 0
        %716 = vmatmul.mubr.bf16.gmra.mxu0 %v402
        %v717 = vpop.f32.mrf.mxu0
        %v718 = vadd.f32 %v463, %v717
        %v719 = vpop.f32.mrf.mxu0
        %v720 = vadd.f32 %v467, %v719
        %v721 = vpop.f32.mrf.mxu0
        %v722 = vadd.f32 %v463, %v721
        %v723 = vpop.f32.mrf.mxu0
        %v724 = vadd.f32 %v467, %v723
        %725 = vmatprep.mubr.bf16.mxu0 0
        %726 = vmatmul.mubr.bf16.gmra.mxu0 %v403
        %v727 = vpop.f32.mrf.mxu0
        %v728 = vadd.f32 %v463, %v727
        %v729 = vpop.f32.mrf.mxu0
        %v730 = vadd.f32 %v467, %v729
        %v731 = vpop.f32.mrf.mxu0
        %v732 = vadd.f32 %v463, %v731
        %v733 = vpop.f32.mrf.mxu0
        %v734 = vadd.f32 %v467, %v733
        %735 = vmatprep.mubr.bf16.mxu0 0
        %736 = vmatmul.mubr.bf16.gmra.mxu0 %v404
        %v737 = vpop.f32.mrf.mxu0
        %v738 = vadd.f32 %v463, %v737
        %v739 = vpop.f32.mrf.mxu0
        %v740 = vadd.f32 %v467, %v739
        %v741 = vpop.f32.mrf.mxu0
        %v742 = vadd.f32 %v463, %v741
        %v743 = vpop.f32.mrf.mxu0
        %v744 = vadd.f32 %v467, %v743
        %745 = vmatprep.mubr.bf16.mxu0 0
        %746 = vmatmul.mubr.bf16.gmra.mxu0 %v405
        %v747 = vpop.f32.mrf.mxu0
        %v748 = vadd.f32 %v463, %v747
        %v749 = vpop.f32.mrf.mxu0
        %v750 = vadd.f32 %v467, %v749
        %v751 = vpop.f32.mrf.mxu0
        %v752 = vadd.f32 %v463, %v751
        %v753 = vpop.f32.mrf.mxu0
        %v754 = vadd.f32 %v467, %v753
        %755 = vmatprep.mubr.bf16.mxu0 0
        %756 = vmatmul.mubr.bf16.gmra.mxu0 %v406
        %v757 = vpop.f32.mrf.mxu0
        %v758 = vadd.f32 %v463, %v757
        %v759 = vpop.f32.mrf.mxu0
        %v760 = vadd.f32 %v467, %v759
        %v761 = vpop.f32.mrf.mxu0
        %v762 = vadd.f32 %v463, %v761
        %v763 = vpop.f32.mrf.mxu0
        %v764 = vadd.f32 %v467, %v763
        %765 = vmatprep.mubr.bf16.mxu0 0
        %766 = vmatmul.mubr.bf16.gmra.mxu0 %v407
        %v767 = vpop.f32.mrf.mxu0
        %v768 = vadd.f32 %v463, %v767
        %v769 = vpop.f32.mrf.mxu0
        %v770 = vadd.f32 %v467, %v769
        %v771 = vpop.f32.mrf.mxu0
        %v772 = vadd.f32 %v463, %v771
        %v773 = vpop.f32.mrf.mxu0
        %v774 = vadd.f32 %v467, %v773
        %775 = vmatprep.mubr.bf16.mxu0 0
        %776 = vmatmul.mubr.bf16.gmra.mxu0 %v408
        %v777 = vpop.f32.mrf.mxu0
        %v778 = vadd.f32 %v463, %v777
        %v779 = vpop.f32.mrf.mxu0
        %v780 = vadd.f32 %v467, %v779
        %v781 = vpop.f32.mrf.mxu0
        %v782 = vadd.f32 %v463, %v781
        %v783 = vpop.f32.mrf.mxu0
        %v784 = vadd.f32 %v467, %v783
        %785 = vmatprep.mubr.bf16.mxu0 0
        %786 = vmatmul.mubr.bf16.gmra.mxu0 %v409
        %v787 = vpop.f32.mrf.mxu0
        %v788 = vadd.f32 %v463, %v787
        %v789 = vpop.f32.mrf.mxu0
        %v790 = vadd.f32 %v467, %v789
        %v791 = vpop.f32.mrf.mxu0
        %v792 = vadd.f32 %v463, %v791
        %v793 = vpop.f32.mrf.mxu0
        %v794 = vadd.f32 %v467, %v793
        %795 = vmatprep.mubr.bf16.mxu0 0
        %796 = vmatmul.mubr.bf16.gmra.mxu0 %v410
        %v797 = vpop.f32.mrf.mxu0
        %v798 = vadd.f32 %v463, %v797
        %v799 = vpop.f32.mrf.mxu0
        %v800 = vadd.f32 %v467, %v799
        %v801 = vpop.f32.mrf.mxu0
        %v802 = vadd.f32 %v463, %v801
        %v803 = vpop.f32.mrf.mxu0
        %v804 = vadd.f32 %v467, %v803
        %805 = vmatprep.mubr.bf16.mxu0 0
        %806 = vmatmul.mubr.bf16.gmra.mxu0 %v411
        %v807 = vpop.f32.mrf.mxu0
        %v808 = vadd.f32 %v463, %v807
        %v809 = vpop.f32.mrf.mxu0
        %v810 = vadd.f32 %v467, %v809
        %v811 = vpop.f32.mrf.mxu0
        %v812 = vadd.f32 %v463, %v811
        %v813 = vpop.f32.mrf.mxu0
        %v814 = vadd.f32 %v467, %v813
        %815 = vmatprep.mubr.bf16.mxu0 0
        %816 = vmatmul.mubr.bf16.gmra.mxu0 %v412
        %v817 = vpop.f32.mrf.mxu0
        %v818 = vadd.f32 %v463, %v817
        %v819 = vpop.f32.mrf.mxu0
        %v820 = vadd.f32 %v467, %v819
        %v821 = vpop.f32.mrf.mxu0
        %v822 = vadd.f32 %v463, %v821
        %v823 = vpop.f32.mrf.mxu0
        %v824 = vadd.f32 %v467, %v823
        %825 = vmatprep.mubr.bf16.mxu0 0
        %826 = vmatmul.mubr.bf16.gmra.mxu0 %v413
        %v827 = vpop.f32.mrf.mxu0
        %v828 = vadd.f32 %v463, %v827
        %v829 = vpop.f32.mrf.mxu0
        %v830 = vadd.f32 %v467, %v829
        %v831 = vpop.f32.mrf.mxu0
        %v832 = vadd.f32 %v463, %v831
        %v833 = vpop.f32.mrf.mxu0
        %v834 = vadd.f32 %v467, %v833
        %835 = vmatprep.mubr.bf16.mxu0 0
        %836 = vmatmul.mubr.bf16.gmra.mxu0 %v414
        %v837 = vpop.f32.mrf.mxu0
        %v838 = vadd.f32 %v463, %v837
        %v839 = vpop.f32.mrf.mxu0
        %v840 = vadd.f32 %v467, %v839
        %v841 = vpop.f32.mrf.mxu0
        %v842 = vadd.f32 %v463, %v841
        %v843 = vpop.f32.mrf.mxu0
        %v844 = vadd.f32 %v467, %v843
        %845 = vmatprep.mubr.bf16.mxu0 0
        %846 = vmatmul.mubr.bf16.gmra.mxu0 %v415
        %v847 = vpop.f32.mrf.mxu0
        %v848 = vadd.f32 %v463, %v847
        %v849 = vpop.f32.mrf.mxu0
        %v850 = vadd.f32 %v467, %v849
        %v851 = vpop.f32.mrf.mxu0
        %v852 = vadd.f32 %v463, %v851
        %v853 = vpop.f32.mrf.mxu0
        %v854 = vadd.f32 %v467, %v853
        %855 = vmatprep.mubr.bf16.mxu0 0
        %856 = vmatmul.mubr.bf16.gmra.mxu0 %v416
        %v857 = vpop.f32.mrf.mxu0
        %v858 = vadd.f32 %v463, %v857
        %v859 = vpop.f32.mrf.mxu0
        %v860 = vadd.f32 %v467, %v859
        %v861 = vpop.f32.mrf.mxu0
        %v862 = vadd.f32 %v463, %v861
        %v863 = vpop.f32.mrf.mxu0
        %v864 = vadd.f32 %v467, %v863
        %865 = vmatprep.mubr.bf16.mxu0 0
        %866 = vmatmul.mubr.bf16.gmra.mxu0 %v417
        %v867 = vpop.f32.mrf.mxu0
        %v868 = vadd.f32 %v463, %v867
        %v869 = vpop.f32.mrf.mxu0
        %v870 = vadd.f32 %v467, %v869
        %v871 = vpop.f32.mrf.mxu0
        %v872 = vadd.f32 %v463, %v871
        %v873 = vpop.f32.mrf.mxu0
        %v874 = vadd.f32 %v467, %v873
        %875 = vmatprep.mubr.bf16.mxu0 0
        %876 = vmatmul.mubr.bf16.gmra.mxu0 %v418
        %v877 = vpop.f32.mrf.mxu0
        %v878 = vadd.f32 %v463, %v877
        %v879 = vpop.f32.mrf.mxu0
        %v880 = vadd.f32 %v467, %v879
        %v881 = vpop.f32.mrf.mxu0
        %v882 = vadd.f32 %v463, %v881
        %v883 = vpop.f32.mrf.mxu0
        %v884 = vadd.f32 %v467, %v883
        %885 = vmatprep.mubr.bf16.mxu0 0
        %886 = vmatmul.mubr.bf16.gmra.mxu0 %v419
        %v887 = vpop.f32.mrf.mxu0
        %v888 = vadd.f32 %v463, %v887
        %v889 = vpop.f32.mrf.mxu0
        %v890 = vadd.f32 %v467, %v889
        %v891 = vpop.f32.mrf.mxu0
        %v892 = vadd.f32 %v463, %v891
        %v893 = vpop.f32.mrf.mxu0
        %v894 = vadd.f32 %v467, %v893
        %895 = vmatprep.mubr.bf16.mxu0 0
        %896 = vmatmul.mubr.bf16.gmra.mxu0 %v420
        %v897 = vpop.f32.mrf.mxu0
        %v898 = vadd.f32 %v463, %v897
        %v899 = vpop.f32.mrf.mxu0
        %v900 = vadd.f32 %v467, %v899
        %v901 = vpop.f32.mrf.mxu0
        %v902 = vadd.f32 %v463, %v901
        %v903 = vpop.f32.mrf.mxu0
        %v904 = vadd.f32 %v467, %v903
        %905 = vmatprep.mubr.bf16.mxu0 0
        %906 = vmatmul.mubr.bf16.gmra.mxu0 %v421
        %v907 = vpop.f32.mrf.mxu0
        %v908 = vadd.f32 %v463, %v907
        %v909 = vpop.f32.mrf.mxu0
        %v910 = vadd.f32 %v467, %v909
        %v911 = vpop.f32.mrf.mxu0
        %v912 = vadd.f32 %v463, %v911
        %v913 = vpop.f32.mrf.mxu0
        %v914 = vadd.f32 %v467, %v913
        %915 = vmatprep.mubr.bf16.mxu0 0
        %916 = vmatmul.mubr.bf16.gmra.mxu0 %v422
        %v917 = vpop.f32.mrf.mxu0
        %v918 = vadd.f32 %v463, %v917
        %v919 = vpop.f32.mrf.mxu0
        %v920 = vadd.f32 %v467, %v919
        %v921 = vpop.f32.mrf.mxu0
        %v922 = vadd.f32 %v463, %v921
        %v923 = vpop.f32.mrf.mxu0
        %v924 = vadd.f32 %v467, %v923
        %925 = vmatprep.mubr.bf16.mxu0 0
        %926 = vmatmul.mubr.bf16.gmra.mxu0 %v423
        %v927 = vpop.f32.mrf.mxu0
        %v928 = vadd.f32 %v463, %v927
        %v929 = vpop.f32.mrf.mxu0
        %v930 = vadd.f32 %v467, %v929
        %v931 = vpop.f32.mrf.mxu0
        %v932 = vadd.f32 %v463, %v931
        %v933 = vpop.f32.mrf.mxu0
        %v934 = vadd.f32 %v467, %v933
        %935 = vmatprep.mubr.bf16.mxu0 0
        %936 = vmatmul.mubr.bf16.gmra.mxu0 %v424
        %v937 = vpop.f32.mrf.mxu0
        %v938 = vadd.f32 %v463, %v937
        %v939 = vpop.f32.mrf.mxu0
        %v940 = vadd.f32 %v467, %v939
        %v941 = vpop.f32.mrf.mxu0
        %v942 = vadd.f32 %v463, %v941
        %v943 = vpop.f32.mrf.mxu0
        %v944 = vadd.f32 %v467, %v943
        %945 = vmatprep.mubr.bf16.mxu0 0
        %946 = vmatmul.mubr.bf16.gmra.mxu0 %v425
        %v947 = vpop.f32.mrf.mxu0
        %v948 = vadd.f32 %v463, %v947
        %v949 = vpop.f32.mrf.mxu0
        %v950 = vadd.f32 %v467, %v949
        %v951 = vpop.f32.mrf.mxu0
        %v952 = vadd.f32 %v463, %v951
        %v953 = vpop.f32.mrf.mxu0
        %v954 = vadd.f32 %v467, %v953
        %955 = vdwg.mxu0
        %956 = vmatprep.subr.bf16.mxu0 0
        %957 = vmatpush1.bf16.msra.mxu0 %v578
        %958 = vmatprep.subr.bf16.mxu0 0
        %959 = vmatpush1.bf16.msra.mxu0 %v575
        %960 = vmatprep.subr.bf16.mxu0 0
        %961 = vmatpush1.bf16.msra.mxu0 %v572
        %962 = vmatprep.subr.bf16.mxu0 0
        %963 = vmatpush1.bf16.msra.mxu0 %v569
        %964 = vmatprep.subr.bf16.mxu0 0
        %965 = vmatpush1.bf16.msra.mxu0 %v566
        %966 = vmatprep.subr.bf16.mxu0 0
        %967 = vmatpush1.bf16.msra.mxu0 %v563
        %968 = vmatprep.subr.bf16.mxu0 0
        %969 = vmatpush1.bf16.msra.mxu0 %v560
        %970 = vmatprep.subr.bf16.mxu0 0
        %971 = vmatpush1.bf16.msra.mxu0 %v557
        %972 = vmatprep.subr.bf16.mxu0 0
        %973 = vmatpush2.bf16.msra.mxu0 0
        %974 = vmatprep.subr.bf16.mxu0 0
        %975 = vmatpush2.bf16.msra.mxu0 0
        %976 = vmatprep.subr.bf16.mxu0 0
        %977 = vmatpush2.bf16.msra.mxu0 0
        %978 = vmatprep.subr.bf16.mxu0 0
        %979 = vmatpush2.bf16.msra.mxu0 0
        %980 = vmatprep.subr.bf16.mxu0 0
        %981 = vmatpush2.bf16.msra.mxu0 0
        %982 = vmatprep.subr.bf16.mxu0 0
        %983 = vmatpush2.bf16.msra.mxu0 0
        %984 = vmatprep.subr.bf16.mxu0 0
        %985 = vmatpush2.bf16.msra.mxu0 0
        %986 = vmatprep.subr.bf16.mxu0 0
        %987 = vmatpush2.bf16.msra.mxu0 0
        %988 = vmatprep.mubr.bf16.mxu0 0
        %989 = vmatmul.mubr.bf16.gmra.mxu0 %v394
        %v990 = vpop.f32.mrf.mxu0
        %v991 = vadd.f32 %v471, %v990
        %v992 = vpop.f32.mrf.mxu0
        %v993 = vpop.f32.mrf.mxu0
        %v994 = vadd.f32 %v471, %v993
        %v995 = vpop.f32.mrf.mxu0
        %996 = vmatprep.mubr.bf16.mxu0 0
        %997 = vmatmul.mubr.bf16.gmra.mxu0 %v395
        %v998 = vpop.f32.mrf.mxu0
        %v999 = vadd.f32 %v471, %v998
        %v1000 = vpop.f32.mrf.mxu0
        %v1001 = vpop.f32.mrf.mxu0
        %v1002 = vadd.f32 %v471, %v1001
        %v1003 = vpop.f32.mrf.mxu0
        %1004 = vmatprep.mubr.bf16.mxu0 0
        %1005 = vmatmul.mubr.bf16.gmra.mxu0 %v396
        %v1006 = vpop.f32.mrf.mxu0
        %v1007 = vadd.f32 %v471, %v1006
        %v1008 = vpop.f32.mrf.mxu0
        %v1009 = vpop.f32.mrf.mxu0
        %v1010 = vadd.f32 %v471, %v1009
        %v1011 = vpop.f32.mrf.mxu0
        %1012 = vmatprep.mubr.bf16.mxu0 0
        %1013 = vmatmul.mubr.bf16.gmra.mxu0 %v397
        %v1014 = vpop.f32.mrf.mxu0
        %v1015 = vadd.f32 %v471, %v1014
        %v1016 = vpop.f32.mrf.mxu0
        %v1017 = vpop.f32.mrf.mxu0
        %v1018 = vadd.f32 %v471, %v1017
        %v1019 = vpop.f32.mrf.mxu0
        %1020 = vmatprep.mubr.bf16.mxu0 0
        %1021 = vmatmul.mubr.bf16.gmra.mxu0 %v398
        %v1022 = vpop.f32.mrf.mxu0
        %v1023 = vadd.f32 %v471, %v1022
        %v1024 = vpop.f32.mrf.mxu0
        %v1025 = vpop.f32.mrf.mxu0
        %v1026 = vadd.f32 %v471, %v1025
        %v1027 = vpop.f32.mrf.mxu0
        %1028 = vmatprep.mubr.bf16.mxu0 0
        %1029 = vmatmul.mubr.bf16.gmra.mxu0 %v399
        %v1030 = vpop.f32.mrf.mxu0
        %v1031 = vadd.f32 %v471, %v1030
        %v1032 = vpop.f32.mrf.mxu0
        %v1033 = vpop.f32.mrf.mxu0
        %v1034 = vadd.f32 %v471, %v1033
        %v1035 = vpop.f32.mrf.mxu0
        %1036 = vmatprep.mubr.bf16.mxu0 0
        %1037 = vmatmul.mubr.bf16.gmra.mxu0 %v400
        %v1038 = vpop.f32.mrf.mxu0
        %v1039 = vadd.f32 %v471, %v1038
        %v1040 = vpop.f32.mrf.mxu0
        %v1041 = vpop.f32.mrf.mxu0
        %v1042 = vadd.f32 %v471, %v1041
        %v1043 = vpop.f32.mrf.mxu0
        %1044 = vmatprep.mubr.bf16.mxu0 0
        %1045 = vmatmul.mubr.bf16.gmra.mxu0 %v401
        %v1046 = vpop.f32.mrf.mxu0
        %v1047 = vadd.f32 %v471, %v1046
        %v1048 = vpop.f32.mrf.mxu0
        %v1049 = vpop.f32.mrf.mxu0
        %v1050 = vadd.f32 %v471, %v1049
        %v1051 = vpop.f32.mrf.mxu0
        %1052 = vmatprep.mubr.bf16.mxu0 0
        %1053 = vmatmul.mubr.bf16.gmra.mxu0 %v402
        %v1054 = vpop.f32.mrf.mxu0
        %v1055 = vadd.f32 %v471, %v1054
        %v1056 = vpop.f32.mrf.mxu0
        %v1057 = vpop.f32.mrf.mxu0
        %v1058 = vadd.f32 %v471, %v1057
        %v1059 = vpop.f32.mrf.mxu0
        %1060 = vmatprep.mubr.bf16.mxu0 0
        %1061 = vmatmul.mubr.bf16.gmra.mxu0 %v403
        %v1062 = vpop.f32.mrf.mxu0
        %v1063 = vadd.f32 %v471, %v1062
        %v1064 = vpop.f32.mrf.mxu0
        %v1065 = vpop.f32.mrf.mxu0
        %v1066 = vadd.f32 %v471, %v1065
        %v1067 = vpop.f32.mrf.mxu0
        %1068 = vmatprep.mubr.bf16.mxu0 0
        %1069 = vmatmul.mubr.bf16.gmra.mxu0 %v404
        %v1070 = vpop.f32.mrf.mxu0
        %v1071 = vadd.f32 %v471, %v1070
        %v1072 = vpop.f32.mrf.mxu0
        %v1073 = vpop.f32.mrf.mxu0
        %v1074 = vadd.f32 %v471, %v1073
        %v1075 = vpop.f32.mrf.mxu0
        %1076 = vmatprep.mubr.bf16.mxu0 0
        %1077 = vmatmul.mubr.bf16.gmra.mxu0 %v405
        %v1078 = vpop.f32.mrf.mxu0
        %v1079 = vadd.f32 %v471, %v1078
        %v1080 = vpop.f32.mrf.mxu0
        %v1081 = vpop.f32.mrf.mxu0
        %v1082 = vadd.f32 %v471, %v1081
        %v1083 = vpop.f32.mrf.mxu0
        %1084 = vmatprep.mubr.bf16.mxu0 0
        %1085 = vmatmul.mubr.bf16.gmra.mxu0 %v406
        %v1086 = vpop.f32.mrf.mxu0
        %v1087 = vadd.f32 %v471, %v1086
        %v1088 = vpop.f32.mrf.mxu0
        %v1089 = vpop.f32.mrf.mxu0
        %v1090 = vadd.f32 %v471, %v1089
        %v1091 = vpop.f32.mrf.mxu0
        %1092 = vmatprep.mubr.bf16.mxu0 0
        %1093 = vmatmul.mubr.bf16.gmra.mxu0 %v407
        %v1094 = vpop.f32.mrf.mxu0
        %v1095 = vadd.f32 %v471, %v1094
        %v1096 = vpop.f32.mrf.mxu0
        %v1097 = vpop.f32.mrf.mxu0
        %v1098 = vadd.f32 %v471, %v1097
        %v1099 = vpop.f32.mrf.mxu0
        %1100 = vmatprep.mubr.bf16.mxu0 0
        %1101 = vmatmul.mubr.bf16.gmra.mxu0 %v408
        %v1102 = vpop.f32.mrf.mxu0
        %v1103 = vadd.f32 %v471, %v1102
        %v1104 = vpop.f32.mrf.mxu0
        %v1105 = vpop.f32.mrf.mxu0
        %v1106 = vadd.f32 %v471, %v1105
        %v1107 = vpop.f32.mrf.mxu0
        %1108 = vmatprep.mubr.bf16.mxu0 0
        %1109 = vmatmul.mubr.bf16.gmra.mxu0 %v409
        %v1110 = vpop.f32.mrf.mxu0
        %v1111 = vadd.f32 %v471, %v1110
        %v1112 = vpop.f32.mrf.mxu0
        %v1113 = vpop.f32.mrf.mxu0
        %v1114 = vadd.f32 %v471, %v1113
        %v1115 = vpop.f32.mrf.mxu0
        %1116 = vmatprep.mubr.bf16.mxu0 0
        %1117 = vmatmul.mubr.bf16.gmra.mxu0 %v410
        %v1118 = vpop.f32.mrf.mxu0
        %v1119 = vadd.f32 %v471, %v1118
        %v1120 = vpop.f32.mrf.mxu0
        %v1121 = vpop.f32.mrf.mxu0
        %v1122 = vadd.f32 %v471, %v1121
        %v1123 = vpop.f32.mrf.mxu0
        %1124 = vmatprep.mubr.bf16.mxu0 0
        %1125 = vmatmul.mubr.bf16.gmra.mxu0 %v411
        %v1126 = vpop.f32.mrf.mxu0
        %v1127 = vadd.f32 %v471, %v1126
        %v1128 = vpop.f32.mrf.mxu0
        %v1129 = vpop.f32.mrf.mxu0
        %v1130 = vadd.f32 %v471, %v1129
        %v1131 = vpop.f32.mrf.mxu0
        %1132 = vmatprep.mubr.bf16.mxu0 0
        %1133 = vmatmul.mubr.bf16.gmra.mxu0 %v412
        %v1134 = vpop.f32.mrf.mxu0
        %v1135 = vadd.f32 %v471, %v1134
        %v1136 = vpop.f32.mrf.mxu0
        %v1137 = vpop.f32.mrf.mxu0
        %v1138 = vadd.f32 %v471, %v1137
        %v1139 = vpop.f32.mrf.mxu0
        %1140 = vmatprep.mubr.bf16.mxu0 0
        %1141 = vmatmul.mubr.bf16.gmra.mxu0 %v413
        %v1142 = vpop.f32.mrf.mxu0
        %v1143 = vadd.f32 %v471, %v1142
        %v1144 = vpop.f32.mrf.mxu0
        %v1145 = vpop.f32.mrf.mxu0
        %v1146 = vadd.f32 %v471, %v1145
        %v1147 = vpop.f32.mrf.mxu0
        %1148 = vmatprep.mubr.bf16.mxu0 0
        %1149 = vmatmul.mubr.bf16.gmra.mxu0 %v414
        %v1150 = vpop.f32.mrf.mxu0
        %v1151 = vadd.f32 %v471, %v1150
        %v1152 = vpop.f32.mrf.mxu0
        %v1153 = vpop.f32.mrf.mxu0
        %v1154 = vadd.f32 %v471, %v1153
        %v1155 = vpop.f32.mrf.mxu0
        %1156 = vmatprep.mubr.bf16.mxu0 0
        %1157 = vmatmul.mubr.bf16.gmra.mxu0 %v415
        %v1158 = vpop.f32.mrf.mxu0
        %v1159 = vadd.f32 %v471, %v1158
        %v1160 = vpop.f32.mrf.mxu0
        %v1161 = vpop.f32.mrf.mxu0
        %v1162 = vadd.f32 %v471, %v1161
        %v1163 = vpop.f32.mrf.mxu0
        %1164 = vmatprep.mubr.bf16.mxu0 0
        %1165 = vmatmul.mubr.bf16.gmra.mxu0 %v416
        %v1166 = vpop.f32.mrf.mxu0
        %v1167 = vadd.f32 %v471, %v1166
        %v1168 = vpop.f32.mrf.mxu0
        %v1169 = vpop.f32.mrf.mxu0
        %v1170 = vadd.f32 %v471, %v1169
        %v1171 = vpop.f32.mrf.mxu0
        %1172 = vmatprep.mubr.bf16.mxu0 0
        %1173 = vmatmul.mubr.bf16.gmra.mxu0 %v417
        %v1174 = vpop.f32.mrf.mxu0
        %v1175 = vadd.f32 %v471, %v1174
        %v1176 = vpop.f32.mrf.mxu0
        %v1177 = vpop.f32.mrf.mxu0
        %v1178 = vadd.f32 %v471, %v1177
        %v1179 = vpop.f32.mrf.mxu0
        %1180 = vmatprep.mubr.bf16.mxu0 0
        %1181 = vmatmul.mubr.bf16.gmra.mxu0 %v418
        %v1182 = vpop.f32.mrf.mxu0
        %v1183 = vadd.f32 %v471, %v1182
        %v1184 = vpop.f32.mrf.mxu0
        %v1185 = vpop.f32.mrf.mxu0
        %v1186 = vadd.f32 %v471, %v1185
        %v1187 = vpop.f32.mrf.mxu0
        %1188 = vmatprep.mubr.bf16.mxu0 0
        %1189 = vmatmul.mubr.bf16.gmra.mxu0 %v419
        %v1190 = vpop.f32.mrf.mxu0
        %v1191 = vadd.f32 %v471, %v1190
        %v1192 = vpop.f32.mrf.mxu0
        %v1193 = vpop.f32.mrf.mxu0
        %v1194 = vadd.f32 %v471, %v1193
        %v1195 = vpop.f32.mrf.mxu0
        %1196 = vmatprep.mubr.bf16.mxu0 0
        %1197 = vmatmul.mubr.bf16.gmra.mxu0 %v420
        %v1198 = vpop.f32.mrf.mxu0
        %v1199 = vadd.f32 %v471, %v1198
        %v1200 = vpop.f32.mrf.mxu0
        %v1201 = vpop.f32.mrf.mxu0
        %v1202 = vadd.f32 %v471, %v1201
        %v1203 = vpop.f32.mrf.mxu0
        %1204 = vmatprep.mubr.bf16.mxu0 0
        %1205 = vmatmul.mubr.bf16.gmra.mxu0 %v421
        %v1206 = vpop.f32.mrf.mxu0
        %v1207 = vadd.f32 %v471, %v1206
        %v1208 = vpop.f32.mrf.mxu0
        %v1209 = vpop.f32.mrf.mxu0
        %v1210 = vadd.f32 %v471, %v1209
        %v1211 = vpop.f32.mrf.mxu0
        %1212 = vmatprep.mubr.bf16.mxu0 0
        %1213 = vmatmul.mubr.bf16.gmra.mxu0 %v422
        %v1214 = vpop.f32.mrf.mxu0
        %v1215 = vadd.f32 %v471, %v1214
        %v1216 = vpop.f32.mrf.mxu0
        %v1217 = vpop.f32.mrf.mxu0
        %v1218 = vadd.f32 %v471, %v1217
        %v1219 = vpop.f32.mrf.mxu0
        %1220 = vmatprep.mubr.bf16.mxu0 0
        %1221 = vmatmul.mubr.bf16.gmra.mxu0 %v423
        %v1222 = vpop.f32.mrf.mxu0
        %v1223 = vadd.f32 %v471, %v1222
        %v1224 = vpop.f32.mrf.mxu0
        %v1225 = vpop.f32.mrf.mxu0
        %v1226 = vadd.f32 %v471, %v1225
        %v1227 = vpop.f32.mrf.mxu0
        %1228 = vmatprep.mubr.bf16.mxu0 0
        %1229 = vmatmul.mubr.bf16.gmra.mxu0 %v424
        %v1230 = vpop.f32.mrf.mxu0
        %v1231 = vadd.f32 %v471, %v1230
        %v1232 = vpop.f32.mrf.mxu0
        %v1233 = vpop.f32.mrf.mxu0
        %v1234 = vadd.f32 %v471, %v1233
        %v1235 = vpop.f32.mrf.mxu0
        %1236 = vmatprep.mubr.bf16.mxu0 0
        %1237 = vmatmul.mubr.bf16.gmra.mxu0 %v425
        %v1238 = vpop.f32.mrf.mxu0
        %v1239 = vadd.f32 %v471, %v1238
        %v1240 = vpop.f32.mrf.mxu0
        %v1241 = vpop.f32.mrf.mxu0
        %v1242 = vadd.f32 %v471, %v1241
        %v1243 = vpop.f32.mrf.mxu0
        %1244 = vdwg.mxu0
        %v1245 = vpack.c.bf16 %v642, %v638
        %v1246 = vpack.c.bf16 %v652, %v648
        %v1247 = vpack.c.bf16 %v662, %v658
        %v1248 = vpack.c.bf16 %v672, %v668
        %v1249 = vpack.c.bf16 %v682, %v678
        %v1250 = vpack.c.bf16 %v692, %v688
        %v1251 = vpack.c.bf16 %v702, %v698
        %v1252 = vpack.c.bf16 %v712, %v708
        %v1253 = vpack.c.bf16 %v722, %v718
        %v1254 = vpack.c.bf16 %v732, %v728
        %v1255 = vpack.c.bf16 %v742, %v738
        %v1256 = vpack.c.bf16 %v752, %v748
        %v1257 = vpack.c.bf16 %v762, %v758
        %v1258 = vpack.c.bf16 %v772, %v768
        %v1259 = vpack.c.bf16 %v782, %v778
        %v1260 = vpack.c.bf16 %v792, %v788
        %v1261 = vpack.c.bf16 %v802, %v798
        %v1262 = vpack.c.bf16 %v812, %v808
        %v1263 = vpack.c.bf16 %v822, %v818
        %v1264 = vpack.c.bf16 %v832, %v828
        %v1265 = vpack.c.bf16 %v842, %v838
        %v1266 = vpack.c.bf16 %v852, %v848
        %v1267 = vpack.c.bf16 %v862, %v858
        %v1268 = vpack.c.bf16 %v872, %v868
        %v1269 = vpack.c.bf16 %v882, %v878
        %v1270 = vpack.c.bf16 %v892, %v888
        %v1271 = vpack.c.bf16 %v902, %v898
        %v1272 = vpack.c.bf16 %v912, %v908
        %v1273 = vpack.c.bf16 %v922, %v918
        %v1274 = vpack.c.bf16 %v932, %v928
        %v1275 = vpack.c.bf16 %v942, %v938
        %v1276 = vpack.c.bf16 %v952, %v948
        %v1277 = vpack.c.bf16 %v644, %v640
        %v1278 = vpack.c.bf16 %v654, %v650
        %v1279 = vpack.c.bf16 %v664, %v660
        %v1280 = vpack.c.bf16 %v674, %v670
        %v1281 = vpack.c.bf16 %v684, %v680
        %v1282 = vpack.c.bf16 %v694, %v690
        %v1283 = vpack.c.bf16 %v704, %v700
        %v1284 = vpack.c.bf16 %v714, %v710
        %v1285 = vpack.c.bf16 %v724, %v720
        %v1286 = vpack.c.bf16 %v734, %v730
        %v1287 = vpack.c.bf16 %v744, %v740
        %v1288 = vpack.c.bf16 %v754, %v750
        %v1289 = vpack.c.bf16 %v764, %v760
        %v1290 = vpack.c.bf16 %v774, %v770
        %v1291 = vpack.c.bf16 %v784, %v780
        %v1292 = vpack.c.bf16 %v794, %v790
        %v1293 = vpack.c.bf16 %v804, %v800
        %v1294 = vpack.c.bf16 %v814, %v810
        %v1295 = vpack.c.bf16 %v824, %v820
        %v1296 = vpack.c.bf16 %v834, %v830
        %v1297 = vpack.c.bf16 %v844, %v840
        %v1298 = vpack.c.bf16 %v854, %v850
        %v1299 = vpack.c.bf16 %v864, %v860
        %v1300 = vpack.c.bf16 %v874, %v870
        %v1301 = vpack.c.bf16 %v884, %v880
        %v1302 = vpack.c.bf16 %v894, %v890
        %v1303 = vpack.c.bf16 %v904, %v900
        %v1304 = vpack.c.bf16 %v914, %v910
        %v1305 = vpack.c.bf16 %v924, %v920
        %v1306 = vpack.c.bf16 %v934, %v930
        %v1307 = vpack.c.bf16 %v944, %v940
        %v1308 = vpack.c.bf16 %v954, %v950
        %1309 = vmatprep.subr.bf16.mxu0 0
        %1310 = vmatpush1.bf16.xpose.msra.mxu0 %v1284
        %1311 = vmatprep.subr.bf16.mxu0 0
        %1312 = vmatpush1.bf16.xpose.msra.mxu0 %v1283
        %1313 = vmatprep.subr.bf16.mxu0 0
        %1314 = vmatpush1.bf16.xpose.msra.mxu0 %v1282
        %1315 = vmatprep.subr.bf16.mxu0 0
        %1316 = vmatpush1.bf16.xpose.msra.mxu0 %v1281
        %1317 = vmatprep.subr.bf16.mxu0 0
        %1318 = vmatpush1.bf16.xpose.msra.mxu0 %v1280
        %1319 = vmatprep.subr.bf16.mxu0 0
        %1320 = vmatpush1.bf16.xpose.msra.mxu0 %v1279
        %1321 = vmatprep.subr.bf16.mxu0 0
        %1322 = vmatpush1.bf16.xpose.msra.mxu0 %v1278
        %1323 = vmatprep.subr.bf16.mxu0 0
        %1324 = vmatpush1.bf16.xpose.msra.mxu0 %v1277
        %1325 = vmatprep.subr.bf16.mxu0 0
        %1326 = vmatpush2.bf16.xpose.msra.mxu0 0
        %1327 = vmatprep.subr.bf16.mxu0 0
        %1328 = vmatpush2.bf16.xpose.msra.mxu0 0
        %1329 = vmatprep.subr.bf16.mxu0 0
        %1330 = vmatpush2.bf16.xpose.msra.mxu0 0
        %1331 = vmatprep.subr.bf16.mxu0 0
        %1332 = vmatpush2.bf16.xpose.msra.mxu0 0
        %1333 = vmatprep.subr.bf16.mxu0 0
        %1334 = vmatpush2.bf16.xpose.msra.mxu0 0
        %1335 = vmatprep.subr.bf16.mxu0 0
        %1336 = vmatpush2.bf16.xpose.msra.mxu0 0
        %1337 = vmatprep.subr.bf16.mxu0 0
        %1338 = vmatpush2.bf16.xpose.msra.mxu0 0
        %1339 = vmatprep.subr.bf16.mxu0 0
        %1340 = vmatpush2.bf16.xpose.msra.mxu0 0
        %1341 = vmatprep.mubr.bf16.mxu0 0
        %1342 = vmatmul.mubr.bf16.gmra.mxu0 %v1245
        %v1343 = vpop.f32.mrf.mxu0
        %v1344 = vadd.f32 0.0, %v1343
        %v1345 = vpop.f32.mrf.mxu0
        %v1346 = vpop.f32.mrf.mxu0
        %v1347 = vadd.f32 0.0, %v1346
        %v1348 = vpop.f32.mrf.mxu0
        %1349 = vmatprep.mubr.bf16.mxu0 0
        %1350 = vmatmul.mubr.bf16.gmra.mxu0 %v1246
        %v1351 = vpop.f32.mrf.mxu0
        %v1352 = vadd.f32 0.0, %v1351
        %v1353 = vpop.f32.mrf.mxu0
        %v1354 = vpop.f32.mrf.mxu0
        %v1355 = vadd.f32 0.0, %v1354
        %v1356 = vpop.f32.mrf.mxu0
        %1357 = vmatprep.mubr.bf16.mxu0 0
        %1358 = vmatmul.mubr.bf16.gmra.mxu0 %v1247
        %v1359 = vpop.f32.mrf.mxu0
        %v1360 = vadd.f32 0.0, %v1359
        %v1361 = vpop.f32.mrf.mxu0
        %v1362 = vpop.f32.mrf.mxu0
        %v1363 = vadd.f32 0.0, %v1362
        %v1364 = vpop.f32.mrf.mxu0
        %1365 = vmatprep.mubr.bf16.mxu0 0
        %1366 = vmatmul.mubr.bf16.gmra.mxu0 %v1248
        %v1367 = vpop.f32.mrf.mxu0
        %v1368 = vadd.f32 0.0, %v1367
        %v1369 = vpop.f32.mrf.mxu0
        %v1370 = vpop.f32.mrf.mxu0
        %v1371 = vadd.f32 0.0, %v1370
        %v1372 = vpop.f32.mrf.mxu0
        %1373 = vmatprep.mubr.bf16.mxu0 0
        %1374 = vmatmul.mubr.bf16.gmra.mxu0 %v1249
        %v1375 = vpop.f32.mrf.mxu0
        %v1376 = vadd.f32 0.0, %v1375
        %v1377 = vpop.f32.mrf.mxu0
        %v1378 = vpop.f32.mrf.mxu0
        %v1379 = vadd.f32 0.0, %v1378
        %v1380 = vpop.f32.mrf.mxu0
        %1381 = vmatprep.mubr.bf16.mxu0 0
        %1382 = vmatmul.mubr.bf16.gmra.mxu0 %v1250
        %v1383 = vpop.f32.mrf.mxu0
        %v1384 = vadd.f32 0.0, %v1383
        %v1385 = vpop.f32.mrf.mxu0
        %v1386 = vpop.f32.mrf.mxu0
        %v1387 = vadd.f32 0.0, %v1386
        %v1388 = vpop.f32.mrf.mxu0
        %1389 = vmatprep.mubr.bf16.mxu0 0
        %1390 = vmatmul.mubr.bf16.gmra.mxu0 %v1251
        %v1391 = vpop.f32.mrf.mxu0
        %v1392 = vadd.f32 0.0, %v1391
        %v1393 = vpop.f32.mrf.mxu0
        %v1394 = vpop.f32.mrf.mxu0
        %v1395 = vadd.f32 0.0, %v1394
        %v1396 = vpop.f32.mrf.mxu0
        %1397 = vmatprep.mubr.bf16.mxu0 0
        %1398 = vmatmul.mubr.bf16.gmra.mxu0 %v1252
        %v1399 = vpop.f32.mrf.mxu0
        %v1400 = vadd.f32 0.0, %v1399
        %v1401 = vpop.f32.mrf.mxu0
        %v1402 = vpop.f32.mrf.mxu0
        %v1403 = vadd.f32 0.0, %v1402
        %v1404 = vpop.f32.mrf.mxu0
        %1405 = vdwg.mxu0
        %1406 = vmatprep.subr.bf16.mxu0 0
        %1407 = vmatpush1.bf16.xpose.msra.mxu0 %v1292
        %1408 = vmatprep.subr.bf16.mxu0 0
        %1409 = vmatpush1.bf16.xpose.msra.mxu0 %v1291
        %1410 = vmatprep.subr.bf16.mxu0 0
        %1411 = vmatpush1.bf16.xpose.msra.mxu0 %v1290
        %1412 = vmatprep.subr.bf16.mxu0 0
        %1413 = vmatpush1.bf16.xpose.msra.mxu0 %v1289
        %1414 = vmatprep.subr.bf16.mxu0 0
        %1415 = vmatpush1.bf16.xpose.msra.mxu0 %v1288
        %1416 = vmatprep.subr.bf16.mxu0 0
        %1417 = vmatpush1.bf16.xpose.msra.mxu0 %v1287
        %1418 = vmatprep.subr.bf16.mxu0 0
        %1419 = vmatpush1.bf16.xpose.msra.mxu0 %v1286
        %1420 = vmatprep.subr.bf16.mxu0 0
        %1421 = vmatpush1.bf16.xpose.msra.mxu0 %v1285
        %1422 = vmatprep.subr.bf16.mxu0 0
        %1423 = vmatpush2.bf16.xpose.msra.mxu0 0
        %1424 = vmatprep.subr.bf16.mxu0 0
        %1425 = vmatpush2.bf16.xpose.msra.mxu0 0
        %1426 = vmatprep.subr.bf16.mxu0 0
        %1427 = vmatpush2.bf16.xpose.msra.mxu0 0
        %1428 = vmatprep.subr.bf16.mxu0 0
        %1429 = vmatpush2.bf16.xpose.msra.mxu0 0
        %1430 = vmatprep.subr.bf16.mxu0 0
        %1431 = vmatpush2.bf16.xpose.msra.mxu0 0
        %1432 = vmatprep.subr.bf16.mxu0 0
        %1433 = vmatpush2.bf16.xpose.msra.mxu0 0
        %1434 = vmatprep.subr.bf16.mxu0 0
        %1435 = vmatpush2.bf16.xpose.msra.mxu0 0
        %1436 = vmatprep.subr.bf16.mxu0 0
        %1437 = vmatpush2.bf16.xpose.msra.mxu0 0
        %1438 = vmatprep.mubr.bf16.mxu0 0
        %1439 = vmatmul.mubr.bf16.gmra.mxu0 %v1253
        %v1440 = vpop.f32.mrf.mxu0
        %v1441 = vadd.f32 0.0, %v1440
        %v1442 = vpop.f32.mrf.mxu0
        %v1443 = vpop.f32.mrf.mxu0
        %v1444 = vadd.f32 0.0, %v1443
        %v1445 = vpop.f32.mrf.mxu0
        %1446 = vmatprep.mubr.bf16.mxu0 0
        %1447 = vmatmul.mubr.bf16.gmra.mxu0 %v1254
        %v1448 = vpop.f32.mrf.mxu0
        %v1449 = vadd.f32 0.0, %v1448
        %v1450 = vpop.f32.mrf.mxu0
        %v1451 = vpop.f32.mrf.mxu0
        %v1452 = vadd.f32 0.0, %v1451
        %v1453 = vpop.f32.mrf.mxu0
        %1454 = vmatprep.mubr.bf16.mxu0 0
        %1455 = vmatmul.mubr.bf16.gmra.mxu0 %v1255
        %v1456 = vpop.f32.mrf.mxu0
        %v1457 = vadd.f32 0.0, %v1456
        %v1458 = vpop.f32.mrf.mxu0
        %v1459 = vpop.f32.mrf.mxu0
        %v1460 = vadd.f32 0.0, %v1459
        %v1461 = vpop.f32.mrf.mxu0
        %1462 = vmatprep.mubr.bf16.mxu0 0
        %1463 = vmatmul.mubr.bf16.gmra.mxu0 %v1256
        %v1464 = vpop.f32.mrf.mxu0
        %v1465 = vadd.f32 0.0, %v1464
        %v1466 = vpop.f32.mrf.mxu0
        %v1467 = vpop.f32.mrf.mxu0
        %v1468 = vadd.f32 0.0, %v1467
        %v1469 = vpop.f32.mrf.mxu0
        %1470 = vmatprep.mubr.bf16.mxu0 0
        %1471 = vmatmul.mubr.bf16.gmra.mxu0 %v1257
        %v1472 = vpop.f32.mrf.mxu0
        %v1473 = vadd.f32 0.0, %v1472
        %v1474 = vpop.f32.mrf.mxu0
        %v1475 = vpop.f32.mrf.mxu0
        %v1476 = vadd.f32 0.0, %v1475
        %v1477 = vpop.f32.mrf.mxu0
        %1478 = vmatprep.mubr.bf16.mxu0 0
        %1479 = vmatmul.mubr.bf16.gmra.mxu0 %v1258
        %v1480 = vpop.f32.mrf.mxu0
        %v1481 = vadd.f32 0.0, %v1480
        %v1482 = vpop.f32.mrf.mxu0
        %v1483 = vpop.f32.mrf.mxu0
        %v1484 = vadd.f32 0.0, %v1483
        %v1485 = vpop.f32.mrf.mxu0
        %1486 = vmatprep.mubr.bf16.mxu0 0
        %1487 = vmatmul.mubr.bf16.gmra.mxu0 %v1259
        %v1488 = vpop.f32.mrf.mxu0
        %v1489 = vadd.f32 0.0, %v1488
        %v1490 = vpop.f32.mrf.mxu0
        %v1491 = vpop.f32.mrf.mxu0
        %v1492 = vadd.f32 0.0, %v1491
        %v1493 = vpop.f32.mrf.mxu0
        %1494 = vmatprep.mubr.bf16.mxu0 0
        %1495 = vmatmul.mubr.bf16.gmra.mxu0 %v1260
        %v1496 = vpop.f32.mrf.mxu0
        %v1497 = vadd.f32 0.0, %v1496
        %v1498 = vpop.f32.mrf.mxu0
        %v1499 = vpop.f32.mrf.mxu0
        %v1500 = vadd.f32 0.0, %v1499
        %v1501 = vpop.f32.mrf.mxu0
        %1502 = vdwg.mxu0
        %1503 = vmatprep.subr.bf16.mxu0 0
        %1504 = vmatpush1.bf16.xpose.msra.mxu0 %v1300
        %1505 = vmatprep.subr.bf16.mxu0 0
        %1506 = vmatpush1.bf16.xpose.msra.mxu0 %v1299
        %1507 = vmatprep.subr.bf16.mxu0 0
        %1508 = vmatpush1.bf16.xpose.msra.mxu0 %v1298
        %1509 = vmatprep.subr.bf16.mxu0 0
        %1510 = vmatpush1.bf16.xpose.msra.mxu0 %v1297
        %1511 = vmatprep.subr.bf16.mxu0 0
        %1512 = vmatpush1.bf16.xpose.msra.mxu0 %v1296
        %1513 = vmatprep.subr.bf16.mxu0 0
        %1514 = vmatpush1.bf16.xpose.msra.mxu0 %v1295
        %1515 = vmatprep.subr.bf16.mxu0 0
        %1516 = vmatpush1.bf16.xpose.msra.mxu0 %v1294
        %1517 = vmatprep.subr.bf16.mxu0 0
        %1518 = vmatpush1.bf16.xpose.msra.mxu0 %v1293
        %1519 = vmatprep.subr.bf16.mxu0 0
        %1520 = vmatpush2.bf16.xpose.msra.mxu0 0
        %1521 = vmatprep.subr.bf16.mxu0 0
        %1522 = vmatpush2.bf16.xpose.msra.mxu0 0
        %1523 = vmatprep.subr.bf16.mxu0 0
        %1524 = vmatpush2.bf16.xpose.msra.mxu0 0
        %1525 = vmatprep.subr.bf16.mxu0 0
        %1526 = vmatpush2.bf16.xpose.msra.mxu0 0
        %1527 = vmatprep.subr.bf16.mxu0 0
        %1528 = vmatpush2.bf16.xpose.msra.mxu0 0
        %1529 = vmatprep.subr.bf16.mxu0 0
        %1530 = vmatpush2.bf16.xpose.msra.mxu0 0
        %1531 = vmatprep.subr.bf16.mxu0 0
        %1532 = vmatpush2.bf16.xpose.msra.mxu0 0
        %1533 = vmatprep.subr.bf16.mxu0 0
        %1534 = vmatpush2.bf16.xpose.msra.mxu0 0
        %1535 = vmatprep.mubr.bf16.mxu0 0
        %1536 = vmatmul.mubr.bf16.gmra.mxu0 %v1261
        %v1537 = vpop.f32.mrf.mxu0
        %v1538 = vadd.f32 0.0, %v1537
        %v1539 = vpop.f32.mrf.mxu0
        %v1540 = vpop.f32.mrf.mxu0
        %v1541 = vadd.f32 0.0, %v1540
        %v1542 = vpop.f32.mrf.mxu0
        %1543 = vmatprep.mubr.bf16.mxu0 0
        %1544 = vmatmul.mubr.bf16.gmra.mxu0 %v1262
        %v1545 = vpop.f32.mrf.mxu0
        %v1546 = vadd.f32 0.0, %v1545
        %v1547 = vpop.f32.mrf.mxu0
        %v1548 = vpop.f32.mrf.mxu0
        %v1549 = vadd.f32 0.0, %v1548
        %v1550 = vpop.f32.mrf.mxu0
        %1551 = vmatprep.mubr.bf16.mxu0 0
        %1552 = vmatmul.mubr.bf16.gmra.mxu0 %v1263
        %v1553 = vpop.f32.mrf.mxu0
        %v1554 = vadd.f32 0.0, %v1553
        %v1555 = vpop.f32.mrf.mxu0
        %v1556 = vpop.f32.mrf.mxu0
        %v1557 = vadd.f32 0.0, %v1556
        %v1558 = vpop.f32.mrf.mxu0
        %1559 = vmatprep.mubr.bf16.mxu0 0
        %1560 = vmatmul.mubr.bf16.gmra.mxu0 %v1264
        %v1561 = vpop.f32.mrf.mxu0
        %v1562 = vadd.f32 0.0, %v1561
        %v1563 = vpop.f32.mrf.mxu0
        %v1564 = vpop.f32.mrf.mxu0
        %v1565 = vadd.f32 0.0, %v1564
        %v1566 = vpop.f32.mrf.mxu0
        %1567 = vmatprep.mubr.bf16.mxu0 0
        %1568 = vmatmul.mubr.bf16.gmra.mxu0 %v1265
        %v1569 = vpop.f32.mrf.mxu0
        %v1570 = vadd.f32 0.0, %v1569
        %v1571 = vpop.f32.mrf.mxu0
        %v1572 = vpop.f32.mrf.mxu0
        %v1573 = vadd.f32 0.0, %v1572
        %v1574 = vpop.f32.mrf.mxu0
        %1575 = vmatprep.mubr.bf16.mxu0 0
        %1576 = vmatmul.mubr.bf16.gmra.mxu0 %v1266
        %v1577 = vpop.f32.mrf.mxu0
        %v1578 = vadd.f32 0.0, %v1577
        %v1579 = vpop.f32.mrf.mxu0
        %v1580 = vpop.f32.mrf.mxu0
        %v1581 = vadd.f32 0.0, %v1580
        %v1582 = vpop.f32.mrf.mxu0
        %1583 = vmatprep.mubr.bf16.mxu0 0
        %1584 = vmatmul.mubr.bf16.gmra.mxu0 %v1267
        %v1585 = vpop.f32.mrf.mxu0
        %v1586 = vadd.f32 0.0, %v1585
        %v1587 = vpop.f32.mrf.mxu0
        %v1588 = vpop.f32.mrf.mxu0
        %v1589 = vadd.f32 0.0, %v1588
        %v1590 = vpop.f32.mrf.mxu0
        %1591 = vmatprep.mubr.bf16.mxu0 0
        %1592 = vmatmul.mubr.bf16.gmra.mxu0 %v1268
        %v1593 = vpop.f32.mrf.mxu0
        %v1594 = vadd.f32 0.0, %v1593
        %v1595 = vpop.f32.mrf.mxu0
        %v1596 = vpop.f32.mrf.mxu0
        %v1597 = vadd.f32 0.0, %v1596
        %v1598 = vpop.f32.mrf.mxu0
        %1599 = vdwg.mxu0
        %1600 = vmatprep.subr.bf16.mxu0 0
        %1601 = vmatpush1.bf16.xpose.msra.mxu0 %v1308
        %1602 = vmatprep.subr.bf16.mxu0 0
        %1603 = vmatpush1.bf16.xpose.msra.mxu0 %v1307
        %1604 = vmatprep.subr.bf16.mxu0 0
        %1605 = vmatpush1.bf16.xpose.msra.mxu0 %v1306
        %1606 = vmatprep.subr.bf16.mxu0 0
        %1607 = vmatpush1.bf16.xpose.msra.mxu0 %v1305
        %1608 = vmatprep.subr.bf16.mxu0 0
        %1609 = vmatpush1.bf16.xpose.msra.mxu0 %v1304
        %1610 = vmatprep.subr.bf16.mxu0 0
        %1611 = vmatpush1.bf16.xpose.msra.mxu0 %v1303
        %1612 = vmatprep.subr.bf16.mxu0 0
        %1613 = vmatpush1.bf16.xpose.msra.mxu0 %v1302
        %1614 = vmatprep.subr.bf16.mxu0 0
        %1615 = vmatpush1.bf16.xpose.msra.mxu0 %v1301
        %1616 = vmatprep.subr.bf16.mxu0 0
        %1617 = vmatpush2.bf16.xpose.msra.mxu0 0
        %1618 = vmatprep.subr.bf16.mxu0 0
        %1619 = vmatpush2.bf16.xpose.msra.mxu0 0
        %1620 = vmatprep.subr.bf16.mxu0 0
        %1621 = vmatpush2.bf16.xpose.msra.mxu0 0
        %1622 = vmatprep.subr.bf16.mxu0 0
        %1623 = vmatpush2.bf16.xpose.msra.mxu0 0
        %1624 = vmatprep.subr.bf16.mxu0 0
        %1625 = vmatpush2.bf16.xpose.msra.mxu0 0
        %1626 = vmatprep.subr.bf16.mxu0 0
        %1627 = vmatpush2.bf16.xpose.msra.mxu0 0
        %1628 = vmatprep.subr.bf16.mxu0 0
        %1629 = vmatpush2.bf16.xpose.msra.mxu0 0
        %1630 = vmatprep.subr.bf16.mxu0 0
        %1631 = vmatpush2.bf16.xpose.msra.mxu0 0
        %1632 = vmatprep.mubr.bf16.mxu0 0
        %1633 = vmatmul.mubr.bf16.gmra.mxu0 %v1269
        %v1634 = vpop.f32.mrf.mxu0
        %v1635 = vadd.f32 0.0, %v1634
        %v1636 = vpop.f32.mrf.mxu0
        %v1637 = vpop.f32.mrf.mxu0
        %v1638 = vadd.f32 0.0, %v1637
        %v1639 = vpop.f32.mrf.mxu0
        %1640 = vmatprep.mubr.bf16.mxu0 0
        %1641 = vmatmul.mubr.bf16.gmra.mxu0 %v1270
        %v1642 = vpop.f32.mrf.mxu0
        %v1643 = vadd.f32 0.0, %v1642
        %v1644 = vpop.f32.mrf.mxu0
        %v1645 = vpop.f32.mrf.mxu0
        %v1646 = vadd.f32 0.0, %v1645
        %v1647 = vpop.f32.mrf.mxu0
        %1648 = vmatprep.mubr.bf16.mxu0 0
        %1649 = vmatmul.mubr.bf16.gmra.mxu0 %v1271
        %v1650 = vpop.f32.mrf.mxu0
        %v1651 = vadd.f32 0.0, %v1650
        %v1652 = vpop.f32.mrf.mxu0
        %v1653 = vpop.f32.mrf.mxu0
        %v1654 = vadd.f32 0.0, %v1653
        %v1655 = vpop.f32.mrf.mxu0
        %1656 = vmatprep.mubr.bf16.mxu0 0
        %1657 = vmatmul.mubr.bf16.gmra.mxu0 %v1272
        %v1658 = vpop.f32.mrf.mxu0
        %v1659 = vadd.f32 0.0, %v1658
        %v1660 = vpop.f32.mrf.mxu0
        %v1661 = vpop.f32.mrf.mxu0
        %v1662 = vadd.f32 0.0, %v1661
        %v1663 = vpop.f32.mrf.mxu0
        %1664 = vmatprep.mubr.bf16.mxu0 0
        %1665 = vmatmul.mubr.bf16.gmra.mxu0 %v1273
        %v1666 = vpop.f32.mrf.mxu0
        %v1667 = vadd.f32 0.0, %v1666
        %v1668 = vpop.f32.mrf.mxu0
        %v1669 = vpop.f32.mrf.mxu0
        %v1670 = vadd.f32 0.0, %v1669
        %v1671 = vpop.f32.mrf.mxu0
        %1672 = vmatprep.mubr.bf16.mxu0 0
        %1673 = vmatmul.mubr.bf16.gmra.mxu0 %v1274
        %v1674 = vpop.f32.mrf.mxu0
        %v1675 = vadd.f32 0.0, %v1674
        %v1676 = vpop.f32.mrf.mxu0
        %v1677 = vpop.f32.mrf.mxu0
        %v1678 = vadd.f32 0.0, %v1677
        %v1679 = vpop.f32.mrf.mxu0
        %1680 = vmatprep.mubr.bf16.mxu0 0
        %1681 = vmatmul.mubr.bf16.gmra.mxu0 %v1275
        %v1682 = vpop.f32.mrf.mxu0
        %v1683 = vadd.f32 0.0, %v1682
        %v1684 = vpop.f32.mrf.mxu0
        %v1685 = vpop.f32.mrf.mxu0
        %v1686 = vadd.f32 0.0, %v1685
        %v1687 = vpop.f32.mrf.mxu0
        %1688 = vmatprep.mubr.bf16.mxu0 0
        %1689 = vmatmul.mubr.bf16.gmra.mxu0 %v1276
        %v1690 = vpop.f32.mrf.mxu0
        %v1691 = vadd.f32 0.0, %v1690
        %v1692 = vpop.f32.mrf.mxu0
        %v1693 = vpop.f32.mrf.mxu0
        %v1694 = vadd.f32 0.0, %v1693
        %v1695 = vpop.f32.mrf.mxu0
        %1696 = vdwg.mxu0
        %1697 = vmax.xlane.f32.xlu0 %v1344
        %v1698 = vpop.xlane.xlu0 %1697
        %1699 = vmax.xlane.f32.xlu0 %v1347
        %v1700 = vpop.xlane.xlu0 %1699
        %1701 = vmax.xlane.f32.xlu0 %v1352
        %v1702 = vpop.xlane.xlu0 %1701
        %1703 = vmax.xlane.f32.xlu0 %v1355
        %v1704 = vpop.xlane.xlu0 %1703
        %1705 = vmax.xlane.f32.xlu0 %v1360
        %v1706 = vpop.xlane.xlu0 %1705
        %1707 = vmax.xlane.f32.xlu0 %v1363
        %v1708 = vpop.xlane.xlu0 %1707
        %1709 = vmax.xlane.f32.xlu0 %v1368
        %v1710 = vpop.xlane.xlu0 %1709
        %1711 = vmax.xlane.f32.xlu0 %v1371
        %v1712 = vpop.xlane.xlu0 %1711
        %1713 = vmax.xlane.f32.xlu0 %v1376
        %v1714 = vpop.xlane.xlu0 %1713
        %1715 = vmax.xlane.f32.xlu0 %v1379
        %v1716 = vpop.xlane.xlu0 %1715
        %1717 = vmax.xlane.f32.xlu0 %v1384
        %v1718 = vpop.xlane.xlu0 %1717
        %1719 = vmax.xlane.f32.xlu0 %v1387
        %v1720 = vpop.xlane.xlu0 %1719
        %1721 = vmax.xlane.f32.xlu0 %v1392
        %v1722 = vpop.xlane.xlu0 %1721
        %1723 = vmax.xlane.f32.xlu0 %v1395
        %v1724 = vpop.xlane.xlu0 %1723
        %1725 = vmax.xlane.f32.xlu0 %v1400
        %v1726 = vpop.xlane.xlu0 %1725
        %1727 = vmax.xlane.f32.xlu0 %v1403
        %v1728 = vpop.xlane.xlu0 %1727
        %1729 = vmax.xlane.f32.xlu0 %v1441
        %v1730 = vpop.xlane.xlu0 %1729
        %1731 = vmax.xlane.f32.xlu0 %v1444
        %v1732 = vpop.xlane.xlu0 %1731
        %1733 = vmax.xlane.f32.xlu0 %v1449
        %v1734 = vpop.xlane.xlu0 %1733
        %1735 = vmax.xlane.f32.xlu0 %v1452
        %v1736 = vpop.xlane.xlu0 %1735
        %1737 = vmax.xlane.f32.xlu0 %v1457
        %v1738 = vpop.xlane.xlu0 %1737
        %1739 = vmax.xlane.f32.xlu0 %v1460
        %v1740 = vpop.xlane.xlu0 %1739
        %1741 = vmax.xlane.f32.xlu0 %v1465
        %v1742 = vpop.xlane.xlu0 %1741
        %1743 = vmax.xlane.f32.xlu0 %v1468
        %v1744 = vpop.xlane.xlu0 %1743
        %1745 = vmax.xlane.f32.xlu0 %v1473
        %v1746 = vpop.xlane.xlu0 %1745
        %1747 = vmax.xlane.f32.xlu0 %v1476
        %v1748 = vpop.xlane.xlu0 %1747
        %1749 = vmax.xlane.f32.xlu0 %v1481
        %v1750 = vpop.xlane.xlu0 %1749
        %1751 = vmax.xlane.f32.xlu0 %v1484
        %v1752 = vpop.xlane.xlu0 %1751
        %1753 = vmax.xlane.f32.xlu0 %v1489
        %v1754 = vpop.xlane.xlu0 %1753
        %1755 = vmax.xlane.f32.xlu0 %v1492
        %v1756 = vpop.xlane.xlu0 %1755
        %1757 = vmax.xlane.f32.xlu0 %v1497
        %v1758 = vpop.xlane.xlu0 %1757
        %1759 = vmax.xlane.f32.xlu0 %v1500
        %v1760 = vpop.xlane.xlu0 %1759
        %1761 = vmax.xlane.f32.xlu0 %v1538
        %v1762 = vpop.xlane.xlu0 %1761
        %1763 = vmax.xlane.f32.xlu0 %v1541
        %v1764 = vpop.xlane.xlu0 %1763
        %1765 = vmax.xlane.f32.xlu0 %v1546
        %v1766 = vpop.xlane.xlu0 %1765
        %1767 = vmax.xlane.f32.xlu0 %v1549
        %v1768 = vpop.xlane.xlu0 %1767
        %1769 = vmax.xlane.f32.xlu0 %v1554
        %v1770 = vpop.xlane.xlu0 %1769
        %1771 = vmax.xlane.f32.xlu0 %v1557
        %v1772 = vpop.xlane.xlu0 %1771
        %1773 = vmax.xlane.f32.xlu0 %v1562
        %v1774 = vpop.xlane.xlu0 %1773
        %1775 = vmax.xlane.f32.xlu0 %v1565
        %v1776 = vpop.xlane.xlu0 %1775
        %1777 = vmax.xlane.f32.xlu0 %v1570
        %v1778 = vpop.xlane.xlu0 %1777
        %1779 = vmax.xlane.f32.xlu0 %v1573
        %v1780 = vpop.xlane.xlu0 %1779
        %1781 = vmax.xlane.f32.xlu0 %v1578
        %v1782 = vpop.xlane.xlu0 %1781
        %1783 = vmax.xlane.f32.xlu0 %v1581
        %v1784 = vpop.xlane.xlu0 %1783
        %1785 = vmax.xlane.f32.xlu0 %v1586
        %v1786 = vpop.xlane.xlu0 %1785
        %1787 = vmax.xlane.f32.xlu0 %v1589
        %v1788 = vpop.xlane.xlu0 %1787
        %1789 = vmax.xlane.f32.xlu0 %v1594
        %v1790 = vpop.xlane.xlu0 %1789
        %1791 = vmax.xlane.f32.xlu0 %v1597
        %v1792 = vpop.xlane.xlu0 %1791
        %1793 = vmax.xlane.f32.xlu0 %v1635
        %v1794 = vpop.xlane.xlu0 %1793
        %1795 = vmax.xlane.f32.xlu0 %v1638
        %v1796 = vpop.xlane.xlu0 %1795
        %1797 = vmax.xlane.f32.xlu0 %v1643
        %v1798 = vpop.xlane.xlu0 %1797
        %1799 = vmax.xlane.f32.xlu0 %v1646
        %v1800 = vpop.xlane.xlu0 %1799
        %1801 = vmax.xlane.f32.xlu0 %v1651
        %v1802 = vpop.xlane.xlu0 %1801
        %1803 = vmax.xlane.f32.xlu0 %v1654
        %v1804 = vpop.xlane.xlu0 %1803
        %1805 = vmax.xlane.f32.xlu0 %v1659
        %v1806 = vpop.xlane.xlu0 %1805
        %1807 = vmax.xlane.f32.xlu0 %v1662
        %v1808 = vpop.xlane.xlu0 %1807
        %1809 = vmax.xlane.f32.xlu0 %v1667
        %v1810 = vpop.xlane.xlu0 %1809
        %1811 = vmax.xlane.f32.xlu0 %v1670
        %v1812 = vpop.xlane.xlu0 %1811
        %1813 = vmax.xlane.f32.xlu0 %v1675
        %v1814 = vpop.xlane.xlu0 %1813
        %1815 = vmax.xlane.f32.xlu0 %v1678
        %v1816 = vpop.xlane.xlu0 %1815
        %1817 = vmax.xlane.f32.xlu0 %v1683
        %v1818 = vpop.xlane.xlu0 %1817
        %1819 = vmax.xlane.f32.xlu0 %v1686
        %v1820 = vpop.xlane.xlu0 %1819
        %1821 = vmax.xlane.f32.xlu0 %v1691
        %v1822 = vpop.xlane.xlu0 %1821
        %1823 = vmax.xlane.f32.xlu0 %v1694
        %v1824 = vpop.xlane.xlu0 %1823
        %v1825 = vsub.f32 %v1344, %v1698
        %v1826 = vsub.f32 %v1347, %v1700
        %v1827 = vsub.f32 %v1352, %v1702
        %v1828 = vsub.f32 %v1355, %v1704
        %v1829 = vsub.f32 %v1360, %v1706
        %v1830 = vsub.f32 %v1363, %v1708
        %v1831 = vsub.f32 %v1368, %v1710
        %v1832 = vsub.f32 %v1371, %v1712
        %v1833 = vsub.f32 %v1376, %v1714
        %v1834 = vsub.f32 %v1379, %v1716
        %v1835 = vsub.f32 %v1384, %v1718
        %v1836 = vsub.f32 %v1387, %v1720
        %v1837 = vsub.f32 %v1392, %v1722
        %v1838 = vsub.f32 %v1395, %v1724
        %v1839 = vsub.f32 %v1400, %v1726
        %v1840 = vsub.f32 %v1403, %v1728
        %v1841 = vsub.f32 %v1441, %v1730
        %v1842 = vsub.f32 %v1444, %v1732
        %v1843 = vsub.f32 %v1449, %v1734
        %v1844 = vsub.f32 %v1452, %v1736
        %v1845 = vsub.f32 %v1457, %v1738
        %v1846 = vsub.f32 %v1460, %v1740
        %v1847 = vsub.f32 %v1465, %v1742
        %v1848 = vsub.f32 %v1468, %v1744
        %v1849 = vsub.f32 %v1473, %v1746
        %v1850 = vsub.f32 %v1476, %v1748
        %v1851 = vsub.f32 %v1481, %v1750
        %v1852 = vsub.f32 %v1484, %v1752
        %v1853 = vsub.f32 %v1489, %v1754
        %v1854 = vsub.f32 %v1492, %v1756
        %v1855 = vsub.f32 %v1497, %v1758
        %v1856 = vsub.f32 %v1500, %v1760
        %v1857 = vsub.f32 %v1538, %v1762
        %v1858 = vsub.f32 %v1541, %v1764
        %v1859 = vsub.f32 %v1546, %v1766
        %v1860 = vsub.f32 %v1549, %v1768
        %v1861 = vsub.f32 %v1554, %v1770
        %v1862 = vsub.f32 %v1557, %v1772
        %v1863 = vsub.f32 %v1562, %v1774
        %v1864 = vsub.f32 %v1565, %v1776
        %v1865 = vsub.f32 %v1570, %v1778
        %v1866 = vsub.f32 %v1573, %v1780
        %v1867 = vsub.f32 %v1578, %v1782
        %v1868 = vsub.f32 %v1581, %v1784
        %v1869 = vsub.f32 %v1586, %v1786
        %v1870 = vsub.f32 %v1589, %v1788
        %v1871 = vsub.f32 %v1594, %v1790
        %v1872 = vsub.f32 %v1597, %v1792
        %v1873 = vsub.f32 %v1635, %v1794
        %v1874 = vsub.f32 %v1638, %v1796
        %v1875 = vsub.f32 %v1643, %v1798
        %v1876 = vsub.f32 %v1646, %v1800
        %v1877 = vsub.f32 %v1651, %v1802
        %v1878 = vsub.f32 %v1654, %v1804
        %v1879 = vsub.f32 %v1659, %v1806
        %v1880 = vsub.f32 %v1662, %v1808
        %v1881 = vsub.f32 %v1667, %v1810
        %v1882 = vsub.f32 %v1670, %v1812
        %v1883 = vsub.f32 %v1675, %v1814
        %v1884 = vsub.f32 %v1678, %v1816
        %v1885 = vsub.f32 %v1683, %v1818
        %v1886 = vsub.f32 %v1686, %v1820
        %v1887 = vsub.f32 %v1691, %v1822
        %v1888 = vsub.f32 %v1694, %v1824
        %v1889 = vmul.f32 %v1825, 1.442695
        %v1890 = vpow.pop %v1889
        %v1891 = vmul.f32 %v1826, 1.442695
        %v1892 = vpow.pop %v1891
        %v1893 = vmul.f32 %v1827, 1.442695
        %v1894 = vpow.pop %v1893
        %v1895 = vmul.f32 %v1828, 1.442695
        %v1896 = vpow.pop %v1895
        %v1897 = vmul.f32 %v1829, 1.442695
        %v1898 = vpow.pop %v1897
        %v1899 = vmul.f32 %v1830, 1.442695
        %v1900 = vpow.pop %v1899
        %v1901 = vmul.f32 %v1831, 1.442695
        %v1902 = vpow.pop %v1901
        %v1903 = vmul.f32 %v1832, 1.442695
        %v1904 = vpow.pop %v1903
        %v1905 = vmul.f32 %v1833, 1.442695
        %v1906 = vpow.pop %v1905
        %v1907 = vmul.f32 %v1834, 1.442695
        %v1908 = vpow.pop %v1907
        %v1909 = vmul.f32 %v1835, 1.442695
        %v1910 = vpow.pop %v1909
        %v1911 = vmul.f32 %v1836, 1.442695
        %v1912 = vpow.pop %v1911
        %v1913 = vmul.f32 %v1837, 1.442695
        %v1914 = vpow.pop %v1913
        %v1915 = vmul.f32 %v1838, 1.442695
        %v1916 = vpow.pop %v1915
        %v1917 = vmul.f32 %v1839, 1.442695
        %v1918 = vpow.pop %v1917
        %v1919 = vmul.f32 %v1840, 1.442695
        %v1920 = vpow.pop %v1919
        %v1921 = vmul.f32 %v1841, 1.442695
        %v1922 = vpow.pop %v1921
        %v1923 = vmul.f32 %v1842, 1.442695
        %v1924 = vpow.pop %v1923
        %v1925 = vmul.f32 %v1843, 1.442695
        %v1926 = vpow.pop %v1925
        %v1927 = vmul.f32 %v1844, 1.442695
        %v1928 = vpow.pop %v1927
        %v1929 = vmul.f32 %v1845, 1.442695
        %v1930 = vpow.pop %v1929
        %v1931 = vmul.f32 %v1846, 1.442695
        %v1932 = vpow.pop %v1931
        %v1933 = vmul.f32 %v1847, 1.442695
        %v1934 = vpow.pop %v1933
        %v1935 = vmul.f32 %v1848, 1.442695
        %v1936 = vpow.pop %v1935
        %v1937 = vmul.f32 %v1849, 1.442695
        %v1938 = vpow.pop %v1937
        %v1939 = vmul.f32 %v1850, 1.442695
        %v1940 = vpow.pop %v1939
        %v1941 = vmul.f32 %v1851, 1.442695
        %v1942 = vpow.pop %v1941
        %v1943 = vmul.f32 %v1852, 1.442695
        %v1944 = vpow.pop %v1943
        %v1945 = vmul.f32 %v1853, 1.442695
        %v1946 = vpow.pop %v1945
        %v1947 = vmul.f32 %v1854, 1.442695
        %v1948 = vpow.pop %v1947
        %v1949 = vmul.f32 %v1855, 1.442695
        %v1950 = vpow.pop %v1949
        %v1951 = vmul.f32 %v1856, 1.442695
        %v1952 = vpow.pop %v1951
        %v1953 = vmul.f32 %v1857, 1.442695
        %v1954 = vpow.pop %v1953
        %v1955 = vmul.f32 %v1858, 1.442695
        %v1956 = vpow.pop %v1955
        %v1957 = vmul.f32 %v1859, 1.442695
        %v1958 = vpow.pop %v1957
        %v1959 = vmul.f32 %v1860, 1.442695
        %v1960 = vpow.pop %v1959
        %v1961 = vmul.f32 %v1861, 1.442695
        %v1962 = vpow.pop %v1961
        %v1963 = vmul.f32 %v1862, 1.442695
        %v1964 = vpow.pop %v1963
        %v1965 = vmul.f32 %v1863, 1.442695
        %v1966 = vpow.pop %v1965
        %v1967 = vmul.f32 %v1864, 1.442695
        %v1968 = vpow.pop %v1967
        %v1969 = vmul.f32 %v1865, 1.442695
        %v1970 = vpow.pop %v1969
        %v1971 = vmul.f32 %v1866, 1.442695
        %v1972 = vpow.pop %v1971
        %v1973 = vmul.f32 %v1867, 1.442695
        %v1974 = vpow.pop %v1973
        %v1975 = vmul.f32 %v1868, 1.442695
        %v1976 = vpow.pop %v1975
        %v1977 = vmul.f32 %v1869, 1.442695
        %v1978 = vpow.pop %v1977
        %v1979 = vmul.f32 %v1870, 1.442695
        %v1980 = vpow.pop %v1979
        %v1981 = vmul.f32 %v1871, 1.442695
        %v1982 = vpow.pop %v1981
        %v1983 = vmul.f32 %v1872, 1.442695
        %v1984 = vpow.pop %v1983
        %v1985 = vmul.f32 %v1873, 1.442695
        %v1986 = vpow.pop %v1985
        %v1987 = vmul.f32 %v1874, 1.442695
        %v1988 = vpow.pop %v1987
        %v1989 = vmul.f32 %v1875, 1.442695
        %v1990 = vpow.pop %v1989
        %v1991 = vmul.f32 %v1876, 1.442695
        %v1992 = vpow.pop %v1991
        %v1993 = vmul.f32 %v1877, 1.442695
        %v1994 = vpow.pop %v1993
        %v1995 = vmul.f32 %v1878, 1.442695
        %v1996 = vpow.pop %v1995
        %v1997 = vmul.f32 %v1879, 1.442695
        %v1998 = vpow.pop %v1997
        %v1999 = vmul.f32 %v1880, 1.442695
        %v2000 = vpow.pop %v1999
        %v2001 = vmul.f32 %v1881, 1.442695
        %v2002 = vpow.pop %v2001
        %v2003 = vmul.f32 %v1882, 1.442695
        %v2004 = vpow.pop %v2003
        %v2005 = vmul.f32 %v1883, 1.442695
        %v2006 = vpow.pop %v2005
        %v2007 = vmul.f32 %v1884, 1.442695
        %v2008 = vpow.pop %v2007
        %v2009 = vmul.f32 %v1885, 1.442695
        %v2010 = vpow.pop %v2009
        %v2011 = vmul.f32 %v1886, 1.442695
        %v2012 = vpow.pop %v2011
        %v2013 = vmul.f32 %v1887, 1.442695
        %v2014 = vpow.pop %v2013
        %v2015 = vmul.f32 %v1888, 1.442695
        %v2016 = vpow.pop %v2015
        %2017 = vadd.xlane.f32.xlu0 %v1890
        %v2018 = vpop.xlane.xlu0 %2017
        %2019 = vadd.xlane.f32.xlu0 %v1892
        %v2020 = vpop.xlane.xlu0 %2019
        %2021 = vadd.xlane.f32.xlu0 %v1894
        %v2022 = vpop.xlane.xlu0 %2021
        %2023 = vadd.xlane.f32.xlu0 %v1896
        %v2024 = vpop.xlane.xlu0 %2023
        %2025 = vadd.xlane.f32.xlu0 %v1898
        %v2026 = vpop.xlane.xlu0 %2025
        %2027 = vadd.xlane.f32.xlu0 %v1900
        %v2028 = vpop.xlane.xlu0 %2027
        %2029 = vadd.xlane.f32.xlu0 %v1902
        %v2030 = vpop.xlane.xlu0 %2029
        %2031 = vadd.xlane.f32.xlu0 %v1904
        %v2032 = vpop.xlane.xlu0 %2031
        %2033 = vadd.xlane.f32.xlu0 %v1906
        %v2034 = vpop.xlane.xlu0 %2033
        %2035 = vadd.xlane.f32.xlu0 %v1908
        %v2036 = vpop.xlane.xlu0 %2035
        %2037 = vadd.xlane.f32.xlu0 %v1910
        %v2038 = vpop.xlane.xlu0 %2037
        %2039 = vadd.xlane.f32.xlu0 %v1912
        %v2040 = vpop.xlane.xlu0 %2039
        %2041 = vadd.xlane.f32.xlu0 %v1914
        %v2042 = vpop.xlane.xlu0 %2041
        %2043 = vadd.xlane.f32.xlu0 %v1916
        %v2044 = vpop.xlane.xlu0 %2043
        %2045 = vadd.xlane.f32.xlu0 %v1918
        %v2046 = vpop.xlane.xlu0 %2045
        %2047 = vadd.xlane.f32.xlu0 %v1920
        %v2048 = vpop.xlane.xlu0 %2047
        %2049 = vadd.xlane.f32.xlu0 %v1922
        %v2050 = vpop.xlane.xlu0 %2049
        %2051 = vadd.xlane.f32.xlu0 %v1924
        %v2052 = vpop.xlane.xlu0 %2051
        %2053 = vadd.xlane.f32.xlu0 %v1926
        %v2054 = vpop.xlane.xlu0 %2053
        %2055 = vadd.xlane.f32.xlu0 %v1928
        %v2056 = vpop.xlane.xlu0 %2055
        %2057 = vadd.xlane.f32.xlu0 %v1930
        %v2058 = vpop.xlane.xlu0 %2057
        %2059 = vadd.xlane.f32.xlu0 %v1932
        %v2060 = vpop.xlane.xlu0 %2059
        %2061 = vadd.xlane.f32.xlu0 %v1934
        %v2062 = vpop.xlane.xlu0 %2061
        %2063 = vadd.xlane.f32.xlu0 %v1936
        %v2064 = vpop.xlane.xlu0 %2063
        %2065 = vadd.xlane.f32.xlu0 %v1938
        %v2066 = vpop.xlane.xlu0 %2065
        %2067 = vadd.xlane.f32.xlu0 %v1940
        %v2068 = vpop.xlane.xlu0 %2067
        %2069 = vadd.xlane.f32.xlu0 %v1942
        %v2070 = vpop.xlane.xlu0 %2069
        %2071 = vadd.xlane.f32.xlu0 %v1944
        %v2072 = vpop.xlane.xlu0 %2071
        %2073 = vadd.xlane.f32.xlu0 %v1946
        %v2074 = vpop.xlane.xlu0 %2073
        %2075 = vadd.xlane.f32.xlu0 %v1948
        %v2076 = vpop.xlane.xlu0 %2075
        %2077 = vadd.xlane.f32.xlu0 %v1950
        %v2078 = vpop.xlane.xlu0 %2077
        %2079 = vadd.xlane.f32.xlu0 %v1952
        %v2080 = vpop.xlane.xlu0 %2079
        %2081 = vadd.xlane.f32.xlu0 %v1954
        %v2082 = vpop.xlane.xlu0 %2081
        %2083 = vadd.xlane.f32.xlu0 %v1956
        %v2084 = vpop.xlane.xlu0 %2083
        %2085 = vadd.xlane.f32.xlu0 %v1958
        %v2086 = vpop.xlane.xlu0 %2085
        %2087 = vadd.xlane.f32.xlu0 %v1960
        %v2088 = vpop.xlane.xlu0 %2087
        %2089 = vadd.xlane.f32.xlu0 %v1962
        %v2090 = vpop.xlane.xlu0 %2089
        %2091 = vadd.xlane.f32.xlu0 %v1964
        %v2092 = vpop.xlane.xlu0 %2091
        %2093 = vadd.xlane.f32.xlu0 %v1966
        %v2094 = vpop.xlane.xlu0 %2093
        %2095 = vadd.xlane.f32.xlu0 %v1968
        %v2096 = vpop.xlane.xlu0 %2095
        %2097 = vadd.xlane.f32.xlu0 %v1970
        %v2098 = vpop.xlane.xlu0 %2097
        %2099 = vadd.xlane.f32.xlu0 %v1972
        %v2100 = vpop.xlane.xlu0 %2099
        %2101 = vadd.xlane.f32.xlu0 %v1974
        %v2102 = vpop.xlane.xlu0 %2101
        %2103 = vadd.xlane.f32.xlu0 %v1976
        %v2104 = vpop.xlane.xlu0 %2103
        %2105 = vadd.xlane.f32.xlu0 %v1978
        %v2106 = vpop.xlane.xlu0 %2105
        %2107 = vadd.xlane.f32.xlu0 %v1980
        %v2108 = vpop.xlane.xlu0 %2107
        %2109 = vadd.xlane.f32.xlu0 %v1982
        %v2110 = vpop.xlane.xlu0 %2109
        %2111 = vadd.xlane.f32.xlu0 %v1984
        %v2112 = vpop.xlane.xlu0 %2111
        %2113 = vadd.xlane.f32.xlu0 %v1986
        %v2114 = vpop.xlane.xlu0 %2113
        %2115 = vadd.xlane.f32.xlu0 %v1988
        %v2116 = vpop.xlane.xlu0 %2115
        %2117 = vadd.xlane.f32.xlu0 %v1990
        %v2118 = vpop.xlane.xlu0 %2117
        %2119 = vadd.xlane.f32.xlu0 %v1992
        %v2120 = vpop.xlane.xlu0 %2119
        %2121 = vadd.xlane.f32.xlu0 %v1994
        %v2122 = vpop.xlane.xlu0 %2121
        %2123 = vadd.xlane.f32.xlu0 %v1996
        %v2124 = vpop.xlane.xlu0 %2123
        %2125 = vadd.xlane.f32.xlu0 %v1998
        %v2126 = vpop.xlane.xlu0 %2125
        %2127 = vadd.xlane.f32.xlu0 %v2000
        %v2128 = vpop.xlane.xlu0 %2127
        %2129 = vadd.xlane.f32.xlu0 %v2002
        %v2130 = vpop.xlane.xlu0 %2129
        %2131 = vadd.xlane.f32.xlu0 %v2004
        %v2132 = vpop.xlane.xlu0 %2131
        %2133 = vadd.xlane.f32.xlu0 %v2006
        %v2134 = vpop.xlane.xlu0 %2133
        %2135 = vadd.xlane.f32.xlu0 %v2008
        %v2136 = vpop.xlane.xlu0 %2135
        %2137 = vadd.xlane.f32.xlu0 %v2010
        %v2138 = vpop.xlane.xlu0 %2137
        %2139 = vadd.xlane.f32.xlu0 %v2012
        %v2140 = vpop.xlane.xlu0 %2139
        %2141 = vadd.xlane.f32.xlu0 %v2014
        %v2142 = vpop.xlane.xlu0 %2141
        %2143 = vadd.xlane.f32.xlu0 %v2016
        %v2144 = vpop.xlane.xlu0 %2143
        %v2145 = vrcp.pop %v2018
        %v2146 = vrcp.pop %v2020
        %v2147 = vrcp.pop %v2022
        %v2148 = vrcp.pop %v2024
        %v2149 = vrcp.pop %v2026
        %v2150 = vrcp.pop %v2028
        %v2151 = vrcp.pop %v2030
        %v2152 = vrcp.pop %v2032
        %v2153 = vrcp.pop %v2034
        %v2154 = vrcp.pop %v2036
        %v2155 = vrcp.pop %v2038
        %v2156 = vrcp.pop %v2040
        %v2157 = vrcp.pop %v2042
        %v2158 = vrcp.pop %v2044
        %v2159 = vrcp.pop %v2046
        %v2160 = vrcp.pop %v2048
        %v2161 = vrcp.pop %v2050
        %v2162 = vrcp.pop %v2052
        %v2163 = vrcp.pop %v2054
        %v2164 = vrcp.pop %v2056
        %v2165 = vrcp.pop %v2058
        %v2166 = vrcp.pop %v2060
        %v2167 = vrcp.pop %v2062
        %v2168 = vrcp.pop %v2064
        %v2169 = vrcp.pop %v2066
        %v2170 = vrcp.pop %v2068
        %v2171 = vrcp.pop %v2070
        %v2172 = vrcp.pop %v2072
        %v2173 = vrcp.pop %v2074
        %v2174 = vrcp.pop %v2076
        %v2175 = vrcp.pop %v2078
        %v2176 = vrcp.pop %v2080
        %v2177 = vrcp.pop %v2082
        %v2178 = vrcp.pop %v2084
        %v2179 = vrcp.pop %v2086
        %v2180 = vrcp.pop %v2088
        %v2181 = vrcp.pop %v2090
        %v2182 = vrcp.pop %v2092
        %v2183 = vrcp.pop %v2094
        %v2184 = vrcp.pop %v2096
        %v2185 = vrcp.pop %v2098
        %v2186 = vrcp.pop %v2100
        %v2187 = vrcp.pop %v2102
        %v2188 = vrcp.pop %v2104
        %v2189 = vrcp.pop %v2106
        %v2190 = vrcp.pop %v2108
        %v2191 = vrcp.pop %v2110
        %v2192 = vrcp.pop %v2112
        %v2193 = vrcp.pop %v2114
        %v2194 = vrcp.pop %v2116
        %v2195 = vrcp.pop %v2118
        %v2196 = vrcp.pop %v2120
        %v2197 = vrcp.pop %v2122
        %v2198 = vrcp.pop %v2124
        %v2199 = vrcp.pop %v2126
        %v2200 = vrcp.pop %v2128
        %v2201 = vrcp.pop %v2130
        %v2202 = vrcp.pop %v2132
        %v2203 = vrcp.pop %v2134
        %v2204 = vrcp.pop %v2136
        %v2205 = vrcp.pop %v2138
        %v2206 = vrcp.pop %v2140
        %v2207 = vrcp.pop %v2142
        %v2208 = vrcp.pop %v2144
        %v2209 = vmul.f32 %v1890, %v2145
        %v2210 = vmul.f32 %v1892, %v2146
        %v2211 = vmul.f32 %v1894, %v2147
        %v2212 = vmul.f32 %v1896, %v2148
        %v2213 = vmul.f32 %v1898, %v2149
        %v2214 = vmul.f32 %v1900, %v2150
        %v2215 = vmul.f32 %v1902, %v2151
        %v2216 = vmul.f32 %v1904, %v2152
        %v2217 = vmul.f32 %v1906, %v2153
        %v2218 = vmul.f32 %v1908, %v2154
        %v2219 = vmul.f32 %v1910, %v2155
        %v2220 = vmul.f32 %v1912, %v2156
        %v2221 = vmul.f32 %v1914, %v2157
        %v2222 = vmul.f32 %v1916, %v2158
        %v2223 = vmul.f32 %v1918, %v2159
        %v2224 = vmul.f32 %v1920, %v2160
        %v2225 = vmul.f32 %v1922, %v2161
        %v2226 = vmul.f32 %v1924, %v2162
        %v2227 = vmul.f32 %v1926, %v2163
        %v2228 = vmul.f32 %v1928, %v2164
        %v2229 = vmul.f32 %v1930, %v2165
        %v2230 = vmul.f32 %v1932, %v2166
        %v2231 = vmul.f32 %v1934, %v2167
        %v2232 = vmul.f32 %v1936, %v2168
        %v2233 = vmul.f32 %v1938, %v2169
        %v2234 = vmul.f32 %v1940, %v2170
        %v2235 = vmul.f32 %v1942, %v2171
        %v2236 = vmul.f32 %v1944, %v2172
        %v2237 = vmul.f32 %v1946, %v2173
        %v2238 = vmul.f32 %v1948, %v2174
        %v2239 = vmul.f32 %v1950, %v2175
        %v2240 = vmul.f32 %v1952, %v2176
        %v2241 = vmul.f32 %v1954, %v2177
        %v2242 = vmul.f32 %v1956, %v2178
        %v2243 = vmul.f32 %v1958, %v2179
        %v2244 = vmul.f32 %v1960, %v2180
        %v2245 = vmul.f32 %v1962, %v2181
        %v2246 = vmul.f32 %v1964, %v2182
        %v2247 = vmul.f32 %v1966, %v2183
        %v2248 = vmul.f32 %v1968, %v2184
        %v2249 = vmul.f32 %v1970, %v2185
        %v2250 = vmul.f32 %v1972, %v2186
        %v2251 = vmul.f32 %v1974, %v2187
        %v2252 = vmul.f32 %v1976, %v2188
        %v2253 = vmul.f32 %v1978, %v2189
        %v2254 = vmul.f32 %v1980, %v2190
        %v2255 = vmul.f32 %v1982, %v2191
        %v2256 = vmul.f32 %v1984, %v2192
        %v2257 = vmul.f32 %v1986, %v2193
        %v2258 = vmul.f32 %v1988, %v2194
        %v2259 = vmul.f32 %v1990, %v2195
        %v2260 = vmul.f32 %v1992, %v2196
        %v2261 = vmul.f32 %v1994, %v2197
        %v2262 = vmul.f32 %v1996, %v2198
        %v2263 = vmul.f32 %v1998, %v2199
        %v2264 = vmul.f32 %v2000, %v2200
        %v2265 = vmul.f32 %v2002, %v2201
        %v2266 = vmul.f32 %v2004, %v2202
        %v2267 = vmul.f32 %v2006, %v2203
        %v2268 = vmul.f32 %v2008, %v2204
        %v2269 = vmul.f32 %v2010, %v2205
        %v2270 = vmul.f32 %v2012, %v2206
        %v2271 = vmul.f32 %v2014, %v2207
        %v2272 = vmul.f32 %v2016, %v2208
        %v2273 = vpack.c.bf16 %v2210, %v2209
        %v2274 = vpack.c.bf16 %v2212, %v2211
        %v2275 = vpack.c.bf16 %v2214, %v2213
        %v2276 = vpack.c.bf16 %v2216, %v2215
        %v2277 = vpack.c.bf16 %v2218, %v2217
        %v2278 = vpack.c.bf16 %v2220, %v2219
        %v2279 = vpack.c.bf16 %v2222, %v2221
        %v2280 = vpack.c.bf16 %v2224, %v2223
        %v2281 = vpack.c.bf16 %v2226, %v2225
        %v2282 = vpack.c.bf16 %v2228, %v2227
        %v2283 = vpack.c.bf16 %v2230, %v2229
        %v2284 = vpack.c.bf16 %v2232, %v2231
        %v2285 = vpack.c.bf16 %v2234, %v2233
        %v2286 = vpack.c.bf16 %v2236, %v2235
        %v2287 = vpack.c.bf16 %v2238, %v2237
        %v2288 = vpack.c.bf16 %v2240, %v2239
        %v2289 = vpack.c.bf16 %v2242, %v2241
        %v2290 = vpack.c.bf16 %v2244, %v2243
        %v2291 = vpack.c.bf16 %v2246, %v2245
        %v2292 = vpack.c.bf16 %v2248, %v2247
        %v2293 = vpack.c.bf16 %v2250, %v2249
        %v2294 = vpack.c.bf16 %v2252, %v2251
        %v2295 = vpack.c.bf16 %v2254, %v2253
        %v2296 = vpack.c.bf16 %v2256, %v2255
        %v2297 = vpack.c.bf16 %v2258, %v2257
        %v2298 = vpack.c.bf16 %v2260, %v2259
        %v2299 = vpack.c.bf16 %v2262, %v2261
        %v2300 = vpack.c.bf16 %v2264, %v2263
        %v2301 = vpack.c.bf16 %v2266, %v2265
        %v2302 = vpack.c.bf16 %v2268, %v2267
        %v2303 = vpack.c.bf16 %v2270, %v2269
        %v2304 = vpack.c.bf16 %v2272, %v2271
        %v2305 = vpack.c.bf16 %v994, %v991
        %v2306 = vpack.c.bf16 %v1002, %v999
        %v2307 = vpack.c.bf16 %v1010, %v1007
        %v2308 = vpack.c.bf16 %v1018, %v1015
        %v2309 = vpack.c.bf16 %v1026, %v1023
        %v2310 = vpack.c.bf16 %v1034, %v1031
        %v2311 = vpack.c.bf16 %v1042, %v1039
        %v2312 = vpack.c.bf16 %v1050, %v1047
        %v2313 = vpack.c.bf16 %v1058, %v1055
        %v2314 = vpack.c.bf16 %v1066, %v1063
        %v2315 = vpack.c.bf16 %v1074, %v1071
        %v2316 = vpack.c.bf16 %v1082, %v1079
        %v2317 = vpack.c.bf16 %v1090, %v1087
        %v2318 = vpack.c.bf16 %v1098, %v1095
        %v2319 = vpack.c.bf16 %v1106, %v1103
        %v2320 = vpack.c.bf16 %v1114, %v1111
        %v2321 = vpack.c.bf16 %v1122, %v1119
        %v2322 = vpack.c.bf16 %v1130, %v1127
        %v2323 = vpack.c.bf16 %v1138, %v1135
        %v2324 = vpack.c.bf16 %v1146, %v1143
        %v2325 = vpack.c.bf16 %v1154, %v1151
        %v2326 = vpack.c.bf16 %v1162, %v1159
        %v2327 = vpack.c.bf16 %v1170, %v1167
        %v2328 = vpack.c.bf16 %v1178, %v1175
        %v2329 = vpack.c.bf16 %v1186, %v1183
        %v2330 = vpack.c.bf16 %v1194, %v1191
        %v2331 = vpack.c.bf16 %v1202, %v1199
        %v2332 = vpack.c.bf16 %v1210, %v1207
        %v2333 = vpack.c.bf16 %v1218, %v1215
        %v2334 = vpack.c.bf16 %v1226, %v1223
        %v2335 = vpack.c.bf16 %v1234, %v1231
        %v2336 = vpack.c.bf16 %v1242, %v1239
        %2337 = vmatprep.subr.bf16.mxu0 0
        %2338 = vmatpush1.bf16.msra.mxu0 %v2312
        %2339 = vmatprep.subr.bf16.mxu0 0
        %2340 = vmatpush1.bf16.msra.mxu0 %v2311
        %2341 = vmatprep.subr.bf16.mxu0 0
        %2342 = vmatpush1.bf16.msra.mxu0 %v2310
        %2343 = vmatprep.subr.bf16.mxu0 0
        %2344 = vmatpush1.bf16.msra.mxu0 %v2309
        %2345 = vmatprep.subr.bf16.mxu0 0
        %2346 = vmatpush1.bf16.msra.mxu0 %v2308
        %2347 = vmatprep.subr.bf16.mxu0 0
        %2348 = vmatpush1.bf16.msra.mxu0 %v2307
        %2349 = vmatprep.subr.bf16.mxu0 0
        %2350 = vmatpush1.bf16.msra.mxu0 %v2306
        %2351 = vmatprep.subr.bf16.mxu0 0
        %2352 = vmatpush1.bf16.msra.mxu0 %v2305
        %2353 = vmatprep.subr.bf16.mxu0 0
        %2354 = vmatpush2.bf16.msra.mxu0 0
        %2355 = vmatprep.subr.bf16.mxu0 0
        %2356 = vmatpush2.bf16.msra.mxu0 0
        %2357 = vmatprep.subr.bf16.mxu0 0
        %2358 = vmatpush2.bf16.msra.mxu0 0
        %2359 = vmatprep.subr.bf16.mxu0 0
        %2360 = vmatpush2.bf16.msra.mxu0 0
        %2361 = vmatprep.subr.bf16.mxu0 0
        %2362 = vmatpush2.bf16.msra.mxu0 0
        %2363 = vmatprep.subr.bf16.mxu0 0
        %2364 = vmatpush2.bf16.msra.mxu0 0
        %2365 = vmatprep.subr.bf16.mxu0 0
        %2366 = vmatpush2.bf16.msra.mxu0 0
        %2367 = vmatprep.subr.bf16.mxu0 0
        %2368 = vmatpush2.bf16.msra.mxu0 0
        %2369 = vmatprep.mubr.bf16.mxu0 0
        %2370 = vmatmul.mubr.bf16.gmra.mxu0 %v2273
        %v2371 = vpop.f32.mrf.mxu0
        %v2372 = vadd.f32 0.0, %v2371
        %v2373 = vpop.f32.mrf.mxu0
        %v2374 = vpop.f32.mrf.mxu0
        %v2375 = vadd.f32 0.0, %v2374
        %v2376 = vpop.f32.mrf.mxu0
        %2377 = vmatprep.mubr.bf16.mxu0 0
        %2378 = vmatmul.mubr.bf16.gmra.mxu0 %v2274
        %v2379 = vpop.f32.mrf.mxu0
        %v2380 = vadd.f32 0.0, %v2379
        %v2381 = vpop.f32.mrf.mxu0
        %v2382 = vpop.f32.mrf.mxu0
        %v2383 = vadd.f32 0.0, %v2382
        %v2384 = vpop.f32.mrf.mxu0
        %2385 = vmatprep.mubr.bf16.mxu0 0
        %2386 = vmatmul.mubr.bf16.gmra.mxu0 %v2275
        %v2387 = vpop.f32.mrf.mxu0
        %v2388 = vadd.f32 0.0, %v2387
        %v2389 = vpop.f32.mrf.mxu0
        %v2390 = vpop.f32.mrf.mxu0
        %v2391 = vadd.f32 0.0, %v2390
        %v2392 = vpop.f32.mrf.mxu0
        %2393 = vmatprep.mubr.bf16.mxu0 0
        %2394 = vmatmul.mubr.bf16.gmra.mxu0 %v2276
        %v2395 = vpop.f32.mrf.mxu0
        %v2396 = vadd.f32 0.0, %v2395
        %v2397 = vpop.f32.mrf.mxu0
        %v2398 = vpop.f32.mrf.mxu0
        %v2399 = vadd.f32 0.0, %v2398
        %v2400 = vpop.f32.mrf.mxu0
        %2401 = vmatprep.mubr.bf16.mxu0 0
        %2402 = vmatmul.mubr.bf16.gmra.mxu0 %v2277
        %v2403 = vpop.f32.mrf.mxu0
        %v2404 = vadd.f32 0.0, %v2403
        %v2405 = vpop.f32.mrf.mxu0
        %v2406 = vpop.f32.mrf.mxu0
        %v2407 = vadd.f32 0.0, %v2406
        %v2408 = vpop.f32.mrf.mxu0
        %2409 = vmatprep.mubr.bf16.mxu0 0
        %2410 = vmatmul.mubr.bf16.gmra.mxu0 %v2278
        %v2411 = vpop.f32.mrf.mxu0
        %v2412 = vadd.f32 0.0, %v2411
        %v2413 = vpop.f32.mrf.mxu0
        %v2414 = vpop.f32.mrf.mxu0
        %v2415 = vadd.f32 0.0, %v2414
        %v2416 = vpop.f32.mrf.mxu0
        %2417 = vmatprep.mubr.bf16.mxu0 0
        %2418 = vmatmul.mubr.bf16.gmra.mxu0 %v2279
        %v2419 = vpop.f32.mrf.mxu0
        %v2420 = vadd.f32 0.0, %v2419
        %v2421 = vpop.f32.mrf.mxu0
        %v2422 = vpop.f32.mrf.mxu0
        %v2423 = vadd.f32 0.0, %v2422
        %v2424 = vpop.f32.mrf.mxu0
        %2425 = vmatprep.mubr.bf16.mxu0 0
        %2426 = vmatmul.mubr.bf16.gmra.mxu0 %v2280
        %v2427 = vpop.f32.mrf.mxu0
        %v2428 = vadd.f32 0.0, %v2427
        %v2429 = vpop.f32.mrf.mxu0
        %v2430 = vpop.f32.mrf.mxu0
        %v2431 = vadd.f32 0.0, %v2430
        %v2432 = vpop.f32.mrf.mxu0
        %2433 = vdwg.mxu0
        %2434 = vmatprep.subr.bf16.mxu0 0
        %2435 = vmatpush1.bf16.msra.mxu0 %v2320
        %2436 = vmatprep.subr.bf16.mxu0 0
        %2437 = vmatpush1.bf16.msra.mxu0 %v2319
        %2438 = vmatprep.subr.bf16.mxu0 0
        %2439 = vmatpush1.bf16.msra.mxu0 %v2318
        %2440 = vmatprep.subr.bf16.mxu0 0
        %2441 = vmatpush1.bf16.msra.mxu0 %v2317
        %2442 = vmatprep.subr.bf16.mxu0 0
        %2443 = vmatpush1.bf16.msra.mxu0 %v2316
        %2444 = vmatprep.subr.bf16.mxu0 0
        %2445 = vmatpush1.bf16.msra.mxu0 %v2315
        %2446 = vmatprep.subr.bf16.mxu0 0
        %2447 = vmatpush1.bf16.msra.mxu0 %v2314
        %2448 = vmatprep.subr.bf16.mxu0 0
        %2449 = vmatpush1.bf16.msra.mxu0 %v2313
        %2450 = vmatprep.subr.bf16.mxu0 0
        %2451 = vmatpush2.bf16.msra.mxu0 0
        %2452 = vmatprep.subr.bf16.mxu0 0
        %2453 = vmatpush2.bf16.msra.mxu0 0
        %2454 = vmatprep.subr.bf16.mxu0 0
        %2455 = vmatpush2.bf16.msra.mxu0 0
        %2456 = vmatprep.subr.bf16.mxu0 0
        %2457 = vmatpush2.bf16.msra.mxu0 0
        %2458 = vmatprep.subr.bf16.mxu0 0
        %2459 = vmatpush2.bf16.msra.mxu0 0
        %2460 = vmatprep.subr.bf16.mxu0 0
        %2461 = vmatpush2.bf16.msra.mxu0 0
        %2462 = vmatprep.subr.bf16.mxu0 0
        %2463 = vmatpush2.bf16.msra.mxu0 0
        %2464 = vmatprep.subr.bf16.mxu0 0
        %2465 = vmatpush2.bf16.msra.mxu0 0
        %2466 = vmatprep.mubr.bf16.mxu0 0
        %2467 = vmatmul.mubr.bf16.gmra.mxu0 %v2281
        %v2468 = vpop.f32.mrf.mxu0
        %v2469 = vadd.f32 0.0, %v2468
        %v2470 = vpop.f32.mrf.mxu0
        %v2471 = vpop.f32.mrf.mxu0
        %v2472 = vadd.f32 0.0, %v2471
        %v2473 = vpop.f32.mrf.mxu0
        %2474 = vmatprep.mubr.bf16.mxu0 0
        %2475 = vmatmul.mubr.bf16.gmra.mxu0 %v2282
        %v2476 = vpop.f32.mrf.mxu0
        %v2477 = vadd.f32 0.0, %v2476
        %v2478 = vpop.f32.mrf.mxu0
        %v2479 = vpop.f32.mrf.mxu0
        %v2480 = vadd.f32 0.0, %v2479
        %v2481 = vpop.f32.mrf.mxu0
        %2482 = vmatprep.mubr.bf16.mxu0 0
        %2483 = vmatmul.mubr.bf16.gmra.mxu0 %v2283
        %v2484 = vpop.f32.mrf.mxu0
        %v2485 = vadd.f32 0.0, %v2484
        %v2486 = vpop.f32.mrf.mxu0
        %v2487 = vpop.f32.mrf.mxu0
        %v2488 = vadd.f32 0.0, %v2487
        %v2489 = vpop.f32.mrf.mxu0
        %2490 = vmatprep.mubr.bf16.mxu0 0
        %2491 = vmatmul.mubr.bf16.gmra.mxu0 %v2284
        %v2492 = vpop.f32.mrf.mxu0
        %v2493 = vadd.f32 0.0, %v2492
        %v2494 = vpop.f32.mrf.mxu0
        %v2495 = vpop.f32.mrf.mxu0
        %v2496 = vadd.f32 0.0, %v2495
        %v2497 = vpop.f32.mrf.mxu0
        %2498 = vmatprep.mubr.bf16.mxu0 0
        %2499 = vmatmul.mubr.bf16.gmra.mxu0 %v2285
        %v2500 = vpop.f32.mrf.mxu0
        %v2501 = vadd.f32 0.0, %v2500
        %v2502 = vpop.f32.mrf.mxu0
        %v2503 = vpop.f32.mrf.mxu0
        %v2504 = vadd.f32 0.0, %v2503
        %v2505 = vpop.f32.mrf.mxu0
        %2506 = vmatprep.mubr.bf16.mxu0 0
        %2507 = vmatmul.mubr.bf16.gmra.mxu0 %v2286
        %v2508 = vpop.f32.mrf.mxu0
        %v2509 = vadd.f32 0.0, %v2508
        %v2510 = vpop.f32.mrf.mxu0
        %v2511 = vpop.f32.mrf.mxu0
        %v2512 = vadd.f32 0.0, %v2511
        %v2513 = vpop.f32.mrf.mxu0
        %2514 = vmatprep.mubr.bf16.mxu0 0
        %2515 = vmatmul.mubr.bf16.gmra.mxu0 %v2287
        %v2516 = vpop.f32.mrf.mxu0
        %v2517 = vadd.f32 0.0, %v2516
        %v2518 = vpop.f32.mrf.mxu0
        %v2519 = vpop.f32.mrf.mxu0
        %v2520 = vadd.f32 0.0, %v2519
        %v2521 = vpop.f32.mrf.mxu0
        %2522 = vmatprep.mubr.bf16.mxu0 0
        %2523 = vmatmul.mubr.bf16.gmra.mxu0 %v2288
        %v2524 = vpop.f32.mrf.mxu0
        %v2525 = vadd.f32 0.0, %v2524
        %v2526 = vpop.f32.mrf.mxu0
        %v2527 = vpop.f32.mrf.mxu0
        %v2528 = vadd.f32 0.0, %v2527
        %v2529 = vpop.f32.mrf.mxu0
        %2530 = vdwg.mxu0
        %2531 = vmatprep.subr.bf16.mxu0 0
        %2532 = vmatpush1.bf16.msra.mxu0 %v2328
        %2533 = vmatprep.subr.bf16.mxu0 0
        %2534 = vmatpush1.bf16.msra.mxu0 %v2327
        %2535 = vmatprep.subr.bf16.mxu0 0
        %2536 = vmatpush1.bf16.msra.mxu0 %v2326
        %2537 = vmatprep.subr.bf16.mxu0 0
        %2538 = vmatpush1.bf16.msra.mxu0 %v2325
        %2539 = vmatprep.subr.bf16.mxu0 0
        %2540 = vmatpush1.bf16.msra.mxu0 %v2324
        %2541 = vmatprep.subr.bf16.mxu0 0
        %2542 = vmatpush1.bf16.msra.mxu0 %v2323
        %2543 = vmatprep.subr.bf16.mxu0 0
        %2544 = vmatpush1.bf16.msra.mxu0 %v2322
        %2545 = vmatprep.subr.bf16.mxu0 0
        %2546 = vmatpush1.bf16.msra.mxu0 %v2321
        %2547 = vmatprep.subr.bf16.mxu0 0
        %2548 = vmatpush2.bf16.msra.mxu0 0
        %2549 = vmatprep.subr.bf16.mxu0 0
        %2550 = vmatpush2.bf16.msra.mxu0 0
        %2551 = vmatprep.subr.bf16.mxu0 0
        %2552 = vmatpush2.bf16.msra.mxu0 0
        %2553 = vmatprep.subr.bf16.mxu0 0
        %2554 = vmatpush2.bf16.msra.mxu0 0
        %2555 = vmatprep.subr.bf16.mxu0 0
        %2556 = vmatpush2.bf16.msra.mxu0 0
        %2557 = vmatprep.subr.bf16.mxu0 0
        %2558 = vmatpush2.bf16.msra.mxu0 0
        %2559 = vmatprep.subr.bf16.mxu0 0
        %2560 = vmatpush2.bf16.msra.mxu0 0
        %2561 = vmatprep.subr.bf16.mxu0 0
        %2562 = vmatpush2.bf16.msra.mxu0 0
        %2563 = vmatprep.mubr.bf16.mxu0 0
        %2564 = vmatmul.mubr.bf16.gmra.mxu0 %v2289
        %v2565 = vpop.f32.mrf.mxu0
        %v2566 = vadd.f32 0.0, %v2565
        %v2567 = vpop.f32.mrf.mxu0
        %v2568 = vpop.f32.mrf.mxu0
        %v2569 = vadd.f32 0.0, %v2568
        %v2570 = vpop.f32.mrf.mxu0
        %2571 = vmatprep.mubr.bf16.mxu0 0
        %2572 = vmatmul.mubr.bf16.gmra.mxu0 %v2290
        %v2573 = vpop.f32.mrf.mxu0
        %v2574 = vadd.f32 0.0, %v2573
        %v2575 = vpop.f32.mrf.mxu0
        %v2576 = vpop.f32.mrf.mxu0
        %v2577 = vadd.f32 0.0, %v2576
        %v2578 = vpop.f32.mrf.mxu0
        %2579 = vmatprep.mubr.bf16.mxu0 0
        %2580 = vmatmul.mubr.bf16.gmra.mxu0 %v2291
        %v2581 = vpop.f32.mrf.mxu0
        %v2582 = vadd.f32 0.0, %v2581
        %v2583 = vpop.f32.mrf.mxu0
        %v2584 = vpop.f32.mrf.mxu0
        %v2585 = vadd.f32 0.0, %v2584
        %v2586 = vpop.f32.mrf.mxu0
        %2587 = vmatprep.mubr.bf16.mxu0 0
        %2588 = vmatmul.mubr.bf16.gmra.mxu0 %v2292
        %v2589 = vpop.f32.mrf.mxu0
        %v2590 = vadd.f32 0.0, %v2589
        %v2591 = vpop.f32.mrf.mxu0
        %v2592 = vpop.f32.mrf.mxu0
        %v2593 = vadd.f32 0.0, %v2592
        %v2594 = vpop.f32.mrf.mxu0
        %2595 = vmatprep.mubr.bf16.mxu0 0
        %2596 = vmatmul.mubr.bf16.gmra.mxu0 %v2293
        %v2597 = vpop.f32.mrf.mxu0
        %v2598 = vadd.f32 0.0, %v2597
        %v2599 = vpop.f32.mrf.mxu0
        %v2600 = vpop.f32.mrf.mxu0
        %v2601 = vadd.f32 0.0, %v2600
        %v2602 = vpop.f32.mrf.mxu0
        %2603 = vmatprep.mubr.bf16.mxu0 0
        %2604 = vmatmul.mubr.bf16.gmra.mxu0 %v2294
        %v2605 = vpop.f32.mrf.mxu0
        %v2606 = vadd.f32 0.0, %v2605
        %v2607 = vpop.f32.mrf.mxu0
        %v2608 = vpop.f32.mrf.mxu0
        %v2609 = vadd.f32 0.0, %v2608
        %v2610 = vpop.f32.mrf.mxu0
        %2611 = vmatprep.mubr.bf16.mxu0 0
        %2612 = vmatmul.mubr.bf16.gmra.mxu0 %v2295
        %v2613 = vpop.f32.mrf.mxu0
        %v2614 = vadd.f32 0.0, %v2613
        %v2615 = vpop.f32.mrf.mxu0
        %v2616 = vpop.f32.mrf.mxu0
        %v2617 = vadd.f32 0.0, %v2616
        %v2618 = vpop.f32.mrf.mxu0
        %2619 = vmatprep.mubr.bf16.mxu0 0
        %2620 = vmatmul.mubr.bf16.gmra.mxu0 %v2296
        %v2621 = vpop.f32.mrf.mxu0
        %v2622 = vadd.f32 0.0, %v2621
        %v2623 = vpop.f32.mrf.mxu0
        %v2624 = vpop.f32.mrf.mxu0
        %v2625 = vadd.f32 0.0, %v2624
        %v2626 = vpop.f32.mrf.mxu0
        %2627 = vdwg.mxu0
        %2628 = vmatprep.subr.bf16.mxu0 0
        %2629 = vmatpush1.bf16.msra.mxu0 %v2336
        %2630 = vmatprep.subr.bf16.mxu0 0
        %2631 = vmatpush1.bf16.msra.mxu0 %v2335
        %2632 = vmatprep.subr.bf16.mxu0 0
        %2633 = vmatpush1.bf16.msra.mxu0 %v2334
        %2634 = vmatprep.subr.bf16.mxu0 0
        %2635 = vmatpush1.bf16.msra.mxu0 %v2333
        %2636 = vmatprep.subr.bf16.mxu0 0
        %2637 = vmatpush1.bf16.msra.mxu0 %v2332
        %2638 = vmatprep.subr.bf16.mxu0 0
        %2639 = vmatpush1.bf16.msra.mxu0 %v2331
        %2640 = vmatprep.subr.bf16.mxu0 0
        %2641 = vmatpush1.bf16.msra.mxu0 %v2330
        %2642 = vmatprep.subr.bf16.mxu0 0
        %2643 = vmatpush1.bf16.msra.mxu0 %v2329
        %2644 = vmatprep.subr.bf16.mxu0 0
        %2645 = vmatpush2.bf16.msra.mxu0 0
        %2646 = vmatprep.subr.bf16.mxu0 0
        %2647 = vmatpush2.bf16.msra.mxu0 0
        %2648 = vmatprep.subr.bf16.mxu0 0
        %2649 = vmatpush2.bf16.msra.mxu0 0
        %2650 = vmatprep.subr.bf16.mxu0 0
        %2651 = vmatpush2.bf16.msra.mxu0 0
        %2652 = vmatprep.subr.bf16.mxu0 0
        %2653 = vmatpush2.bf16.msra.mxu0 0
        %2654 = vmatprep.subr.bf16.mxu0 0
        %2655 = vmatpush2.bf16.msra.mxu0 0
        %2656 = vmatprep.subr.bf16.mxu0 0
        %2657 = vmatpush2.bf16.msra.mxu0 0
        %2658 = vmatprep.subr.bf16.mxu0 0
        %2659 = vmatpush2.bf16.msra.mxu0 0
        %2660 = vmatprep.mubr.bf16.mxu0 0
        %2661 = vmatmul.mubr.bf16.gmra.mxu0 %v2297
        %v2662 = vpop.f32.mrf.mxu0
        %v2663 = vadd.f32 0.0, %v2662
        %v2664 = vpop.f32.mrf.mxu0
        %v2665 = vpop.f32.mrf.mxu0
        %v2666 = vadd.f32 0.0, %v2665
        %v2667 = vpop.f32.mrf.mxu0
        %2668 = vmatprep.mubr.bf16.mxu0 0
        %2669 = vmatmul.mubr.bf16.gmra.mxu0 %v2298
        %v2670 = vpop.f32.mrf.mxu0
        %v2671 = vadd.f32 0.0, %v2670
        %v2672 = vpop.f32.mrf.mxu0
        %v2673 = vpop.f32.mrf.mxu0
        %v2674 = vadd.f32 0.0, %v2673
        %v2675 = vpop.f32.mrf.mxu0
        %2676 = vmatprep.mubr.bf16.mxu0 0
        %2677 = vmatmul.mubr.bf16.gmra.mxu0 %v2299
        %v2678 = vpop.f32.mrf.mxu0
        %v2679 = vadd.f32 0.0, %v2678
        %v2680 = vpop.f32.mrf.mxu0
        %v2681 = vpop.f32.mrf.mxu0
        %v2682 = vadd.f32 0.0, %v2681
        %v2683 = vpop.f32.mrf.mxu0
        %2684 = vmatprep.mubr.bf16.mxu0 0
        %2685 = vmatmul.mubr.bf16.gmra.mxu0 %v2300
        %v2686 = vpop.f32.mrf.mxu0
        %v2687 = vadd.f32 0.0, %v2686
        %v2688 = vpop.f32.mrf.mxu0
        %v2689 = vpop.f32.mrf.mxu0
        %v2690 = vadd.f32 0.0, %v2689
        %v2691 = vpop.f32.mrf.mxu0
        %2692 = vmatprep.mubr.bf16.mxu0 0
        %2693 = vmatmul.mubr.bf16.gmra.mxu0 %v2301
        %v2694 = vpop.f32.mrf.mxu0
        %v2695 = vadd.f32 0.0, %v2694
        %v2696 = vpop.f32.mrf.mxu0
        %v2697 = vpop.f32.mrf.mxu0
        %v2698 = vadd.f32 0.0, %v2697
        %v2699 = vpop.f32.mrf.mxu0
        %2700 = vmatprep.mubr.bf16.mxu0 0
        %2701 = vmatmul.mubr.bf16.gmra.mxu0 %v2302
        %v2702 = vpop.f32.mrf.mxu0
        %v2703 = vadd.f32 0.0, %v2702
        %v2704 = vpop.f32.mrf.mxu0
        %v2705 = vpop.f32.mrf.mxu0
        %v2706 = vadd.f32 0.0, %v2705
        %v2707 = vpop.f32.mrf.mxu0
        %2708 = vmatprep.mubr.bf16.mxu0 0
        %2709 = vmatmul.mubr.bf16.gmra.mxu0 %v2303
        %v2710 = vpop.f32.mrf.mxu0
        %v2711 = vadd.f32 0.0, %v2710
        %v2712 = vpop.f32.mrf.mxu0
        %v2713 = vpop.f32.mrf.mxu0
        %v2714 = vadd.f32 0.0, %v2713
        %v2715 = vpop.f32.mrf.mxu0
        %2716 = vmatprep.mubr.bf16.mxu0 0
        %2717 = vmatmul.mubr.bf16.gmra.mxu0 %v2304
        %v2718 = vpop.f32.mrf.mxu0
        %v2719 = vadd.f32 0.0, %v2718
        %v2720 = vpop.f32.mrf.mxu0
        %v2721 = vpop.f32.mrf.mxu0
        %v2722 = vadd.f32 0.0, %v2721
        %v2723 = vpop.f32.mrf.mxu0
        %2724 = vdwg.mxu0
        %v2725 = vpack.c.bf16 %v2375, %v2372
        %v2726 = vpack.c.bf16 %v2383, %v2380
        %v2727 = vpack.c.bf16 %v2391, %v2388
        %v2728 = vpack.c.bf16 %v2399, %v2396
        %v2729 = vpack.c.bf16 %v2407, %v2404
        %v2730 = vpack.c.bf16 %v2415, %v2412
        %v2731 = vpack.c.bf16 %v2423, %v2420
        %v2732 = vpack.c.bf16 %v2431, %v2428
        %v2733 = vpack.c.bf16 %v2472, %v2469
        %v2734 = vpack.c.bf16 %v2480, %v2477
        %v2735 = vpack.c.bf16 %v2488, %v2485
        %v2736 = vpack.c.bf16 %v2496, %v2493
        %v2737 = vpack.c.bf16 %v2504, %v2501
        %v2738 = vpack.c.bf16 %v2512, %v2509
        %v2739 = vpack.c.bf16 %v2520, %v2517
        %v2740 = vpack.c.bf16 %v2528, %v2525
        %v2741 = vpack.c.bf16 %v2569, %v2566
        %v2742 = vpack.c.bf16 %v2577, %v2574
        %v2743 = vpack.c.bf16 %v2585, %v2582
        %v2744 = vpack.c.bf16 %v2593, %v2590
        %v2745 = vpack.c.bf16 %v2601, %v2598
        %v2746 = vpack.c.bf16 %v2609, %v2606
        %v2747 = vpack.c.bf16 %v2617, %v2614
        %v2748 = vpack.c.bf16 %v2625, %v2622
        %v2749 = vpack.c.bf16 %v2666, %v2663
        %v2750 = vpack.c.bf16 %v2674, %v2671
        %v2751 = vpack.c.bf16 %v2682, %v2679
        %v2752 = vpack.c.bf16 %v2690, %v2687
        %v2753 = vpack.c.bf16 %v2698, %v2695
        %v2754 = vpack.c.bf16 %v2706, %v2703
        %v2755 = vpack.c.bf16 %v2714, %v2711
        %v2756 = vpack.c.bf16 %v2722, %v2719
        %v2757 = vld [vmem:[#allocation7] sm:$0xf]
        %v2758 = vld [vmem:[#allocation7 + $0x4] sm:$0xf]
        %v2759 = vld [vmem:[#allocation7 + $0x8] sm:$0xf]
        %v2760 = vld [vmem:[#allocation7 + $0xc] sm:$0xf]
        %v2761 = vld [vmem:[#allocation7 + $0x10] sm:$0xf]
        %v2762 = vld [vmem:[#allocation7 + $0x14] sm:$0xf]
        %v2763 = vld [vmem:[#allocation7 + $0x18] sm:$0xf]
        %v2764 = vld [vmem:[#allocation7 + $0x1c] sm:$0xf]
        %v2765 = vld [vmem:[#allocation7 + $0x20] sm:$0xf]
        %v2766 = vld [vmem:[#allocation7 + $0x24] sm:$0xf]
        %v2767 = vld [vmem:[#allocation7 + $0x28] sm:$0xf]
        %v2768 = vld [vmem:[#allocation7 + $0x2c] sm:$0xf]
        %v2769 = vld [vmem:[#allocation7 + $0x30] sm:$0xf]
        %v2770 = vld [vmem:[#allocation7 + $0x34] sm:$0xf]
        %v2771 = vld [vmem:[#allocation7 + $0x38] sm:$0xf]
        %v2772 = vld [vmem:[#allocation7 + $0x3c] sm:$0xf]
        %v2773 = vld [vmem:[%s4] sm:$0x1]
        %v2775 = vlaneseq
        %v2776 = vshrl.u32 %v2775, 7
        %v2777 = vsub.s32 0, %v2776
        %v2778 = vrot.slane %v2773, %v2777
        %v2796 = vunpack.c.l.b16 %v2757
        %v2797 = vunpack.c.l.b16 %v2758
        %v2798 = vunpack.c.l.b16 %v2759
        %v2799 = vunpack.c.l.b16 %v2760
        %v2800 = vunpack.c.l.b16 %v2761
        %v2801 = vunpack.c.l.b16 %v2762
        %v2802 = vunpack.c.l.b16 %v2763
        %v2803 = vunpack.c.l.b16 %v2764
        %v2804 = vunpack.c.l.b16 %v2765
        %v2805 = vunpack.c.l.b16 %v2766
        %v2806 = vunpack.c.l.b16 %v2767
        %v2807 = vunpack.c.l.b16 %v2768
        %v2808 = vunpack.c.l.b16 %v2769
        %v2809 = vunpack.c.l.b16 %v2770
        %v2810 = vunpack.c.l.b16 %v2771
        %v2811 = vunpack.c.l.b16 %v2772
        %v2812 = vpack.c.b16 %v2797, %v2796
        %v2813 = vpack.c.b16 %v2799, %v2798
        %v2814 = vpack.c.b16 %v2801, %v2800
        %v2815 = vpack.c.b16 %v2803, %v2802
        %v2816 = vpack.c.b16 %v2805, %v2804
        %v2817 = vpack.c.b16 %v2807, %v2806
        %v2818 = vpack.c.b16 %v2809, %v2808
        %v2819 = vpack.c.b16 %v2811, %v2810
        %2828 = vmatprep.subr.bf16.mxu0 0
        %2829 = vmatpush1.bf16.msra.mxu0 %v2819
        %2830 = vmatprep.subr.bf16.mxu0 0
        %2831 = vmatpush1.bf16.msra.mxu0 %v2818
        %2832 = vmatprep.subr.bf16.mxu0 0
        %2833 = vmatpush1.bf16.msra.mxu0 %v2817
        %2834 = vmatprep.subr.bf16.mxu0 0
        %2835 = vmatpush1.bf16.msra.mxu0 %v2816
        %2836 = vmatprep.subr.bf16.mxu0 0
        %2837 = vmatpush1.bf16.msra.mxu0 %v2815
        %2838 = vmatprep.subr.bf16.mxu0 0
        %2839 = vmatpush1.bf16.msra.mxu0 %v2814
        %2840 = vmatprep.subr.bf16.mxu0 0
        %2841 = vmatpush1.bf16.msra.mxu0 %v2813
        %2842 = vmatprep.subr.bf16.mxu0 0
        %2843 = vmatpush1.bf16.msra.mxu0 %v2812
        %2844 = vmatprep.subr.bf16.mxu0 0
        %2845 = vmatpush2.bf16.msra.mxu0 0
        %2846 = vmatprep.subr.bf16.mxu0 0
        %2847 = vmatpush2.bf16.msra.mxu0 0
        %2848 = vmatprep.subr.bf16.mxu0 0
        %2849 = vmatpush2.bf16.msra.mxu0 0
        %2850 = vmatprep.subr.bf16.mxu0 0
        %2851 = vmatpush2.bf16.msra.mxu0 0
        %2852 = vmatprep.subr.bf16.mxu0 0
        %2853 = vmatpush2.bf16.msra.mxu0 0
        %2854 = vmatprep.subr.bf16.mxu0 0
        %2855 = vmatpush2.bf16.msra.mxu0 0
        %2856 = vmatprep.subr.bf16.mxu0 0
        %2857 = vmatpush2.bf16.msra.mxu0 0
        %2858 = vmatprep.subr.bf16.mxu0 0
        %2859 = vmatpush2.bf16.msra.mxu0 0
        %2860 = vmatprep.mubr.bf16.mxu0 0
        %2861 = vmatmul.mubr.bf16.gmra.mxu0 %v2725
        %v2862 = vpop.f32.mrf.mxu0
        %v2863 = vadd.f32 %v2778, %v2862
        %v2864 = vpop.f32.mrf.mxu0
        %v2865 = vpop.f32.mrf.mxu0
        %v2866 = vadd.f32 %v2778, %v2865
        %v2867 = vpop.f32.mrf.mxu0
        %2868 = vmatprep.mubr.bf16.mxu0 0
        %2869 = vmatmul.mubr.bf16.gmra.mxu0 %v2726
        %v2870 = vpop.f32.mrf.mxu0
        %v2871 = vadd.f32 %v2778, %v2870
        %v2872 = vpop.f32.mrf.mxu0
        %v2873 = vpop.f32.mrf.mxu0
        %v2874 = vadd.f32 %v2778, %v2873
        %v2875 = vpop.f32.mrf.mxu0
        %2876 = vmatprep.mubr.bf16.mxu0 0
        %2877 = vmatmul.mubr.bf16.gmra.mxu0 %v2727
        %v2878 = vpop.f32.mrf.mxu0
        %v2879 = vadd.f32 %v2778, %v2878
        %v2880 = vpop.f32.mrf.mxu0
        %v2881 = vpop.f32.mrf.mxu0
        %v2882 = vadd.f32 %v2778, %v2881
        %v2883 = vpop.f32.mrf.mxu0
        %2884 = vmatprep.mubr.bf16.mxu0 0
        %2885 = vmatmul.mubr.bf16.gmra.mxu0 %v2728
        %v2886 = vpop.f32.mrf.mxu0
        %v2887 = vadd.f32 %v2778, %v2886
        %v2888 = vpop.f32.mrf.mxu0
        %v2889 = vpop.f32.mrf.mxu0
        %v2890 = vadd.f32 %v2778, %v2889
        %v2891 = vpop.f32.mrf.mxu0
        %2892 = vmatprep.mubr.bf16.mxu0 0
        %2893 = vmatmul.mubr.bf16.gmra.mxu0 %v2729
        %v2894 = vpop.f32.mrf.mxu0
        %v2895 = vadd.f32 %v2778, %v2894
        %v2896 = vpop.f32.mrf.mxu0
        %v2897 = vpop.f32.mrf.mxu0
        %v2898 = vadd.f32 %v2778, %v2897
        %v2899 = vpop.f32.mrf.mxu0
        %2900 = vmatprep.mubr.bf16.mxu0 0
        %2901 = vmatmul.mubr.bf16.gmra.mxu0 %v2730
        %v2902 = vpop.f32.mrf.mxu0
        %v2903 = vadd.f32 %v2778, %v2902
        %v2904 = vpop.f32.mrf.mxu0
        %v2905 = vpop.f32.mrf.mxu0
        %v2906 = vadd.f32 %v2778, %v2905
        %v2907 = vpop.f32.mrf.mxu0
        %2908 = vmatprep.mubr.bf16.mxu0 0
        %2909 = vmatmul.mubr.bf16.gmra.mxu0 %v2731
        %v2910 = vpop.f32.mrf.mxu0
        %v2911 = vadd.f32 %v2778, %v2910
        %v2912 = vpop.f32.mrf.mxu0
        %v2913 = vpop.f32.mrf.mxu0
        %v2914 = vadd.f32 %v2778, %v2913
        %v2915 = vpop.f32.mrf.mxu0
        %2916 = vmatprep.mubr.bf16.mxu0 0
        %2917 = vmatmul.mubr.bf16.gmra.mxu0 %v2732
        %v2918 = vpop.f32.mrf.mxu0
        %v2919 = vadd.f32 %v2778, %v2918
        %v2920 = vpop.f32.mrf.mxu0
        %v2921 = vpop.f32.mrf.mxu0
        %v2922 = vadd.f32 %v2778, %v2921
        %v2923 = vpop.f32.mrf.mxu0
        %2924 = vmatprep.mubr.bf16.mxu0 0
        %2925 = vmatmul.mubr.bf16.gmra.mxu0 %v2733
        %v2926 = vpop.f32.mrf.mxu0
        %v2927 = vadd.f32 %v2778, %v2926
        %v2928 = vpop.f32.mrf.mxu0
        %v2929 = vpop.f32.mrf.mxu0
        %v2930 = vadd.f32 %v2778, %v2929
        %v2931 = vpop.f32.mrf.mxu0
        %2932 = vmatprep.mubr.bf16.mxu0 0
        %2933 = vmatmul.mubr.bf16.gmra.mxu0 %v2734
        %v2934 = vpop.f32.mrf.mxu0
        %v2935 = vadd.f32 %v2778, %v2934
        %v2936 = vpop.f32.mrf.mxu0
        %v2937 = vpop.f32.mrf.mxu0
        %v2938 = vadd.f32 %v2778, %v2937
        %v2939 = vpop.f32.mrf.mxu0
        %2940 = vmatprep.mubr.bf16.mxu0 0
        %2941 = vmatmul.mubr.bf16.gmra.mxu0 %v2735
        %v2942 = vpop.f32.mrf.mxu0
        %v2943 = vadd.f32 %v2778, %v2942
        %v2944 = vpop.f32.mrf.mxu0
        %v2945 = vpop.f32.mrf.mxu0
        %v2946 = vadd.f32 %v2778, %v2945
        %v2947 = vpop.f32.mrf.mxu0
        %2948 = vmatprep.mubr.bf16.mxu0 0
        %2949 = vmatmul.mubr.bf16.gmra.mxu0 %v2736
        %v2950 = vpop.f32.mrf.mxu0
        %v2951 = vadd.f32 %v2778, %v2950
        %v2952 = vpop.f32.mrf.mxu0
        %v2953 = vpop.f32.mrf.mxu0
        %v2954 = vadd.f32 %v2778, %v2953
        %v2955 = vpop.f32.mrf.mxu0
        %2956 = vmatprep.mubr.bf16.mxu0 0
        %2957 = vmatmul.mubr.bf16.gmra.mxu0 %v2737
        %v2958 = vpop.f32.mrf.mxu0
        %v2959 = vadd.f32 %v2778, %v2958
        %v2960 = vpop.f32.mrf.mxu0
        %v2961 = vpop.f32.mrf.mxu0
        %v2962 = vadd.f32 %v2778, %v2961
        %v2963 = vpop.f32.mrf.mxu0
        %2964 = vmatprep.mubr.bf16.mxu0 0
        %2965 = vmatmul.mubr.bf16.gmra.mxu0 %v2738
        %v2966 = vpop.f32.mrf.mxu0
        %v2967 = vadd.f32 %v2778, %v2966
        %v2968 = vpop.f32.mrf.mxu0
        %v2969 = vpop.f32.mrf.mxu0
        %v2970 = vadd.f32 %v2778, %v2969
        %v2971 = vpop.f32.mrf.mxu0
        %2972 = vmatprep.mubr.bf16.mxu0 0
        %2973 = vmatmul.mubr.bf16.gmra.mxu0 %v2739
        %v2974 = vpop.f32.mrf.mxu0
        %v2975 = vadd.f32 %v2778, %v2974
        %v2976 = vpop.f32.mrf.mxu0
        %v2977 = vpop.f32.mrf.mxu0
        %v2978 = vadd.f32 %v2778, %v2977
        %v2979 = vpop.f32.mrf.mxu0
        %2980 = vmatprep.mubr.bf16.mxu0 0
        %2981 = vmatmul.mubr.bf16.gmra.mxu0 %v2740
        %v2982 = vpop.f32.mrf.mxu0
        %v2983 = vadd.f32 %v2778, %v2982
        %v2984 = vpop.f32.mrf.mxu0
        %v2985 = vpop.f32.mrf.mxu0
        %v2986 = vadd.f32 %v2778, %v2985
        %v2987 = vpop.f32.mrf.mxu0
        %2988 = vmatprep.mubr.bf16.mxu0 0
        %2989 = vmatmul.mubr.bf16.gmra.mxu0 %v2741
        %v2990 = vpop.f32.mrf.mxu0
        %v2991 = vadd.f32 %v2778, %v2990
        %v2992 = vpop.f32.mrf.mxu0
        %v2993 = vpop.f32.mrf.mxu0
        %v2994 = vadd.f32 %v2778, %v2993
        %v2995 = vpop.f32.mrf.mxu0
        %2996 = vmatprep.mubr.bf16.mxu0 0
        %2997 = vmatmul.mubr.bf16.gmra.mxu0 %v2742
        %v2998 = vpop.f32.mrf.mxu0
        %v2999 = vadd.f32 %v2778, %v2998
        %v3000 = vpop.f32.mrf.mxu0
        %v3001 = vpop.f32.mrf.mxu0
        %v3002 = vadd.f32 %v2778, %v3001
        %v3003 = vpop.f32.mrf.mxu0
        %3004 = vmatprep.mubr.bf16.mxu0 0
        %3005 = vmatmul.mubr.bf16.gmra.mxu0 %v2743
        %v3006 = vpop.f32.mrf.mxu0
        %v3007 = vadd.f32 %v2778, %v3006
        %v3008 = vpop.f32.mrf.mxu0
        %v3009 = vpop.f32.mrf.mxu0
        %v3010 = vadd.f32 %v2778, %v3009
        %v3011 = vpop.f32.mrf.mxu0
        %3012 = vmatprep.mubr.bf16.mxu0 0
        %3013 = vmatmul.mubr.bf16.gmra.mxu0 %v2744
        %v3014 = vpop.f32.mrf.mxu0
        %v3015 = vadd.f32 %v2778, %v3014
        %v3016 = vpop.f32.mrf.mxu0
        %v3017 = vpop.f32.mrf.mxu0
        %v3018 = vadd.f32 %v2778, %v3017
        %v3019 = vpop.f32.mrf.mxu0
        %3020 = vmatprep.mubr.bf16.mxu0 0
        %3021 = vmatmul.mubr.bf16.gmra.mxu0 %v2745
        %v3022 = vpop.f32.mrf.mxu0
        %v3023 = vadd.f32 %v2778, %v3022
        %v3024 = vpop.f32.mrf.mxu0
        %v3025 = vpop.f32.mrf.mxu0
        %v3026 = vadd.f32 %v2778, %v3025
        %v3027 = vpop.f32.mrf.mxu0
        %3028 = vmatprep.mubr.bf16.mxu0 0
        %3029 = vmatmul.mubr.bf16.gmra.mxu0 %v2746
        %v3030 = vpop.f32.mrf.mxu0
        %v3031 = vadd.f32 %v2778, %v3030
        %v3032 = vpop.f32.mrf.mxu0
        %v3033 = vpop.f32.mrf.mxu0
        %v3034 = vadd.f32 %v2778, %v3033
        %v3035 = vpop.f32.mrf.mxu0
        %3036 = vmatprep.mubr.bf16.mxu0 0
        %3037 = vmatmul.mubr.bf16.gmra.mxu0 %v2747
        %v3038 = vpop.f32.mrf.mxu0
        %v3039 = vadd.f32 %v2778, %v3038
        %v3040 = vpop.f32.mrf.mxu0
        %v3041 = vpop.f32.mrf.mxu0
        %v3042 = vadd.f32 %v2778, %v3041
        %v3043 = vpop.f32.mrf.mxu0
        %3044 = vmatprep.mubr.bf16.mxu0 0
        %3045 = vmatmul.mubr.bf16.gmra.mxu0 %v2748
        %v3046 = vpop.f32.mrf.mxu0
        %v3047 = vadd.f32 %v2778, %v3046
        %v3048 = vpop.f32.mrf.mxu0
        %v3049 = vpop.f32.mrf.mxu0
        %v3050 = vadd.f32 %v2778, %v3049
        %v3051 = vpop.f32.mrf.mxu0
        %3052 = vmatprep.mubr.bf16.mxu0 0
        %3053 = vmatmul.mubr.bf16.gmra.mxu0 %v2749
        %v3054 = vpop.f32.mrf.mxu0
        %v3055 = vadd.f32 %v2778, %v3054
        %v3056 = vpop.f32.mrf.mxu0
        %v3057 = vpop.f32.mrf.mxu0
        %v3058 = vadd.f32 %v2778, %v3057
        %v3059 = vpop.f32.mrf.mxu0
        %3060 = vmatprep.mubr.bf16.mxu0 0
        %3061 = vmatmul.mubr.bf16.gmra.mxu0 %v2750
        %v3062 = vpop.f32.mrf.mxu0
        %v3063 = vadd.f32 %v2778, %v3062
        %v3064 = vpop.f32.mrf.mxu0
        %v3065 = vpop.f32.mrf.mxu0
        %v3066 = vadd.f32 %v2778, %v3065
        %v3067 = vpop.f32.mrf.mxu0
        %3068 = vmatprep.mubr.bf16.mxu0 0
        %3069 = vmatmul.mubr.bf16.gmra.mxu0 %v2751
        %v3070 = vpop.f32.mrf.mxu0
        %v3071 = vadd.f32 %v2778, %v3070
        %v3072 = vpop.f32.mrf.mxu0
        %v3073 = vpop.f32.mrf.mxu0
        %v3074 = vadd.f32 %v2778, %v3073
        %v3075 = vpop.f32.mrf.mxu0
        %3076 = vmatprep.mubr.bf16.mxu0 0
        %3077 = vmatmul.mubr.bf16.gmra.mxu0 %v2752
        %v3078 = vpop.f32.mrf.mxu0
        %v3079 = vadd.f32 %v2778, %v3078
        %v3080 = vpop.f32.mrf.mxu0
        %v3081 = vpop.f32.mrf.mxu0
        %v3082 = vadd.f32 %v2778, %v3081
        %v3083 = vpop.f32.mrf.mxu0
        %3084 = vmatprep.mubr.bf16.mxu0 0
        %3085 = vmatmul.mubr.bf16.gmra.mxu0 %v2753
        %v3086 = vpop.f32.mrf.mxu0
        %v3087 = vadd.f32 %v2778, %v3086
        %v3088 = vpop.f32.mrf.mxu0
        %v3089 = vpop.f32.mrf.mxu0
        %v3090 = vadd.f32 %v2778, %v3089
        %v3091 = vpop.f32.mrf.mxu0
        %3092 = vmatprep.mubr.bf16.mxu0 0
        %3093 = vmatmul.mubr.bf16.gmra.mxu0 %v2754
        %v3094 = vpop.f32.mrf.mxu0
        %v3095 = vadd.f32 %v2778, %v3094
        %v3096 = vpop.f32.mrf.mxu0
        %v3097 = vpop.f32.mrf.mxu0
        %v3098 = vadd.f32 %v2778, %v3097
        %v3099 = vpop.f32.mrf.mxu0
        %3100 = vmatprep.mubr.bf16.mxu0 0
        %3101 = vmatmul.mubr.bf16.gmra.mxu0 %v2755
        %v3102 = vpop.f32.mrf.mxu0
        %v3103 = vadd.f32 %v2778, %v3102
        %v3104 = vpop.f32.mrf.mxu0
        %v3105 = vpop.f32.mrf.mxu0
        %v3106 = vadd.f32 %v2778, %v3105
        %v3107 = vpop.f32.mrf.mxu0
        %3108 = vmatprep.mubr.bf16.mxu0 0
        %3109 = vmatmul.mubr.bf16.gmra.mxu0 %v2756
        %v3110 = vpop.f32.mrf.mxu0
        %v3111 = vadd.f32 %v2778, %v3110
        %v3112 = vpop.f32.mrf.mxu0
        %v3113 = vpop.f32.mrf.mxu0
        %v3114 = vadd.f32 %v2778, %v3113
        %v3115 = vpop.f32.mrf.mxu0
        %3116 = vdwg.mxu0
        %v3117 = vadd.f32 %v2863, %v330
        %v3118 = vadd.f32 %v2866, %v331
        %v3119 = vadd.f32 %v2871, %v332
        %v3120 = vadd.f32 %v2874, %v333
        %v3121 = vadd.f32 %v2879, %v334
        %v3122 = vadd.f32 %v2882, %v335
        %v3123 = vadd.f32 %v2887, %v336
        %v3124 = vadd.f32 %v2890, %v337
        %v3125 = vadd.f32 %v2895, %v338
        %v3126 = vadd.f32 %v2898, %v339
        %v3127 = vadd.f32 %v2903, %v340
        %v3128 = vadd.f32 %v2906, %v341
        %v3129 = vadd.f32 %v2911, %v342
        %v3130 = vadd.f32 %v2914, %v343
        %v3131 = vadd.f32 %v2919, %v344
        %v3132 = vadd.f32 %v2922, %v345
        %v3133 = vadd.f32 %v2927, %v346
        %v3134 = vadd.f32 %v2930, %v347
        %v3135 = vadd.f32 %v2935, %v348
        %v3136 = vadd.f32 %v2938, %v349
        %v3137 = vadd.f32 %v2943, %v350
        %v3138 = vadd.f32 %v2946, %v351
        %v3139 = vadd.f32 %v2951, %v352
        %v3140 = vadd.f32 %v2954, %v353
        %v3141 = vadd.f32 %v2959, %v354
        %v3142 = vadd.f32 %v2962, %v355
        %v3143 = vadd.f32 %v2967, %v356
        %v3144 = vadd.f32 %v2970, %v357
        %v3145 = vadd.f32 %v2975, %v358
        %v3146 = vadd.f32 %v2978, %v359
        %v3147 = vadd.f32 %v2983, %v360
        %v3148 = vadd.f32 %v2986, %v361
        %v3149 = vadd.f32 %v2991, %v362
        %v3150 = vadd.f32 %v2994, %v363
        %v3151 = vadd.f32 %v2999, %v364
        %v3152 = vadd.f32 %v3002, %v365
        %v3153 = vadd.f32 %v3007, %v366
        %v3154 = vadd.f32 %v3010, %v367
        %v3155 = vadd.f32 %v3015, %v368
        %v3156 = vadd.f32 %v3018, %v369
        %v3157 = vadd.f32 %v3023, %v370
        %v3158 = vadd.f32 %v3026, %v371
        %v3159 = vadd.f32 %v3031, %v372
        %v3160 = vadd.f32 %v3034, %v373
        %v3161 = vadd.f32 %v3039, %v374
        %v3162 = vadd.f32 %v3042, %v375
        %v3163 = vadd.f32 %v3047, %v376
        %v3164 = vadd.f32 %v3050, %v377
        %v3165 = vadd.f32 %v3055, %v378
        %v3166 = vadd.f32 %v3058, %v379
        %v3167 = vadd.f32 %v3063, %v380
        %v3168 = vadd.f32 %v3066, %v381
        %v3169 = vadd.f32 %v3071, %v382
        %v3170 = vadd.f32 %v3074, %v383
        %v3171 = vadd.f32 %v3079, %v384
        %v3172 = vadd.f32 %v3082, %v385
        %v3173 = vadd.f32 %v3087, %v386
        %v3174 = vadd.f32 %v3090, %v387
        %v3175 = vadd.f32 %v3095, %v388
        %v3176 = vadd.f32 %v3098, %v389
        %v3177 = vadd.f32 %v3103, %v390
        %v3178 = vadd.f32 %v3106, %v391
        %v3179 = vadd.f32 %v3111, %v392
        %v3180 = vadd.f32 %v3114, %v393
        %v3181 = vld [vmem:[%s5] sm:$0x1]
        %v3182 = vld [vmem:[%s6] sm:$0x1]
        %3183 = vadd.xlane.f32.xlu0 %v3117
        %v3184 = vpop.xlane.xlu0 %3183
        %3185 = vadd.xlane.f32.xlu0 %v3118
        %v3186 = vpop.xlane.xlu0 %3185
        %3187 = vadd.xlane.f32.xlu0 %v3119
        %v3188 = vpop.xlane.xlu0 %3187
        %3189 = vadd.xlane.f32.xlu0 %v3120
        %v3190 = vpop.xlane.xlu0 %3189
        %3191 = vadd.xlane.f32.xlu0 %v3121
        %v3192 = vpop.xlane.xlu0 %3191
        %3193 = vadd.xlane.f32.xlu0 %v3122
        %v3194 = vpop.xlane.xlu0 %3193
        %3195 = vadd.xlane.f32.xlu0 %v3123
        %v3196 = vpop.xlane.xlu0 %3195
        %3197 = vadd.xlane.f32.xlu0 %v3124
        %v3198 = vpop.xlane.xlu0 %3197
        %3199 = vadd.xlane.f32.xlu0 %v3125
        %v3200 = vpop.xlane.xlu0 %3199
        %3201 = vadd.xlane.f32.xlu0 %v3126
        %v3202 = vpop.xlane.xlu0 %3201
        %3203 = vadd.xlane.f32.xlu0 %v3127
        %v3204 = vpop.xlane.xlu0 %3203
        %3205 = vadd.xlane.f32.xlu0 %v3128
        %v3206 = vpop.xlane.xlu0 %3205
        %3207 = vadd.xlane.f32.xlu0 %v3129
        %v3208 = vpop.xlane.xlu0 %3207
        %3209 = vadd.xlane.f32.xlu0 %v3130
        %v3210 = vpop.xlane.xlu0 %3209
        %3211 = vadd.xlane.f32.xlu0 %v3131
        %v3212 = vpop.xlane.xlu0 %3211
        %3213 = vadd.xlane.f32.xlu0 %v3132
        %v3214 = vpop.xlane.xlu0 %3213
        %3215 = vadd.xlane.f32.xlu0 %v3133
        %v3216 = vpop.xlane.xlu0 %3215
        %3217 = vadd.xlane.f32.xlu0 %v3134
        %v3218 = vpop.xlane.xlu0 %3217
        %3219 = vadd.xlane.f32.xlu0 %v3135
        %v3220 = vpop.xlane.xlu0 %3219
        %3221 = vadd.xlane.f32.xlu0 %v3136
        %v3222 = vpop.xlane.xlu0 %3221
        %3223 = vadd.xlane.f32.xlu0 %v3137
        %v3224 = vpop.xlane.xlu0 %3223
        %3225 = vadd.xlane.f32.xlu0 %v3138
        %v3226 = vpop.xlane.xlu0 %3225
        %3227 = vadd.xlane.f32.xlu0 %v3139
        %v3228 = vpop.xlane.xlu0 %3227
        %3229 = vadd.xlane.f32.xlu0 %v3140
        %v3230 = vpop.xlane.xlu0 %3229
        %3231 = vadd.xlane.f32.xlu0 %v3141
        %v3232 = vpop.xlane.xlu0 %3231
        %3233 = vadd.xlane.f32.xlu0 %v3142
        %v3234 = vpop.xlane.xlu0 %3233
        %3235 = vadd.xlane.f32.xlu0 %v3143
        %v3236 = vpop.xlane.xlu0 %3235
        %3237 = vadd.xlane.f32.xlu0 %v3144
        %v3238 = vpop.xlane.xlu0 %3237
        %3239 = vadd.xlane.f32.xlu0 %v3145
        %v3240 = vpop.xlane.xlu0 %3239
        %3241 = vadd.xlane.f32.xlu0 %v3146
        %v3242 = vpop.xlane.xlu0 %3241
        %3243 = vadd.xlane.f32.xlu0 %v3147
        %v3244 = vpop.xlane.xlu0 %3243
        %3245 = vadd.xlane.f32.xlu0 %v3148
        %v3246 = vpop.xlane.xlu0 %3245
        %3247 = vadd.xlane.f32.xlu0 %v3149
        %v3248 = vpop.xlane.xlu0 %3247
        %3249 = vadd.xlane.f32.xlu0 %v3150
        %v3250 = vpop.xlane.xlu0 %3249
        %3251 = vadd.xlane.f32.xlu0 %v3151
        %v3252 = vpop.xlane.xlu0 %3251
        %3253 = vadd.xlane.f32.xlu0 %v3152
        %v3254 = vpop.xlane.xlu0 %3253
        %3255 = vadd.xlane.f32.xlu0 %v3153
        %v3256 = vpop.xlane.xlu0 %3255
        %3257 = vadd.xlane.f32.xlu0 %v3154
        %v3258 = vpop.xlane.xlu0 %3257
        %3259 = vadd.xlane.f32.xlu0 %v3155
        %v3260 = vpop.xlane.xlu0 %3259
        %3261 = vadd.xlane.f32.xlu0 %v3156
        %v3262 = vpop.xlane.xlu0 %3261
        %3263 = vadd.xlane.f32.xlu0 %v3157
        %v3264 = vpop.xlane.xlu0 %3263
        %3265 = vadd.xlane.f32.xlu0 %v3158
        %v3266 = vpop.xlane.xlu0 %3265
        %3267 = vadd.xlane.f32.xlu0 %v3159
        %v3268 = vpop.xlane.xlu0 %3267
        %3269 = vadd.xlane.f32.xlu0 %v3160
        %v3270 = vpop.xlane.xlu0 %3269
        %3271 = vadd.xlane.f32.xlu0 %v3161
        %v3272 = vpop.xlane.xlu0 %3271
        %3273 = vadd.xlane.f32.xlu0 %v3162
        %v3274 = vpop.xlane.xlu0 %3273
        %3275 = vadd.xlane.f32.xlu0 %v3163
        %v3276 = vpop.xlane.xlu0 %3275
        %3277 = vadd.xlane.f32.xlu0 %v3164
        %v3278 = vpop.xlane.xlu0 %3277
        %3279 = vadd.xlane.f32.xlu0 %v3165
        %v3280 = vpop.xlane.xlu0 %3279
        %3281 = vadd.xlane.f32.xlu0 %v3166
        %v3282 = vpop.xlane.xlu0 %3281
        %3283 = vadd.xlane.f32.xlu0 %v3167
        %v3284 = vpop.xlane.xlu0 %3283
        %3285 = vadd.xlane.f32.xlu0 %v3168
        %v3286 = vpop.xlane.xlu0 %3285
        %3287 = vadd.xlane.f32.xlu0 %v3169
        %v3288 = vpop.xlane.xlu0 %3287
        %3289 = vadd.xlane.f32.xlu0 %v3170
        %v3290 = vpop.xlane.xlu0 %3289
        %3291 = vadd.xlane.f32.xlu0 %v3171
        %v3292 = vpop.xlane.xlu0 %3291
        %3293 = vadd.xlane.f32.xlu0 %v3172
        %v3294 = vpop.xlane.xlu0 %3293
        %3295 = vadd.xlane.f32.xlu0 %v3173
        %v3296 = vpop.xlane.xlu0 %3295
        %3297 = vadd.xlane.f32.xlu0 %v3174
        %v3298 = vpop.xlane.xlu0 %3297
        %3299 = vadd.xlane.f32.xlu0 %v3175
        %v3300 = vpop.xlane.xlu0 %3299
        %3301 = vadd.xlane.f32.xlu0 %v3176
        %v3302 = vpop.xlane.xlu0 %3301
        %3303 = vadd.xlane.f32.xlu0 %v3177
        %v3304 = vpop.xlane.xlu0 %3303
        %3305 = vadd.xlane.f32.xlu0 %v3178
        %v3306 = vpop.xlane.xlu0 %3305
        %3307 = vadd.xlane.f32.xlu0 %v3179
        %v3308 = vpop.xlane.xlu0 %3307
        %3309 = vadd.xlane.f32.xlu0 %v3180
        %v3310 = vpop.xlane.xlu0 %3309
        %v3311 = vrcp.pop 128.0
        %v3312 = vmul.f32 %v3184, %v3311
        %v3313 = vmul.f32 %v3186, %v3311
        %v3314 = vmul.f32 %v3188, %v3311
        %v3315 = vmul.f32 %v3190, %v3311
        %v3316 = vmul.f32 %v3192, %v3311
        %v3317 = vmul.f32 %v3194, %v3311
        %v3318 = vmul.f32 %v3196, %v3311
        %v3319 = vmul.f32 %v3198, %v3311
        %v3320 = vmul.f32 %v3200, %v3311
        %v3321 = vmul.f32 %v3202, %v3311
        %v3322 = vmul.f32 %v3204, %v3311
        %v3323 = vmul.f32 %v3206, %v3311
        %v3324 = vmul.f32 %v3208, %v3311
        %v3325 = vmul.f32 %v3210, %v3311
        %v3326 = vmul.f32 %v3212, %v3311
        %v3327 = vmul.f32 %v3214, %v3311
        %v3328 = vmul.f32 %v3216, %v3311
        %v3329 = vmul.f32 %v3218, %v3311
        %v3330 = vmul.f32 %v3220, %v3311
        %v3331 = vmul.f32 %v3222, %v3311
        %v3332 = vmul.f32 %v3224, %v3311
        %v3333 = vmul.f32 %v3226, %v3311
        %v3334 = vmul.f32 %v3228, %v3311
        %v3335 = vmul.f32 %v3230, %v3311
        %v3336 = vmul.f32 %v3232, %v3311
        %v3337 = vmul.f32 %v3234, %v3311
        %v3338 = vmul.f32 %v3236, %v3311
        %v3339 = vmul.f32 %v3238, %v3311
        %v3340 = vmul.f32 %v3240, %v3311
        %v3341 = vmul.f32 %v3242, %v3311
        %v3342 = vmul.f32 %v3244, %v3311
        %v3343 = vmul.f32 %v3246, %v3311
        %v3344 = vmul.f32 %v3248, %v3311
        %v3345 = vmul.f32 %v3250, %v3311
        %v3346 = vmul.f32 %v3252, %v3311
        %v3347 = vmul.f32 %v3254, %v3311
        %v3348 = vmul.f32 %v3256, %v3311
        %v3349 = vmul.f32 %v3258, %v3311
        %v3350 = vmul.f32 %v3260, %v3311
        %v3351 = vmul.f32 %v3262, %v3311
        %v3352 = vmul.f32 %v3264, %v3311
        %v3353 = vmul.f32 %v3266, %v3311
        %v3354 = vmul.f32 %v3268, %v3311
        %v3355 = vmul.f32 %v3270, %v3311
        %v3356 = vmul.f32 %v3272, %v3311
        %v3357 = vmul.f32 %v3274, %v3311
        %v3358 = vmul.f32 %v3276, %v3311
        %v3359 = vmul.f32 %v3278, %v3311
        %v3360 = vmul.f32 %v3280, %v3311
        %v3361 = vmul.f32 %v3282, %v3311
        %v3362 = vmul.f32 %v3284, %v3311
        %v3363 = vmul.f32 %v3286, %v3311
        %v3364 = vmul.f32 %v3288, %v3311
        %v3365 = vmul.f32 %v3290, %v3311
        %v3366 = vmul.f32 %v3292, %v3311
        %v3367 = vmul.f32 %v3294, %v3311
        %v3368 = vmul.f32 %v3296, %v3311
        %v3369 = vmul.f32 %v3298, %v3311
        %v3370 = vmul.f32 %v3300, %v3311
        %v3371 = vmul.f32 %v3302, %v3311
        %v3372 = vmul.f32 %v3304, %v3311
        %v3373 = vmul.f32 %v3306, %v3311
        %v3374 = vmul.f32 %v3308, %v3311
        %v3375 = vmul.f32 %v3310, %v3311
        %v3376 = vmul.f32 %v3117, %v3117
        %v3377 = vmul.f32 %v3118, %v3118
        %v3378 = vmul.f32 %v3119, %v3119
        %v3379 = vmul.f32 %v3120, %v3120
        %v3380 = vmul.f32 %v3121, %v3121
        %v3381 = vmul.f32 %v3122, %v3122
        %v3382 = vmul.f32 %v3123, %v3123
        %v3383 = vmul.f32 %v3124, %v3124
        %v3384 = vmul.f32 %v3125, %v3125
        %v3385 = vmul.f32 %v3126, %v3126
        %v3386 = vmul.f32 %v3127, %v3127
        %v3387 = vmul.f32 %v3128, %v3128
        %v3388 = vmul.f32 %v3129, %v3129
        %v3389 = vmul.f32 %v3130, %v3130
        %v3390 = vmul.f32 %v3131, %v3131
        %v3391 = vmul.f32 %v3132, %v3132
        %v3392 = vmul.f32 %v3133, %v3133
        %v3393 = vmul.f32 %v3134, %v3134
        %v3394 = vmul.f32 %v3135, %v3135
        %v3395 = vmul.f32 %v3136, %v3136
        %v3396 = vmul.f32 %v3137, %v3137
        %v3397 = vmul.f32 %v3138, %v3138
        %v3398 = vmul.f32 %v3139, %v3139
        %v3399 = vmul.f32 %v3140, %v3140
        %v3400 = vmul.f32 %v3141, %v3141
        %v3401 = vmul.f32 %v3142, %v3142
        %v3402 = vmul.f32 %v3143, %v3143
        %v3403 = vmul.f32 %v3144, %v3144
        %v3404 = vmul.f32 %v3145, %v3145
        %v3405 = vmul.f32 %v3146, %v3146
        %v3406 = vmul.f32 %v3147, %v3147
        %v3407 = vmul.f32 %v3148, %v3148
        %v3408 = vmul.f32 %v3149, %v3149
        %v3409 = vmul.f32 %v3150, %v3150
        %v3410 = vmul.f32 %v3151, %v3151
        %v3411 = vmul.f32 %v3152, %v3152
        %v3412 = vmul.f32 %v3153, %v3153
        %v3413 = vmul.f32 %v3154, %v3154
        %v3414 = vmul.f32 %v3155, %v3155
        %v3415 = vmul.f32 %v3156, %v3156
        %v3416 = vmul.f32 %v3157, %v3157
        %v3417 = vmul.f32 %v3158, %v3158
        %v3418 = vmul.f32 %v3159, %v3159
        %v3419 = vmul.f32 %v3160, %v3160
        %v3420 = vmul.f32 %v3161, %v3161
        %v3421 = vmul.f32 %v3162, %v3162
        %v3422 = vmul.f32 %v3163, %v3163
        %v3423 = vmul.f32 %v3164, %v3164
        %v3424 = vmul.f32 %v3165, %v3165
        %v3425 = vmul.f32 %v3166, %v3166
        %v3426 = vmul.f32 %v3167, %v3167
        %v3427 = vmul.f32 %v3168, %v3168
        %v3428 = vmul.f32 %v3169, %v3169
        %v3429 = vmul.f32 %v3170, %v3170
        %v3430 = vmul.f32 %v3171, %v3171
        %v3431 = vmul.f32 %v3172, %v3172
        %v3432 = vmul.f32 %v3173, %v3173
        %v3433 = vmul.f32 %v3174, %v3174
        %v3434 = vmul.f32 %v3175, %v3175
        %v3435 = vmul.f32 %v3176, %v3176
        %v3436 = vmul.f32 %v3177, %v3177
        %v3437 = vmul.f32 %v3178, %v3178
        %v3438 = vmul.f32 %v3179, %v3179
        %v3439 = vmul.f32 %v3180, %v3180
        %3440 = vadd.xlane.f32.xlu0 %v3376
        %v3441 = vpop.xlane.xlu0 %3440
        %3442 = vadd.xlane.f32.xlu0 %v3377
        %v3443 = vpop.xlane.xlu0 %3442
        %3444 = vadd.xlane.f32.xlu0 %v3378
        %v3445 = vpop.xlane.xlu0 %3444
        %3446 = vadd.xlane.f32.xlu0 %v3379
        %v3447 = vpop.xlane.xlu0 %3446
        %3448 = vadd.xlane.f32.xlu0 %v3380
        %v3449 = vpop.xlane.xlu0 %3448
        %3450 = vadd.xlane.f32.xlu0 %v3381
        %v3451 = vpop.xlane.xlu0 %3450
        %3452 = vadd.xlane.f32.xlu0 %v3382
        %v3453 = vpop.xlane.xlu0 %3452
        %3454 = vadd.xlane.f32.xlu0 %v3383
        %v3455 = vpop.xlane.xlu0 %3454
        %3456 = vadd.xlane.f32.xlu0 %v3384
        %v3457 = vpop.xlane.xlu0 %3456
        %3458 = vadd.xlane.f32.xlu0 %v3385
        %v3459 = vpop.xlane.xlu0 %3458
        %3460 = vadd.xlane.f32.xlu0 %v3386
        %v3461 = vpop.xlane.xlu0 %3460
        %3462 = vadd.xlane.f32.xlu0 %v3387
        %v3463 = vpop.xlane.xlu0 %3462
        %3464 = vadd.xlane.f32.xlu0 %v3388
        %v3465 = vpop.xlane.xlu0 %3464
        %3466 = vadd.xlane.f32.xlu0 %v3389
        %v3467 = vpop.xlane.xlu0 %3466
        %3468 = vadd.xlane.f32.xlu0 %v3390
        %v3469 = vpop.xlane.xlu0 %3468
        %3470 = vadd.xlane.f32.xlu0 %v3391
        %v3471 = vpop.xlane.xlu0 %3470
        %3472 = vadd.xlane.f32.xlu0 %v3392
        %v3473 = vpop.xlane.xlu0 %3472
        %3474 = vadd.xlane.f32.xlu0 %v3393
        %v3475 = vpop.xlane.xlu0 %3474
        %3476 = vadd.xlane.f32.xlu0 %v3394
        %v3477 = vpop.xlane.xlu0 %3476
        %3478 = vadd.xlane.f32.xlu0 %v3395
        %v3479 = vpop.xlane.xlu0 %3478
        %3480 = vadd.xlane.f32.xlu0 %v3396
        %v3481 = vpop.xlane.xlu0 %3480
        %3482 = vadd.xlane.f32.xlu0 %v3397
        %v3483 = vpop.xlane.xlu0 %3482
        %3484 = vadd.xlane.f32.xlu0 %v3398
        %v3485 = vpop.xlane.xlu0 %3484
        %3486 = vadd.xlane.f32.xlu0 %v3399
        %v3487 = vpop.xlane.xlu0 %3486
        %3488 = vadd.xlane.f32.xlu0 %v3400
        %v3489 = vpop.xlane.xlu0 %3488
        %3490 = vadd.xlane.f32.xlu0 %v3401
        %v3491 = vpop.xlane.xlu0 %3490
        %3492 = vadd.xlane.f32.xlu0 %v3402
        %v3493 = vpop.xlane.xlu0 %3492
        %3494 = vadd.xlane.f32.xlu0 %v3403
        %v3495 = vpop.xlane.xlu0 %3494
        %3496 = vadd.xlane.f32.xlu0 %v3404
        %v3497 = vpop.xlane.xlu0 %3496
        %3498 = vadd.xlane.f32.xlu0 %v3405
        %v3499 = vpop.xlane.xlu0 %3498
        %3500 = vadd.xlane.f32.xlu0 %v3406
        %v3501 = vpop.xlane.xlu0 %3500
        %3502 = vadd.xlane.f32.xlu0 %v3407
        %v3503 = vpop.xlane.xlu0 %3502
        %3504 = vadd.xlane.f32.xlu0 %v3408
        %v3505 = vpop.xlane.xlu0 %3504
        %3506 = vadd.xlane.f32.xlu0 %v3409
        %v3507 = vpop.xlane.xlu0 %3506
        %3508 = vadd.xlane.f32.xlu0 %v3410
        %v3509 = vpop.xlane.xlu0 %3508
        %3510 = vadd.xlane.f32.xlu0 %v3411
        %v3511 = vpop.xlane.xlu0 %3510
        %3512 = vadd.xlane.f32.xlu0 %v3412
        %v3513 = vpop.xlane.xlu0 %3512
        %3514 = vadd.xlane.f32.xlu0 %v3413
        %v3515 = vpop.xlane.xlu0 %3514
        %3516 = vadd.xlane.f32.xlu0 %v3414
        %v3517 = vpop.xlane.xlu0 %3516
        %3518 = vadd.xlane.f32.xlu0 %v3415
        %v3519 = vpop.xlane.xlu0 %3518
        %3520 = vadd.xlane.f32.xlu0 %v3416
        %v3521 = vpop.xlane.xlu0 %3520
        %3522 = vadd.xlane.f32.xlu0 %v3417
        %v3523 = vpop.xlane.xlu0 %3522
        %3524 = vadd.xlane.f32.xlu0 %v3418
        %v3525 = vpop.xlane.xlu0 %3524
        %3526 = vadd.xlane.f32.xlu0 %v3419
        %v3527 = vpop.xlane.xlu0 %3526
        %3528 = vadd.xlane.f32.xlu0 %v3420
        %v3529 = vpop.xlane.xlu0 %3528
        %3530 = vadd.xlane.f32.xlu0 %v3421
        %v3531 = vpop.xlane.xlu0 %3530
        %3532 = vadd.xlane.f32.xlu0 %v3422
        %v3533 = vpop.xlane.xlu0 %3532
        %3534 = vadd.xlane.f32.xlu0 %v3423
        %v3535 = vpop.xlane.xlu0 %3534
        %3536 = vadd.xlane.f32.xlu0 %v3424
        %v3537 = vpop.xlane.xlu0 %3536
        %3538 = vadd.xlane.f32.xlu0 %v3425
        %v3539 = vpop.xlane.xlu0 %3538
        %3540 = vadd.xlane.f32.xlu0 %v3426
        %v3541 = vpop.xlane.xlu0 %3540
        %3542 = vadd.xlane.f32.xlu0 %v3427
        %v3543 = vpop.xlane.xlu0 %3542
        %3544 = vadd.xlane.f32.xlu0 %v3428
        %v3545 = vpop.xlane.xlu0 %3544
        %3546 = vadd.xlane.f32.xlu0 %v3429
        %v3547 = vpop.xlane.xlu0 %3546
        %3548 = vadd.xlane.f32.xlu0 %v3430
        %v3549 = vpop.xlane.xlu0 %3548
        %3550 = vadd.xlane.f32.xlu0 %v3431
        %v3551 = vpop.xlane.xlu0 %3550
        %3552 = vadd.xlane.f32.xlu0 %v3432
        %v3553 = vpop.xlane.xlu0 %3552
        %3554 = vadd.xlane.f32.xlu0 %v3433
        %v3555 = vpop.xlane.xlu0 %3554
        %3556 = vadd.xlane.f32.xlu0 %v3434
        %v3557 = vpop.xlane.xlu0 %3556
        %3558 = vadd.xlane.f32.xlu0 %v3435
        %v3559 = vpop.xlane.xlu0 %3558
        %3560 = vadd.xlane.f32.xlu0 %v3436
        %v3561 = vpop.xlane.xlu0 %3560
        %3562 = vadd.xlane.f32.xlu0 %v3437
        %v3563 = vpop.xlane.xlu0 %3562
        %3564 = vadd.xlane.f32.xlu0 %v3438
        %v3565 = vpop.xlane.xlu0 %3564
        %3566 = vadd.xlane.f32.xlu0 %v3439
        %v3567 = vpop.xlane.xlu0 %3566
        %v3568 = vmul.f32 %v3441, %v3311
        %v3569 = vmul.f32 %v3443, %v3311
        %v3570 = vmul.f32 %v3445, %v3311
        %v3571 = vmul.f32 %v3447, %v3311
        %v3572 = vmul.f32 %v3449, %v3311
        %v3573 = vmul.f32 %v3451, %v3311
        %v3574 = vmul.f32 %v3453, %v3311
        %v3575 = vmul.f32 %v3455, %v3311
        %v3576 = vmul.f32 %v3457, %v3311
        %v3577 = vmul.f32 %v3459, %v3311
        %v3578 = vmul.f32 %v3461, %v3311
        %v3579 = vmul.f32 %v3463, %v3311
        %v3580 = vmul.f32 %v3465, %v3311
        %v3581 = vmul.f32 %v3467, %v3311
        %v3582 = vmul.f32 %v3469, %v3311
        %v3583 = vmul.f32 %v3471, %v3311
        %v3584 = vmul.f32 %v3473, %v3311
        %v3585 = vmul.f32 %v3475, %v3311
        %v3586 = vmul.f32 %v3477, %v3311
        %v3587 = vmul.f32 %v3479, %v3311
        %v3588 = vmul.f32 %v3481, %v3311
        %v3589 = vmul.f32 %v3483, %v3311
        %v3590 = vmul.f32 %v3485, %v3311
        %v3591 = vmul.f32 %v3487, %v3311
        %v3592 = vmul.f32 %v3489, %v3311
        %v3593 = vmul.f32 %v3491, %v3311
        %v3594 = vmul.f32 %v3493, %v3311
        %v3595 = vmul.f32 %v3495, %v3311
        %v3596 = vmul.f32 %v3497, %v3311
        %v3597 = vmul.f32 %v3499, %v3311
        %v3598 = vmul.f32 %v3501, %v3311
        %v3599 = vmul.f32 %v3503, %v3311
        %v3600 = vmul.f32 %v3505, %v3311
        %v3601 = vmul.f32 %v3507, %v3311
        %v3602 = vmul.f32 %v3509, %v3311
        %v3603 = vmul.f32 %v3511, %v3311
        %v3604 = vmul.f32 %v3513, %v3311
        %v3605 = vmul.f32 %v3515, %v3311
        %v3606 = vmul.f32 %v3517, %v3311
        %v3607 = vmul.f32 %v3519, %v3311
        %v3608 = vmul.f32 %v3521, %v3311
        %v3609 = vmul.f32 %v3523, %v3311
        %v3610 = vmul.f32 %v3525, %v3311
        %v3611 = vmul.f32 %v3527, %v3311
        %v3612 = vmul.f32 %v3529, %v3311
        %v3613 = vmul.f32 %v3531, %v3311
        %v3614 = vmul.f32 %v3533, %v3311
        %v3615 = vmul.f32 %v3535, %v3311
        %v3616 = vmul.f32 %v3537, %v3311
        %v3617 = vmul.f32 %v3539, %v3311
        %v3618 = vmul.f32 %v3541, %v3311
        %v3619 = vmul.f32 %v3543, %v3311
        %v3620 = vmul.f32 %v3545, %v3311
        %v3621 = vmul.f32 %v3547, %v3311
        %v3622 = vmul.f32 %v3549, %v3311
        %v3623 = vmul.f32 %v3551, %v3311
        %v3624 = vmul.f32 %v3553, %v3311
        %v3625 = vmul.f32 %v3555, %v3311
        %v3626 = vmul.f32 %v3557, %v3311
        %v3627 = vmul.f32 %v3559, %v3311
        %v3628 = vmul.f32 %v3561, %v3311
        %v3629 = vmul.f32 %v3563, %v3311
        %v3630 = vmul.f32 %v3565, %v3311
        %v3631 = vmul.f32 %v3567, %v3311
        %v3632 = vmul.f32 %v3312, %v3312
        %v3633 = vmul.f32 %v3313, %v3313
        %v3634 = vmul.f32 %v3314, %v3314
        %v3635 = vmul.f32 %v3315, %v3315
        %v3636 = vmul.f32 %v3316, %v3316
        %v3637 = vmul.f32 %v3317, %v3317
        %v3638 = vmul.f32 %v3318, %v3318
        %v3639 = vmul.f32 %v3319, %v3319
        %v3640 = vmul.f32 %v3320, %v3320
        %v3641 = vmul.f32 %v3321, %v3321
        %v3642 = vmul.f32 %v3322, %v3322
        %v3643 = vmul.f32 %v3323, %v3323
        %v3644 = vmul.f32 %v3324, %v3324
        %v3645 = vmul.f32 %v3325, %v3325
        %v3646 = vmul.f32 %v3326, %v3326
        %v3647 = vmul.f32 %v3327, %v3327
        %v3648 = vmul.f32 %v3328, %v3328
        %v3649 = vmul.f32 %v3329, %v3329
        %v3650 = vmul.f32 %v3330, %v3330
        %v3651 = vmul.f32 %v3331, %v3331
        %v3652 = vmul.f32 %v3332, %v3332
        %v3653 = vmul.f32 %v3333, %v3333
        %v3654 = vmul.f32 %v3334, %v3334
        %v3655 = vmul.f32 %v3335, %v3335
        %v3656 = vmul.f32 %v3336, %v3336
        %v3657 = vmul.f32 %v3337, %v3337
        %v3658 = vmul.f32 %v3338, %v3338
        %v3659 = vmul.f32 %v3339, %v3339
        %v3660 = vmul.f32 %v3340, %v3340
        %v3661 = vmul.f32 %v3341, %v3341
        %v3662 = vmul.f32 %v3342, %v3342
        %v3663 = vmul.f32 %v3343, %v3343
        %v3664 = vmul.f32 %v3344, %v3344
        %v3665 = vmul.f32 %v3345, %v3345
        %v3666 = vmul.f32 %v3346, %v3346
        %v3667 = vmul.f32 %v3347, %v3347
        %v3668 = vmul.f32 %v3348, %v3348
        %v3669 = vmul.f32 %v3349, %v3349
        %v3670 = vmul.f32 %v3350, %v3350
        %v3671 = vmul.f32 %v3351, %v3351
        %v3672 = vmul.f32 %v3352, %v3352
        %v3673 = vmul.f32 %v3353, %v3353
        %v3674 = vmul.f32 %v3354, %v3354
        %v3675 = vmul.f32 %v3355, %v3355
        %v3676 = vmul.f32 %v3356, %v3356
        %v3677 = vmul.f32 %v3357, %v3357
        %v3678 = vmul.f32 %v3358, %v3358
        %v3679 = vmul.f32 %v3359, %v3359
        %v3680 = vmul.f32 %v3360, %v3360
        %v3681 = vmul.f32 %v3361, %v3361
        %v3682 = vmul.f32 %v3362, %v3362
        %v3683 = vmul.f32 %v3363, %v3363
        %v3684 = vmul.f32 %v3364, %v3364
        %v3685 = vmul.f32 %v3365, %v3365
        %v3686 = vmul.f32 %v3366, %v3366
        %v3687 = vmul.f32 %v3367, %v3367
        %v3688 = vmul.f32 %v3368, %v3368
        %v3689 = vmul.f32 %v3369, %v3369
        %v3690 = vmul.f32 %v3370, %v3370
        %v3691 = vmul.f32 %v3371, %v3371
        %v3692 = vmul.f32 %v3372, %v3372
        %v3693 = vmul.f32 %v3373, %v3373
        %v3694 = vmul.f32 %v3374, %v3374
        %v3695 = vmul.f32 %v3375, %v3375
        %v3696 = vsub.f32 %v3568, %v3632
        %v3697 = vsub.f32 %v3569, %v3633
        %v3698 = vsub.f32 %v3570, %v3634
        %v3699 = vsub.f32 %v3571, %v3635
        %v3700 = vsub.f32 %v3572, %v3636
        %v3701 = vsub.f32 %v3573, %v3637
        %v3702 = vsub.f32 %v3574, %v3638
        %v3703 = vsub.f32 %v3575, %v3639
        %v3704 = vsub.f32 %v3576, %v3640
        %v3705 = vsub.f32 %v3577, %v3641
        %v3706 = vsub.f32 %v3578, %v3642
        %v3707 = vsub.f32 %v3579, %v3643
        %v3708 = vsub.f32 %v3580, %v3644
        %v3709 = vsub.f32 %v3581, %v3645
        %v3710 = vsub.f32 %v3582, %v3646
        %v3711 = vsub.f32 %v3583, %v3647
        %v3712 = vsub.f32 %v3584, %v3648
        %v3713 = vsub.f32 %v3585, %v3649
        %v3714 = vsub.f32 %v3586, %v3650
        %v3715 = vsub.f32 %v3587, %v3651
        %v3716 = vsub.f32 %v3588, %v3652
        %v3717 = vsub.f32 %v3589, %v3653
        %v3718 = vsub.f32 %v3590, %v3654
        %v3719 = vsub.f32 %v3591, %v3655
        %v3720 = vsub.f32 %v3592, %v3656
        %v3721 = vsub.f32 %v3593, %v3657
        %v3722 = vsub.f32 %v3594, %v3658
        %v3723 = vsub.f32 %v3595, %v3659
        %v3724 = vsub.f32 %v3596, %v3660
        %v3725 = vsub.f32 %v3597, %v3661
        %v3726 = vsub.f32 %v3598, %v3662
        %v3727 = vsub.f32 %v3599, %v3663
        %v3728 = vsub.f32 %v3600, %v3664
        %v3729 = vsub.f32 %v3601, %v3665
        %v3730 = vsub.f32 %v3602, %v3666
        %v3731 = vsub.f32 %v3603, %v3667
        %v3732 = vsub.f32 %v3604, %v3668
        %v3733 = vsub.f32 %v3605, %v3669
        %v3734 = vsub.f32 %v3606, %v3670
        %v3735 = vsub.f32 %v3607, %v3671
        %v3736 = vsub.f32 %v3608, %v3672
        %v3737 = vsub.f32 %v3609, %v3673
        %v3738 = vsub.f32 %v3610, %v3674
        %v3739 = vsub.f32 %v3611, %v3675
        %v3740 = vsub.f32 %v3612, %v3676
        %v3741 = vsub.f32 %v3613, %v3677
        %v3742 = vsub.f32 %v3614, %v3678
        %v3743 = vsub.f32 %v3615, %v3679
        %v3744 = vsub.f32 %v3616, %v3680
        %v3745 = vsub.f32 %v3617, %v3681
        %v3746 = vsub.f32 %v3618, %v3682
        %v3747 = vsub.f32 %v3619, %v3683
        %v3748 = vsub.f32 %v3620, %v3684
        %v3749 = vsub.f32 %v3621, %v3685
        %v3750 = vsub.f32 %v3622, %v3686
        %v3751 = vsub.f32 %v3623, %v3687
        %v3752 = vsub.f32 %v3624, %v3688
        %v3753 = vsub.f32 %v3625, %v3689
        %v3754 = vsub.f32 %v3626, %v3690
        %v3755 = vsub.f32 %v3627, %v3691
        %v3756 = vsub.f32 %v3628, %v3692
        %v3757 = vsub.f32 %v3629, %v3693
        %v3758 = vsub.f32 %v3630, %v3694
        %v3759 = vsub.f32 %v3631, %v3695
        %v3760 = vadd.f32 %v3696, 1e-06
        %v3761 = vadd.f32 %v3697, 1e-06
        %v3762 = vadd.f32 %v3698, 1e-06
        %v3763 = vadd.f32 %v3699, 1e-06
        %v3764 = vadd.f32 %v3700, 1e-06
        %v3765 = vadd.f32 %v3701, 1e-06
        %v3766 = vadd.f32 %v3702, 1e-06
        %v3767 = vadd.f32 %v3703, 1e-06
        %v3768 = vadd.f32 %v3704, 1e-06
        %v3769 = vadd.f32 %v3705, 1e-06
        %v3770 = vadd.f32 %v3706, 1e-06
        %v3771 = vadd.f32 %v3707, 1e-06
        %v3772 = vadd.f32 %v3708, 1e-06
        %v3773 = vadd.f32 %v3709, 1e-06
        %v3774 = vadd.f32 %v3710, 1e-06
        %v3775 = vadd.f32 %v3711, 1e-06
        %v3776 = vadd.f32 %v3712, 1e-06
        %v3777 = vadd.f32 %v3713, 1e-06
        %v3778 = vadd.f32 %v3714, 1e-06
        %v3779 = vadd.f32 %v3715, 1e-06
        %v3780 = vadd.f32 %v3716, 1e-06
        %v3781 = vadd.f32 %v3717, 1e-06
        %v3782 = vadd.f32 %v3718, 1e-06
        %v3783 = vadd.f32 %v3719, 1e-06
        %v3784 = vadd.f32 %v3720, 1e-06
        %v3785 = vadd.f32 %v3721, 1e-06
        %v3786 = vadd.f32 %v3722, 1e-06
        %v3787 = vadd.f32 %v3723, 1e-06
        %v3788 = vadd.f32 %v3724, 1e-06
        %v3789 = vadd.f32 %v3725, 1e-06
        %v3790 = vadd.f32 %v3726, 1e-06
        %v3791 = vadd.f32 %v3727, 1e-06
        %v3792 = vadd.f32 %v3728, 1e-06
        %v3793 = vadd.f32 %v3729, 1e-06
        %v3794 = vadd.f32 %v3730, 1e-06
        %v3795 = vadd.f32 %v3731, 1e-06
        %v3796 = vadd.f32 %v3732, 1e-06
        %v3797 = vadd.f32 %v3733, 1e-06
        %v3798 = vadd.f32 %v3734, 1e-06
        %v3799 = vadd.f32 %v3735, 1e-06
        %v3800 = vadd.f32 %v3736, 1e-06
        %v3801 = vadd.f32 %v3737, 1e-06
        %v3802 = vadd.f32 %v3738, 1e-06
        %v3803 = vadd.f32 %v3739, 1e-06
        %v3804 = vadd.f32 %v3740, 1e-06
        %v3805 = vadd.f32 %v3741, 1e-06
        %v3806 = vadd.f32 %v3742, 1e-06
        %v3807 = vadd.f32 %v3743, 1e-06
        %v3808 = vadd.f32 %v3744, 1e-06
        %v3809 = vadd.f32 %v3745, 1e-06
        %v3810 = vadd.f32 %v3746, 1e-06
        %v3811 = vadd.f32 %v3747, 1e-06
        %v3812 = vadd.f32 %v3748, 1e-06
        %v3813 = vadd.f32 %v3749, 1e-06
        %v3814 = vadd.f32 %v3750, 1e-06
        %v3815 = vadd.f32 %v3751, 1e-06
        %v3816 = vadd.f32 %v3752, 1e-06
        %v3817 = vadd.f32 %v3753, 1e-06
        %v3818 = vadd.f32 %v3754, 1e-06
        %v3819 = vadd.f32 %v3755, 1e-06
        %v3820 = vadd.f32 %v3756, 1e-06
        %v3821 = vadd.f32 %v3757, 1e-06
        %v3822 = vadd.f32 %v3758, 1e-06
        %v3823 = vadd.f32 %v3759, 1e-06
        %v3824 = vrsqrt.pop %v3760
        %v3825 = vrsqrt.pop %v3761
        %v3826 = vrsqrt.pop %v3762
        %v3827 = vrsqrt.pop %v3763
        %v3828 = vrsqrt.pop %v3764
        %v3829 = vrsqrt.pop %v3765
        %v3830 = vrsqrt.pop %v3766
        %v3831 = vrsqrt.pop %v3767
        %v3832 = vrsqrt.pop %v3768
        %v3833 = vrsqrt.pop %v3769
        %v3834 = vrsqrt.pop %v3770
        %v3835 = vrsqrt.pop %v3771
        %v3836 = vrsqrt.pop %v3772
        %v3837 = vrsqrt.pop %v3773
        %v3838 = vrsqrt.pop %v3774
        %v3839 = vrsqrt.pop %v3775
        %v3840 = vrsqrt.pop %v3776
        %v3841 = vrsqrt.pop %v3777
        %v3842 = vrsqrt.pop %v3778
        %v3843 = vrsqrt.pop %v3779
        %v3844 = vrsqrt.pop %v3780
        %v3845 = vrsqrt.pop %v3781
        %v3846 = vrsqrt.pop %v3782
        %v3847 = vrsqrt.pop %v3783
        %v3848 = vrsqrt.pop %v3784
        %v3849 = vrsqrt.pop %v3785
        %v3850 = vrsqrt.pop %v3786
        %v3851 = vrsqrt.pop %v3787
        %v3852 = vrsqrt.pop %v3788
        %v3853 = vrsqrt.pop %v3789
        %v3854 = vrsqrt.pop %v3790
        %v3855 = vrsqrt.pop %v3791
        %v3856 = vrsqrt.pop %v3792
        %v3857 = vrsqrt.pop %v3793
        %v3858 = vrsqrt.pop %v3794
        %v3859 = vrsqrt.pop %v3795
        %v3860 = vrsqrt.pop %v3796
        %v3861 = vrsqrt.pop %v3797
        %v3862 = vrsqrt.pop %v3798
        %v3863 = vrsqrt.pop %v3799
        %v3864 = vrsqrt.pop %v3800
        %v3865 = vrsqrt.pop %v3801
        %v3866 = vrsqrt.pop %v3802
        %v3867 = vrsqrt.pop %v3803
        %v3868 = vrsqrt.pop %v3804
        %v3869 = vrsqrt.pop %v3805
        %v3870 = vrsqrt.pop %v3806
        %v3871 = vrsqrt.pop %v3807
        %v3872 = vrsqrt.pop %v3808
        %v3873 = vrsqrt.pop %v3809
        %v3874 = vrsqrt.pop %v3810
        %v3875 = vrsqrt.pop %v3811
        %v3876 = vrsqrt.pop %v3812
        %v3877 = vrsqrt.pop %v3813
        %v3878 = vrsqrt.pop %v3814
        %v3879 = vrsqrt.pop %v3815
        %v3880 = vrsqrt.pop %v3816
        %v3881 = vrsqrt.pop %v3817
        %v3882 = vrsqrt.pop %v3818
        %v3883 = vrsqrt.pop %v3819
        %v3884 = vrsqrt.pop %v3820
        %v3885 = vrsqrt.pop %v3821
        %v3886 = vrsqrt.pop %v3822
        %v3887 = vrsqrt.pop %v3823
        %v3888 = vsub.f32 %v3117, %v3312
        %v3889 = vsub.f32 %v3118, %v3313
        %v3890 = vsub.f32 %v3119, %v3314
        %v3891 = vsub.f32 %v3120, %v3315
        %v3892 = vsub.f32 %v3121, %v3316
        %v3893 = vsub.f32 %v3122, %v3317
        %v3894 = vsub.f32 %v3123, %v3318
        %v3895 = vsub.f32 %v3124, %v3319
        %v3896 = vsub.f32 %v3125, %v3320
        %v3897 = vsub.f32 %v3126, %v3321
        %v3898 = vsub.f32 %v3127, %v3322
        %v3899 = vsub.f32 %v3128, %v3323
        %v3900 = vsub.f32 %v3129, %v3324
        %v3901 = vsub.f32 %v3130, %v3325
        %v3902 = vsub.f32 %v3131, %v3326
        %v3903 = vsub.f32 %v3132, %v3327
        %v3904 = vsub.f32 %v3133, %v3328
        %v3905 = vsub.f32 %v3134, %v3329
        %v3906 = vsub.f32 %v3135, %v3330
        %v3907 = vsub.f32 %v3136, %v3331
        %v3908 = vsub.f32 %v3137, %v3332
        %v3909 = vsub.f32 %v3138, %v3333
        %v3910 = vsub.f32 %v3139, %v3334
        %v3911 = vsub.f32 %v3140, %v3335
        %v3912 = vsub.f32 %v3141, %v3336
        %v3913 = vsub.f32 %v3142, %v3337
        %v3914 = vsub.f32 %v3143, %v3338
        %v3915 = vsub.f32 %v3144, %v3339
        %v3916 = vsub.f32 %v3145, %v3340
        %v3917 = vsub.f32 %v3146, %v3341
        %v3918 = vsub.f32 %v3147, %v3342
        %v3919 = vsub.f32 %v3148, %v3343
        %v3920 = vsub.f32 %v3149, %v3344
        %v3921 = vsub.f32 %v3150, %v3345
        %v3922 = vsub.f32 %v3151, %v3346
        %v3923 = vsub.f32 %v3152, %v3347
        %v3924 = vsub.f32 %v3153, %v3348
        %v3925 = vsub.f32 %v3154, %v3349
        %v3926 = vsub.f32 %v3155, %v3350
        %v3927 = vsub.f32 %v3156, %v3351
        %v3928 = vsub.f32 %v3157, %v3352
        %v3929 = vsub.f32 %v3158, %v3353
        %v3930 = vsub.f32 %v3159, %v3354
        %v3931 = vsub.f32 %v3160, %v3355
        %v3932 = vsub.f32 %v3161, %v3356
        %v3933 = vsub.f32 %v3162, %v3357
        %v3934 = vsub.f32 %v3163, %v3358
        %v3935 = vsub.f32 %v3164, %v3359
        %v3936 = vsub.f32 %v3165, %v3360
        %v3937 = vsub.f32 %v3166, %v3361
        %v3938 = vsub.f32 %v3167, %v3362
        %v3939 = vsub.f32 %v3168, %v3363
        %v3940 = vsub.f32 %v3169, %v3364
        %v3941 = vsub.f32 %v3170, %v3365
        %v3942 = vsub.f32 %v3171, %v3366
        %v3943 = vsub.f32 %v3172, %v3367
        %v3944 = vsub.f32 %v3173, %v3368
        %v3945 = vsub.f32 %v3174, %v3369
        %v3946 = vsub.f32 %v3175, %v3370
        %v3947 = vsub.f32 %v3176, %v3371
        %v3948 = vsub.f32 %v3177, %v3372
        %v3949 = vsub.f32 %v3178, %v3373
        %v3950 = vsub.f32 %v3179, %v3374
        %v3951 = vsub.f32 %v3180, %v3375
        %v3952 = vmul.f32 %v3888, %v3824
        %v3953 = vmul.f32 %v3889, %v3825
        %v3954 = vmul.f32 %v3890, %v3826
        %v3955 = vmul.f32 %v3891, %v3827
        %v3956 = vmul.f32 %v3892, %v3828
        %v3957 = vmul.f32 %v3893, %v3829
        %v3958 = vmul.f32 %v3894, %v3830
        %v3959 = vmul.f32 %v3895, %v3831
        %v3960 = vmul.f32 %v3896, %v3832
        %v3961 = vmul.f32 %v3897, %v3833
        %v3962 = vmul.f32 %v3898, %v3834
        %v3963 = vmul.f32 %v3899, %v3835
        %v3964 = vmul.f32 %v3900, %v3836
        %v3965 = vmul.f32 %v3901, %v3837
        %v3966 = vmul.f32 %v3902, %v3838
        %v3967 = vmul.f32 %v3903, %v3839
        %v3968 = vmul.f32 %v3904, %v3840
        %v3969 = vmul.f32 %v3905, %v3841
        %v3970 = vmul.f32 %v3906, %v3842
        %v3971 = vmul.f32 %v3907, %v3843
        %v3972 = vmul.f32 %v3908, %v3844
        %v3973 = vmul.f32 %v3909, %v3845
        %v3974 = vmul.f32 %v3910, %v3846
        %v3975 = vmul.f32 %v3911, %v3847
        %v3976 = vmul.f32 %v3912, %v3848
        %v3977 = vmul.f32 %v3913, %v3849
        %v3978 = vmul.f32 %v3914, %v3850
        %v3979 = vmul.f32 %v3915, %v3851
        %v3980 = vmul.f32 %v3916, %v3852
        %v3981 = vmul.f32 %v3917, %v3853
        %v3982 = vmul.f32 %v3918, %v3854
        %v3983 = vmul.f32 %v3919, %v3855
        %v3984 = vmul.f32 %v3920, %v3856
        %v3985 = vmul.f32 %v3921, %v3857
        %v3986 = vmul.f32 %v3922, %v3858
        %v3987 = vmul.f32 %v3923, %v3859
        %v3988 = vmul.f32 %v3924, %v3860
        %v3989 = vmul.f32 %v3925, %v3861
        %v3990 = vmul.f32 %v3926, %v3862
        %v3991 = vmul.f32 %v3927, %v3863
        %v3992 = vmul.f32 %v3928, %v3864
        %v3993 = vmul.f32 %v3929, %v3865
        %v3994 = vmul.f32 %v3930, %v3866
        %v3995 = vmul.f32 %v3931, %v3867
        %v3996 = vmul.f32 %v3932, %v3868
        %v3997 = vmul.f32 %v3933, %v3869
        %v3998 = vmul.f32 %v3934, %v3870
        %v3999 = vmul.f32 %v3935, %v3871
        %v4000 = vmul.f32 %v3936, %v3872
        %v4001 = vmul.f32 %v3937, %v3873
        %v4002 = vmul.f32 %v3938, %v3874
        %v4003 = vmul.f32 %v3939, %v3875
        %v4004 = vmul.f32 %v3940, %v3876
        %v4005 = vmul.f32 %v3941, %v3877
        %v4006 = vmul.f32 %v3942, %v3878
        %v4007 = vmul.f32 %v3943, %v3879
        %v4008 = vmul.f32 %v3944, %v3880
        %v4009 = vmul.f32 %v3945, %v3881
        %v4010 = vmul.f32 %v3946, %v3882
        %v4011 = vmul.f32 %v3947, %v3883
        %v4012 = vmul.f32 %v3948, %v3884
        %v4013 = vmul.f32 %v3949, %v3885
        %v4014 = vmul.f32 %v3950, %v3886
        %v4015 = vmul.f32 %v3951, %v3887
        %v4017 = vlaneseq
        %v4018 = vshrl.u32 %v4017, 7
        %v4019 = vsub.s32 0, %v4018
        %v4020 = vrot.slane %v3181, %v4019
        %v4022 = vmul.f32 %v3952, %v4020
        %v4023 = vmul.f32 %v3953, %v4020
        %v4024 = vmul.f32 %v3954, %v4020
        %v4025 = vmul.f32 %v3955, %v4020
        %v4026 = vmul.f32 %v3956, %v4020
        %v4027 = vmul.f32 %v3957, %v4020
        %v4028 = vmul.f32 %v3958, %v4020
        %v4029 = vmul.f32 %v3959, %v4020
        %v4030 = vmul.f32 %v3960, %v4020
        %v4031 = vmul.f32 %v3961, %v4020
        %v4032 = vmul.f32 %v3962, %v4020
        %v4033 = vmul.f32 %v3963, %v4020
        %v4034 = vmul.f32 %v3964, %v4020
        %v4035 = vmul.f32 %v3965, %v4020
        %v4036 = vmul.f32 %v3966, %v4020
        %v4037 = vmul.f32 %v3967, %v4020
        %v4038 = vmul.f32 %v3968, %v4020
        %v4039 = vmul.f32 %v3969, %v4020
        %v4040 = vmul.f32 %v3970, %v4020
        %v4041 = vmul.f32 %v3971, %v4020
        %v4042 = vmul.f32 %v3972, %v4020
        %v4043 = vmul.f32 %v3973, %v4020
        %v4044 = vmul.f32 %v3974, %v4020
        %v4045 = vmul.f32 %v3975, %v4020
        %v4046 = vmul.f32 %v3976, %v4020
        %v4047 = vmul.f32 %v3977, %v4020
        %v4048 = vmul.f32 %v3978, %v4020
        %v4049 = vmul.f32 %v3979, %v4020
        %v4050 = vmul.f32 %v3980, %v4020
        %v4051 = vmul.f32 %v3981, %v4020
        %v4052 = vmul.f32 %v3982, %v4020
        %v4053 = vmul.f32 %v3983, %v4020
        %v4054 = vmul.f32 %v3984, %v4020
        %v4055 = vmul.f32 %v3985, %v4020
        %v4056 = vmul.f32 %v3986, %v4020
        %v4057 = vmul.f32 %v3987, %v4020
        %v4058 = vmul.f32 %v3988, %v4020
        %v4059 = vmul.f32 %v3989, %v4020
        %v4060 = vmul.f32 %v3990, %v4020
        %v4061 = vmul.f32 %v3991, %v4020
        %v4062 = vmul.f32 %v3992, %v4020
        %v4063 = vmul.f32 %v3993, %v4020
        %v4064 = vmul.f32 %v3994, %v4020
        %v4065 = vmul.f32 %v3995, %v4020
        %v4066 = vmul.f32 %v3996, %v4020
        %v4067 = vmul.f32 %v3997, %v4020
        %v4068 = vmul.f32 %v3998, %v4020
        %v4069 = vmul.f32 %v3999, %v4020
        %v4070 = vmul.f32 %v4000, %v4020
        %v4071 = vmul.f32 %v4001, %v4020
        %v4072 = vmul.f32 %v4002, %v4020
        %v4073 = vmul.f32 %v4003, %v4020
        %v4074 = vmul.f32 %v4004, %v4020
        %v4075 = vmul.f32 %v4005, %v4020
        %v4076 = vmul.f32 %v4006, %v4020
        %v4077 = vmul.f32 %v4007, %v4020
        %v4078 = vmul.f32 %v4008, %v4020
        %v4079 = vmul.f32 %v4009, %v4020
        %v4080 = vmul.f32 %v4010, %v4020
        %v4081 = vmul.f32 %v4011, %v4020
        %v4082 = vmul.f32 %v4012, %v4020
        %v4083 = vmul.f32 %v4013, %v4020
        %v4084 = vmul.f32 %v4014, %v4020
        %v4085 = vmul.f32 %v4015, %v4020
        %v4087 = vlaneseq
        %v4088 = vshrl.u32 %v4087, 7
        %v4089 = vsub.s32 0, %v4088
        %v4090 = vrot.slane %v3182, %v4089
        %v4092 = vadd.f32 %v4022, %v4090
        %v4093 = vadd.f32 %v4023, %v4090
        %v4094 = vadd.f32 %v4024, %v4090
        %v4095 = vadd.f32 %v4025, %v4090
        %v4096 = vadd.f32 %v4026, %v4090
        %v4097 = vadd.f32 %v4027, %v4090
        %v4098 = vadd.f32 %v4028, %v4090
        %v4099 = vadd.f32 %v4029, %v4090
        %v4100 = vadd.f32 %v4030, %v4090
        %v4101 = vadd.f32 %v4031, %v4090
        %v4102 = vadd.f32 %v4032, %v4090
        %v4103 = vadd.f32 %v4033, %v4090
        %v4104 = vadd.f32 %v4034, %v4090
        %v4105 = vadd.f32 %v4035, %v4090
        %v4106 = vadd.f32 %v4036, %v4090
        %v4107 = vadd.f32 %v4037, %v4090
        %v4108 = vadd.f32 %v4038, %v4090
        %v4109 = vadd.f32 %v4039, %v4090
        %v4110 = vadd.f32 %v4040, %v4090
        %v4111 = vadd.f32 %v4041, %v4090
        %v4112 = vadd.f32 %v4042, %v4090
        %v4113 = vadd.f32 %v4043, %v4090
        %v4114 = vadd.f32 %v4044, %v4090
        %v4115 = vadd.f32 %v4045, %v4090
        %v4116 = vadd.f32 %v4046, %v4090
        %v4117 = vadd.f32 %v4047, %v4090
        %v4118 = vadd.f32 %v4048, %v4090
        %v4119 = vadd.f32 %v4049, %v4090
        %v4120 = vadd.f32 %v4050, %v4090
        %v4121 = vadd.f32 %v4051, %v4090
        %v4122 = vadd.f32 %v4052, %v4090
        %v4123 = vadd.f32 %v4053, %v4090
        %v4124 = vadd.f32 %v4054, %v4090
        %v4125 = vadd.f32 %v4055, %v4090
        %v4126 = vadd.f32 %v4056, %v4090
        %v4127 = vadd.f32 %v4057, %v4090
        %v4128 = vadd.f32 %v4058, %v4090
        %v4129 = vadd.f32 %v4059, %v4090
        %v4130 = vadd.f32 %v4060, %v4090
        %v4131 = vadd.f32 %v4061, %v4090
        %v4132 = vadd.f32 %v4062, %v4090
        %v4133 = vadd.f32 %v4063, %v4090
        %v4134 = vadd.f32 %v4064, %v4090
        %v4135 = vadd.f32 %v4065, %v4090
        %v4136 = vadd.f32 %v4066, %v4090
        %v4137 = vadd.f32 %v4067, %v4090
        %v4138 = vadd.f32 %v4068, %v4090
        %v4139 = vadd.f32 %v4069, %v4090
        %v4140 = vadd.f32 %v4070, %v4090
        %v4141 = vadd.f32 %v4071, %v4090
        %v4142 = vadd.f32 %v4072, %v4090
        %v4143 = vadd.f32 %v4073, %v4090
        %v4144 = vadd.f32 %v4074, %v4090
        %v4145 = vadd.f32 %v4075, %v4090
        %v4146 = vadd.f32 %v4076, %v4090
        %v4147 = vadd.f32 %v4077, %v4090
        %v4148 = vadd.f32 %v4078, %v4090
        %v4149 = vadd.f32 %v4079, %v4090
        %v4150 = vadd.f32 %v4080, %v4090
        %v4151 = vadd.f32 %v4081, %v4090
        %v4152 = vadd.f32 %v4082, %v4090
        %v4153 = vadd.f32 %v4083, %v4090
        %v4154 = vadd.f32 %v4084, %v4090
        %v4155 = vadd.f32 %v4085, %v4090
        %4156 = vst [vmem:[%s326] sm:$0xff] %v4092
        %4157 = vst [vmem:[%s326 + $0x8] sm:$0xff] %v4093
        %4158 = vst [vmem:[%s326 + $0x10] sm:$0xff] %v4094
        %4159 = vst [vmem:[%s326 + $0x18] sm:$0xff] %v4095
        %4160 = vst [vmem:[%s326 + $0x20] sm:$0xff] %v4096
        %4161 = vst [vmem:[%s326 + $0x28] sm:$0xff] %v4097
        %4162 = vst [vmem:[%s326 + $0x30] sm:$0xff] %v4098
        %4163 = vst [vmem:[%s326 + $0x38] sm:$0xff] %v4099
        %4164 = vst [vmem:[%s326 + $0x40] sm:$0xff] %v4100
        %4165 = vst [vmem:[%s326 + $0x48] sm:$0xff] %v4101
        %4166 = vst [vmem:[%s326 + $0x50] sm:$0xff] %v4102
        %4167 = vst [vmem:[%s326 + $0x58] sm:$0xff] %v4103
        %4168 = vst [vmem:[%s326 + $0x60] sm:$0xff] %v4104
        %4169 = vst [vmem:[%s326 + $0x68] sm:$0xff] %v4105
        %4170 = vst [vmem:[%s326 + $0x70] sm:$0xff] %v4106
        %4171 = vst [vmem:[%s326 + $0x78] sm:$0xff] %v4107
        %4172 = vst [vmem:[%s326 + $0x80] sm:$0xff] %v4108
        %4173 = vst [vmem:[%s326 + $0x88] sm:$0xff] %v4109
        %4174 = vst [vmem:[%s326 + $0x90] sm:$0xff] %v4110
        %4175 = vst [vmem:[%s326 + $0x98] sm:$0xff] %v4111
        %4176 = vst [vmem:[%s326 + $0xa0] sm:$0xff] %v4112
        %4177 = vst [vmem:[%s326 + $0xa8] sm:$0xff] %v4113
        %4178 = vst [vmem:[%s326 + $0xb0] sm:$0xff] %v4114
        %4179 = vst [vmem:[%s326 + $0xb8] sm:$0xff] %v4115
        %4180 = vst [vmem:[%s326 + $0xc0] sm:$0xff] %v4116
        %4181 = vst [vmem:[%s326 + $0xc8] sm:$0xff] %v4117
        %4182 = vst [vmem:[%s326 + $0xd0] sm:$0xff] %v4118
        %4183 = vst [vmem:[%s326 + $0xd8] sm:$0xff] %v4119
        %4184 = vst [vmem:[%s326 + $0xe0] sm:$0xff] %v4120
        %4185 = vst [vmem:[%s326 + $0xe8] sm:$0xff] %v4121
        %4186 = vst [vmem:[%s326 + $0xf0] sm:$0xff] %v4122
        %4187 = vst [vmem:[%s326 + $0xf8] sm:$0xff] %v4123
        %4188 = vst [vmem:[%s326 + $0x100] sm:$0xff] %v4124
        %4189 = vst [vmem:[%s326 + $0x108] sm:$0xff] %v4125
        %4190 = vst [vmem:[%s326 + $0x110] sm:$0xff] %v4126
        %4191 = vst [vmem:[%s326 + $0x118] sm:$0xff] %v4127
        %4192 = vst [vmem:[%s326 + $0x120] sm:$0xff] %v4128
        %4193 = vst [vmem:[%s326 + $0x128] sm:$0xff] %v4129
        %4194 = vst [vmem:[%s326 + $0x130] sm:$0xff] %v4130
        %4195 = vst [vmem:[%s326 + $0x138] sm:$0xff] %v4131
        %4196 = vst [vmem:[%s326 + $0x140] sm:$0xff] %v4132
        %4197 = vst [vmem:[%s326 + $0x148] sm:$0xff] %v4133
        %4198 = vst [vmem:[%s326 + $0x150] sm:$0xff] %v4134
        %4199 = vst [vmem:[%s326 + $0x158] sm:$0xff] %v4135
        %4200 = vst [vmem:[%s326 + $0x160] sm:$0xff] %v4136
        %4201 = vst [vmem:[%s326 + $0x168] sm:$0xff] %v4137
        %4202 = vst [vmem:[%s326 + $0x170] sm:$0xff] %v4138
        %4203 = vst [vmem:[%s326 + $0x178] sm:$0xff] %v4139
        %4204 = vst [vmem:[%s326 + $0x180] sm:$0xff] %v4140
        %4205 = vst [vmem:[%s326 + $0x188] sm:$0xff] %v4141
        %4206 = vst [vmem:[%s326 + $0x190] sm:$0xff] %v4142
        %4207 = vst [vmem:[%s326 + $0x198] sm:$0xff] %v4143
        %4208 = vst [vmem:[%s326 + $0x1a0] sm:$0xff] %v4144
        %4209 = vst [vmem:[%s326 + $0x1a8] sm:$0xff] %v4145
        %4210 = vst [vmem:[%s326 + $0x1b0] sm:$0xff] %v4146
        %4211 = vst [vmem:[%s326 + $0x1b8] sm:$0xff] %v4147
        %4212 = vst [vmem:[%s326 + $0x1c0] sm:$0xff] %v4148
        %4213 = vst [vmem:[%s326 + $0x1c8] sm:$0xff] %v4149
        %4214 = vst [vmem:[%s326 + $0x1d0] sm:$0xff] %v4150
        %4215 = vst [vmem:[%s326 + $0x1d8] sm:$0xff] %v4151
        %4216 = vst [vmem:[%s326 + $0x1e0] sm:$0xff] %v4152
        %4217 = vst [vmem:[%s326 + $0x1e8] sm:$0xff] %v4153
        %4218 = vst [vmem:[%s326 + $0x1f0] sm:$0xff] %v4154
        %4219 = vst [vmem:[%s326 + $0x1f8] sm:$0xff] %v4155
        %s4220 = sand.u32 %s185, 1
        %s4221 = scalar_lea.sflag [#allocation4], %s4220
        %s4222 = sand.u32 %s185, 1
        %s4223 = smul.addr %s4222, 512
        %s4224 = scalar_lea.vmem [#allocation8], %s4223
        // Predicated region
        $region61: #{tpu_custom_call.1} parent=47 // pred_check
          %p4225 = pneg %p195
        $region62: #{tpu_custom_call.1} parent=47 // pred_check_branch
          %4227 = sbr.rel (%p4225) target = $region64
        $region63: #{tpu_custom_call.1} parent=47 // pred_region
          %s4228 = smul.u32 4, %s25
          %s4230 = ssub.s32 8192, 8192
          %4231 = vsyncadd %s4221, %s4230
          %s4232 = smul.addr %s4228, 16
          %s4233 = smul.addr %s4232, 128
          %s4234 = scalar_lea.hbm %s7, %s4233
          %s4235 = sshll.u32 %s4224, 4
          %s4236 = int_to_ptr.vmem [resolvable:$true] %s4235
          %4241 = dma.vmem_to_hbm [thread:$0]  %s4236, 8192, %s4234, %s4221, 128, 128, 8
        $region64: #{tpu_custom_call.1} parent=47 // pred_fallthru
          _
      $region48: #{tpu_custom_call.1} parent=5 // pred_fallthru
        _
      %p4242 = scmp.le.s32.totalorder 2, %s20
      // Predicated region
      $region65: #{tpu_custom_call.1} parent=5 // pred_check
        %p4243 = pneg %p4242
      $region66: #{tpu_custom_call.1} parent=5 // pred_check_branch
        %4245 = sbr.rel (%p4243) target = $region68
      $region67: #{tpu_custom_call.1} parent=5 // pred_region
        %s4246 = ssub.s32 %s20, 2
        // Predicated region
        $region69: #{tpu_custom_call.1} parent=67 // pred_check
          %p4247 = pneg %p201
        $region70: #{tpu_custom_call.1} parent=67 // pred_check_branch
          %4249 = sbr.rel (%p4247) target = $region72
        $region71: #{tpu_custom_call.1} parent=67 // pred_region
          %s4250 = sand.u32 %s186, 1
          %s4251 = scalar_lea.sflag [#allocation4], %s4250
          %s4252 = sand.u32 %s186, 1
          %s4253 = smul.addr %s4252, 512
          %s4254 = scalar_lea.vmem [#allocation8], %s4253
          %4255 = dma.done %s4251, 8192
        $region72: #{tpu_custom_call.1} parent=67 // pred_fallthru
          _
      $region68: #{tpu_custom_call.1} parent=5 // pred_fallthru
        _
    $region6: #{tpu_custom_call.1} parent=1 // loop_footer
      %s24 = sadd.s32 1, %s20
    $region7: #{tpu_custom_call.1} parent=1 // loop_footer_branch
      %19 = sbr.rel target = $region3
    $region8: #{tpu_custom_call.1} parent=1 // loop_exit
      _
    %4256 = vsyncpa [#allocation3], 1
    %s4257 = scalar_lea.sflag [#allocation3], 1
    %4258 = vsyncpa %s4257, 1
    %4259 = vsyncpa [#allocation6], 1
    %4260 = vsyncpa [#allocation4], 1
    %s4261 = scalar_lea.sflag [#allocation4], 1
    %4262 = vsyncpa %s4261, 1

</llo_original>
